<compile_context>
chip_gen: v6e
topology: v6e:2x2x1
jax: 0.10.0
libtpu: 0.0.40
codegen_flags: <defaults>
</compile_context>

<pallas_src>
import jax
import jax.numpy as jnp
from jax import lax
from jax.experimental import pallas as pl
from jax.experimental.pallas import tpu as pltpu


def _round_up(x, m):
    return (x + m - 1) // m * m


_VMEM_LIMIT_CACHE = [None]


def _vmem_limit_bytes():
    """~75% of physical VMEM: ~48 MiB on v7x, ~96 MiB on v5e/v6e."""
    if _VMEM_LIMIT_CACHE[0] is None:
        try:
            cap = getattr(pltpu.get_tpu_info(), "vmem_capacity_bytes")
            _VMEM_LIMIT_CACHE[0] = min(int(cap * 3 // 4), 120 * 1024 * 1024)
        except Exception:  # conservative fallback, safe on every generation
            _VMEM_LIMIT_CACHE[0] = 48 * 1024 * 1024
    return _VMEM_LIMIT_CACHE[0]


# ----------------------------------------------------------------------------
# Fused LSTM layer kernel: per grid step (b, t) process one (Tc, Bb) time chunk.
# ----------------------------------------------------------------------------
def lstm_layer_pallas(x_tbd, w_ih_t, w_hh_t, bias, *, out_dtype):
    """One fused LSTM layer.

    x_tbd  : (T, Bp, Dp)  bf16, time-major, batch/feature padded.
    w_ih_t : (Dp, 4Hp)    bf16 (g-gate columns pre-scaled by 2).
    w_hh_t : (Hp, 4Hp)    bf16 (g-gate columns pre-scaled by 2).
    bias   : (1, 4Hp)     f32  (b_ih + b_hh, g-gate pre-scaled by 2).
    Returns (y (T, Bp, Hp) out_dtype, h_n (Bp, Hp) f32, c_n (Bp, Hp) f32).
    """
    T, Bp, Dp = x_tbd.shape
    Hp, G = w_hh_t.shape

    # Fixed time chunk + masked tail (no divisor search degrading to Tc=1).
    Tc = min(T, 32)
    nt = pl.cdiv(T, Tc)
    needs_mask = (T % Tc) != 0

    # Batch-split axis: two blocks when they stay bf16-sublane aligned.  Feeds
    # both TensorCores on v7x; on v5e/v6e it just adds one cheap grid step.
    Bb = Bp // 2 if (Bp % 32 == 0) else Bp
    nb = Bp // Bb

    def kernel(x_ref, wih_hbm, whh_hbm, b_hbm,
               y_ref, h_out_ref, c_out_ref,
               wih_sc, whh_sc, b_sc, h_sc, c_sc, sems):
        t = pl.program_id(1)

        @pl.when(t == 0)
        def _():
            # Stage the layer weights once into single-buffered VMEM scratch
            # (vs. the 2x footprint of default double-buffered pipelined
            # inputs).  Re-runs per batch block, which is negligible.
            cps = (pltpu.make_async_copy(wih_hbm, wih_sc, sems.at[0]),
                   pltpu.make_async_copy(whh_hbm, whh_sc, sems.at[1]),
                   pltpu.make_async_copy(b_hbm, b_sc, sems.at[2]))
            for cp in cps:
                cp.start()
            for cp in cps:
                cp.wait()
            h_sc[...] = jnp.zeros_like(h_sc)
            c_sc[...] = jnp.zeros_like(c_sc)

        # Hoisted bias broadcast (JAX does not CSE broadcast_in_dim in loops).
        bias_b = jnp.broadcast_to(b_sc[...], (Bb, G))

        def step(tc, carry):
            h_prev, c_prev = carry                      # f32 (Bb, Hp)
            # Weight loads stay inside the step so vreg live ranges are bounded
            # per iteration; VMEM reloads are cheap next to the MXU pushes.
            gates = (bias_b
                     + jnp.dot(x_ref[tc], wih_sc[...],
                               preferred_element_type=jnp.float32)
                     + jnp.dot(h_prev.astype(jnp.bfloat16), whh_sc[...],
                               preferred_element_type=jnp.float32))
            # One lane-dense sigmoid over (Bb, 4Hp); the g-gate was pre-scaled
            # by 2 so tanh(g) == 2*sigmoid(2g) - 1.
            s = jax.nn.sigmoid(gates)
            i_g = s[:, 0 * Hp:1 * Hp]
            f_g = s[:, 1 * Hp:2 * Hp]
            g_g = 2.0 * s[:, 2 * Hp:3 * Hp] - 1.0
            o_g = s[:, 3 * Hp:4 * Hp]
            c_new = f_g * c_prev + i_g * g_g
            h_new = o_g * jnp.tanh(c_new)
            y_ref[tc] = h_new.astype(y_ref.dtype)       # OOB tail rows dropped
            if needs_mask:                              # static Python switch
                valid = (t * Tc + tc) < T
                h_new = jnp.where(valid, h_new, h_prev)
                c_new = jnp.where(valid, c_new, c_prev)
            return h_new, c_new

        h_last, c_last = lax.fori_loop(0, Tc, step, (h_sc[...], c_sc[...]),
                                       unroll=min(Tc, 8))
        h_sc[...] = h_last
        c_sc[...] = c_last

        # Final-state outputs are only written on the last time chunk.
        @pl.when(t == pl.num_programs(1) - 1)
        def _():
            h_out_ref[...] = h_last
            c_out_ref[...] = c_last

    y_itemsize = jnp.dtype(out_dtype).itemsize
    cost = pl.CostEstimate(
        flops=2 * T * Bp * (Dp + Hp) * G,
        transcendentals=T * Bp * (G + Hp),
        bytes_accessed=(T * Bp * Dp * 2 + (Dp + Hp) * G * 2 + G * 4
                        + T * Bp * Hp * y_itemsize + 2 * Bp * Hp * 4))

    return pl.pallas_call(
        kernel,
        out_shape=(
            jax.ShapeDtypeStruct((T, Bp, Hp), out_dtype),   # per-step h (y)
            jax.ShapeDtypeStruct((Bp, Hp), jnp.float32),    # final h
            jax.ShapeDtypeStruct((Bp, Hp), jnp.float32),    # final c
        ),
        grid_spec=pltpu.PrefetchScalarGridSpec(
            num_scalar_prefetch=0,
            grid=(nb, nt),
            in_specs=[
                pl.BlockSpec((Tc, Bb, Dp), lambda b, t: (t, b, 0)),
                pl.BlockSpec(memory_space=pl.ANY),   # W_ih^T (staged manually)
                pl.BlockSpec(memory_space=pl.ANY),   # W_hh^T (staged manually)
                pl.BlockSpec(memory_space=pl.ANY),   # bias   (staged manually)
            ],
            out_specs=[
                pl.BlockSpec((Tc, Bb, Hp), lambda b, t: (t, b, 0)),
                pl.BlockSpec((Bb, Hp), lambda b, t: (b, 0)),
                pl.BlockSpec((Bb, Hp), lambda b, t: (b, 0)),
            ],
            scratch_shapes=[
                pltpu.VMEM((Dp, G), jnp.bfloat16),   # W_ih^T, single-buffered
                pltpu.VMEM((Hp, G), jnp.bfloat16),   # W_hh^T, single-buffered
                pltpu.VMEM((1, G), jnp.float32),     # bias,   single-buffered
                pltpu.VMEM((Bb, Hp), jnp.float32),   # h carry
                pltpu.VMEM((Bb, Hp), jnp.float32),   # c carry
                pltpu.SemaphoreType.DMA((3,)),
            ]),
        compiler_params=pltpu.CompilerParams(
            dimension_semantics=("parallel", "arbitrary"),
            vmem_limit_bytes=_vmem_limit_bytes()),
        cost_estimate=cost,
    )(x_tbd, w_ih_t, w_hh_t, bias)


# ----------------------------------------------------------------------------
# Parameter prep: PyTorch layout -> padded (H->Hp lanes, in-dim padded),
# transposed, g-gate columns scaled by 2 (exact power-of-2), weights bf16.
# ----------------------------------------------------------------------------
def _prep_layer(w_ih, w_hh, b_ih, b_hh, Hp, d_in_p):
    H = w_hh.shape[1]

    def pad_gates(w, in_p):                     # (4H, d_in) -> (4Hp, in_p)
        w4 = w.reshape(4, H, w.shape[1])
        w4 = jnp.pad(w4, ((0, 0), (0, Hp - H), (0, in_p - w.shape[1])))
        return w4.reshape(4 * Hp, in_p)

    scale = jnp.concatenate([jnp.ones((2 * Hp,), jnp.float32),
                             jnp.full((Hp,), 2.0, jnp.float32),
                             jnp.ones((Hp,), jnp.float32)])
    w_ih_t = (pad_gates(w_ih, d_in_p).T * scale[None, :]).astype(jnp.bfloat16)
    w_hh_t = (pad_gates(w_hh, Hp).T * scale[None, :]).astype(jnp.bfloat16)
    b = jnp.pad((b_ih + b_hh).reshape(4, H), ((0, 0), (0, Hp - H)))
    bias = (b.reshape(4 * Hp) * scale)[None, :].astype(jnp.float32)
    return w_ih_t, w_hh_t, bias


# ----------------------------------------------------------------------------
# LRCN forward: stacked LSTM layers, batch_first I/O like the PyTorch module.
# ----------------------------------------------------------------------------
def lrcn_forward(x_btd, params):
    """x_btd: (B, T, Din). Returns (outputs (B,T,H), (h_n, c_n) each (L,B,H))."""
    B, T, Din = x_btd.shape
    H = params[0][1].shape[1]
    L = len(params)
    Hp = _round_up(H, 128)     # lane-dense hidden / gate dims
    Dp = _round_up(Din, 128)   # lane-dense layer-0 feature dim
    Bp = _round_up(B, 8)       # sublane-aligned batch

    # Time-major, zero-padded, bf16 (exact: every consumer bf16-casts anyway).
    x = jnp.transpose(x_btd.astype(jnp.float32), (1, 0, 2))
    x = jnp.pad(x, ((0, 0), (0, Bp - B), (0, Dp - Din))).astype(jnp.bfloat16)

    h_list, c_list = [], []
    y = None
    for li, (w_ih, w_hh, b_ih, b_hh) in enumerate(params):
        w_ih_t, w_hh_t, bias = _prep_layer(w_ih, w_hh, b_ih, b_hh, Hp,
                                           x.shape[-1])
        last = li == L - 1
        y, h_n, c_n = lstm_layer_pallas(
            x, w_ih_t, w_hh_t, bias,
            out_dtype=jnp.float32 if last else jnp.bfloat16)
        h_list.append(h_n[:B, :H])
        c_list.append(c_n[:B, :H])
        x = y                                    # bf16 inter-layer activations
    outputs = jnp.transpose(y[:, :B, :H].astype(jnp.float32), (1, 0, 2))
    return outputs, (jnp.stack(h_list, 0), jnp.stack(c_list, 0))


# ----------------------------------------------------------------------------
# Deterministic parameter init (nn.LSTM scheme: U(-1/sqrt(H), 1/sqrt(H))),
# kept in raw PyTorch layout: W_ih (4H,Din), W_hh (4H,H), b_ih, b_hh (4H,).
# ----------------------------------------------------------------------------
def init_lstm_params(key, input_size, num_hiddens, num_layers):
    stdv = 1.0 / jnp.sqrt(num_hiddens)
    params = []
    for layer in range(num_layers):
        d_in = input_size if layer == 0 else num_hiddens
        key, k1, k2, k3, k4 = jax.random.split(key, 5)
        w_ih = jax.random.uniform(k1, (4 * num_hiddens, d_in), jnp.float32,
                                  -stdv, stdv)
        w_hh = jax.random.uniform(k2, (4 * num_hiddens, num_hiddens),
                                  jnp.float32, -stdv, stdv)
        b_ih = jax.random.uniform(k3, (4 * num_hiddens,), jnp.float32,
                                  -stdv, stdv)
        b_hh = jax.random.uniform(k4, (4 * num_hiddens,), jnp.float32,
                                  -stdv, stdv)
        params.append((w_ih, w_hh, b_ih, b_hh))
    return params


# ----------------------------------------------------------------------------
# Pure-JAX reference (lax.scan) mirroring the bf16-matmul / f32-accumulate math
# with the standard sigmoid/tanh gate formulation and unscaled, unpadded params.
# ----------------------------------------------------------------------------
def lstm_ref(x_btd, params):
    x = jnp.transpose(x_btd, (1, 0, 2)).astype(jnp.float32)      # (T, B, D)
    h_list, c_list = [], []
    for (w_ih, w_hh, b_ih, b_hh) in params:
        H = w_hh.shape[1]
        T, B, Din = x.shape
        w_ih_t = w_ih.T.astype(jnp.bfloat16)
        w_hh_t = w_hh.T.astype(jnp.bfloat16)
        bias = (b_ih + b_hh)
        gx = (jnp.dot(x.reshape(T * B, Din).astype(jnp.bfloat16), w_ih_t,
                      preferred_element_type=jnp.float32)
              + bias[None, :]).reshape(T, B, 4 * H)

        def step(carry, g_x):
            h, c = carry
            g = g_x + jnp.dot(h.astype(jnp.bfloat16), w_hh_t,
                              preferred_element_type=jnp.float32)
            i = jax.nn.sigmoid(g[:, 0 * H:1 * H])
            f = jax.nn.sigmoid(g[:, 1 * H:2 * H])
            gg = jnp.tanh(g[:, 2 * H:3 * H])
            o = jax.nn.sigmoid(g[:, 3 * H:4 * H])
            c_new = f * c + i * gg
            h_new = o * jnp.tanh(c_new)
            return (h_new, c_new), h_new

        h0 = jnp.zeros((B, H), jnp.float32)
        c0 = jnp.zeros((B, H), jnp.float32)
        (h_n, c_n), ys = lax.scan(step, (h0, c0), gx)
        x = ys
        h_list.append(h_n)
        c_list.append(c_n)
    return jnp.transpose(x, (1, 0, 2)), jnp.stack(h_list, 0), jnp.stack(c_list, 0)


if __name__ == "__main__":
    # Small shapes consistent with LRCN(input_size, seq_len, num_hiddens, num_layers)
    B, T, D, H, L = 2, 8, 4, 32, 2

    key = jax.random.PRNGKey(0)
    k_x, k_p = jax.random.split(key)
    x = jax.random.normal(k_x, (B, T, D), jnp.float32)
    params = init_lstm_params(k_p, D, H, L)

    outputs, (h_n, c_n) = lrcn_forward(x, params)
    jax.block_until_ready((outputs, h_n, c_n))

    # Correctness check against pure-JAX reference
    y_ref, h_ref, c_ref = lstm_ref(x, params)
    assert outputs.shape == (B, T, H)
    assert h_n.shape == (L, B, H) and c_n.shape == (L, B, H)
    assert jnp.allclose(outputs, y_ref, atol=2e-4, rtol=2e-4)
    assert jnp.allclose(h_n, h_ref, atol=2e-4, rtol=2e-4)
    assert jnp.allclose(c_n, c_ref, atol=2e-4, rtol=2e-4)

    print("KERNEL_OK")
</pallas_src>

<mosaic_0001>
module attributes {stable_mosaic.version = 11 : i64} {
  func.func @kernel(%arg0: i32, %arg1: i32, %arg2: memref<8x8x128xbf16, #tpu.memory_space<vmem>>, %arg3: memref<128x512xbf16, #tpu.memory_space<any>>, %arg4: memref<128x512xbf16, #tpu.memory_space<any>>, %arg5: memref<1x512xf32, #tpu.memory_space<any>>, %arg6: memref<8x8x128xbf16, #tpu.memory_space<vmem>>, %arg7: memref<8x128xf32, #tpu.memory_space<vmem>>, %arg8: memref<8x128xf32, #tpu.memory_space<vmem>>, %arg9: memref<128x512xbf16, #tpu.memory_space<vmem>>, %arg10: memref<128x512xbf16, #tpu.memory_space<vmem>>, %arg11: memref<1x512xf32, #tpu.memory_space<vmem>>, %arg12: memref<8x128xf32, #tpu.memory_space<vmem>>, %arg13: memref<8x128xf32, #tpu.memory_space<vmem>>, %arg14: memref<3x!tpu.dma_semaphore, #tpu.memory_space<semaphore_mem>>) attributes {dimension_semantics = [#tpu.dimension_semantics<parallel>, #tpu.dimension_semantics<arbitrary>], iteration_bounds = array<i64: 1, 1>, scalar_prefetch = 0 : i64, scratch_operands = 6 : i64, tpu.core_type = #tpu.core_type<tc>, window_params = [{transform_indices = @transform_0, window_bounds = array<i64: 8, 8, 128>}, {}, {}, {}, {transform_indices = @transform_4, window_bounds = array<i64: 8, 8, 128>}, {transform_indices = @transform_5, window_bounds = array<i64: 8, 128>}, {transform_indices = @transform_6, window_bounds = array<i64: 8, 128>}]} {
    %c0_i32 = arith.constant 0 : i32
    %0 = arith.cmpi eq, %arg1, %c0_i32 : i32
    %1 = arith.extui %0 : i1 to i32
    %c0_i32_0 = arith.constant 0 : i32
    %2 = arith.cmpi ne, %1, %c0_i32_0 : i32
    scf.if %2 {
      %c0_i32_116 = arith.constant 0 : i32
      %277 = tpu.memref_slice %arg14[%c0_i32_116] : memref<3x!tpu.dma_semaphore, #tpu.memory_space<semaphore_mem>> -> memref<1x!tpu.dma_semaphore, #tpu.memory_space<semaphore_mem>>
      %278 = tpu.memref_squeeze %277 : memref<1x!tpu.dma_semaphore, #tpu.memory_space<semaphore_mem>> -> memref<!tpu.dma_semaphore, #tpu.memory_space<semaphore_mem>>
      tpu.enqueue_dma source(%arg3 : memref<128x512xbf16, #tpu.memory_space<any>>) target(%arg9 : memref<128x512xbf16, #tpu.memory_space<vmem>>) target_semaphore(%278 : memref<!tpu.dma_semaphore, #tpu.memory_space<semaphore_mem>>)
      %c1_i32_117 = arith.constant 1 : i32
      %279 = tpu.memref_slice %arg14[%c1_i32_117] : memref<3x!tpu.dma_semaphore, #tpu.memory_space<semaphore_mem>> -> memref<1x!tpu.dma_semaphore, #tpu.memory_space<semaphore_mem>>
      %280 = tpu.memref_squeeze %279 : memref<1x!tpu.dma_semaphore, #tpu.memory_space<semaphore_mem>> -> memref<!tpu.dma_semaphore, #tpu.memory_space<semaphore_mem>>
      tpu.enqueue_dma source(%arg4 : memref<128x512xbf16, #tpu.memory_space<any>>) target(%arg10 : memref<128x512xbf16, #tpu.memory_space<vmem>>) target_semaphore(%280 : memref<!tpu.dma_semaphore, #tpu.memory_space<semaphore_mem>>)
      %c2_i32_118 = arith.constant 2 : i32
      %281 = tpu.memref_slice %arg14[%c2_i32_118] : memref<3x!tpu.dma_semaphore, #tpu.memory_space<semaphore_mem>> -> memref<1x!tpu.dma_semaphore, #tpu.memory_space<semaphore_mem>>
      %282 = tpu.memref_squeeze %281 : memref<1x!tpu.dma_semaphore, #tpu.memory_space<semaphore_mem>> -> memref<!tpu.dma_semaphore, #tpu.memory_space<semaphore_mem>>
      tpu.enqueue_dma source(%arg5 : memref<1x512xf32, #tpu.memory_space<any>>) target(%arg11 : memref<1x512xf32, #tpu.memory_space<vmem>>) target_semaphore(%282 : memref<!tpu.dma_semaphore, #tpu.memory_space<semaphore_mem>>)
      %c0_i32_119 = arith.constant 0 : i32
      %283 = tpu.memref_slice %arg14[%c0_i32_119] : memref<3x!tpu.dma_semaphore, #tpu.memory_space<semaphore_mem>> -> memref<1x!tpu.dma_semaphore, #tpu.memory_space<semaphore_mem>>
      %284 = tpu.memref_squeeze %283 : memref<1x!tpu.dma_semaphore, #tpu.memory_space<semaphore_mem>> -> memref<!tpu.dma_semaphore, #tpu.memory_space<semaphore_mem>>
      tpu.wait_dma2 semaphore(%284 : memref<!tpu.dma_semaphore, #tpu.memory_space<semaphore_mem>>) src(%arg3 : memref<128x512xbf16, #tpu.memory_space<any>>) dst(%arg9 : memref<128x512xbf16, #tpu.memory_space<vmem>>)
      %c1_i32_120 = arith.constant 1 : i32
      %285 = tpu.memref_slice %arg14[%c1_i32_120] : memref<3x!tpu.dma_semaphore, #tpu.memory_space<semaphore_mem>> -> memref<1x!tpu.dma_semaphore, #tpu.memory_space<semaphore_mem>>
      %286 = tpu.memref_squeeze %285 : memref<1x!tpu.dma_semaphore, #tpu.memory_space<semaphore_mem>> -> memref<!tpu.dma_semaphore, #tpu.memory_space<semaphore_mem>>
      tpu.wait_dma2 semaphore(%286 : memref<!tpu.dma_semaphore, #tpu.memory_space<semaphore_mem>>) src(%arg4 : memref<128x512xbf16, #tpu.memory_space<any>>) dst(%arg10 : memref<128x512xbf16, #tpu.memory_space<vmem>>)
      %c2_i32_121 = arith.constant 2 : i32
      %287 = tpu.memref_slice %arg14[%c2_i32_121] : memref<3x!tpu.dma_semaphore, #tpu.memory_space<semaphore_mem>> -> memref<1x!tpu.dma_semaphore, #tpu.memory_space<semaphore_mem>>
      %288 = tpu.memref_squeeze %287 : memref<1x!tpu.dma_semaphore, #tpu.memory_space<semaphore_mem>> -> memref<!tpu.dma_semaphore, #tpu.memory_space<semaphore_mem>>
      tpu.wait_dma2 semaphore(%288 : memref<!tpu.dma_semaphore, #tpu.memory_space<semaphore_mem>>) src(%arg5 : memref<1x512xf32, #tpu.memory_space<any>>) dst(%arg11 : memref<1x512xf32, #tpu.memory_space<vmem>>)
      %cst_122 = arith.constant 0.000000e+00 : f32
      %289 = vector.broadcast %cst_122 : f32 to vector<8x128xf32>
      %c0_123 = arith.constant 0 : index
      %c0_124 = arith.constant 0 : index
      %290 = vector.load %arg12[%c0_123, %c0_124] : memref<8x128xf32, #tpu.memory_space<vmem>>, vector<8x128xf32>
      tpu.vector_store %arg12[%c0_123, %c0_124], %289 {strides = array<i32>} : memref<8x128xf32, #tpu.memory_space<vmem>>, vector<8x128xf32>,
      %cst_125 = arith.constant 0.000000e+00 : f32
      %291 = vector.broadcast %cst_125 : f32 to vector<8x128xf32>
      %c0_126 = arith.constant 0 : index
      %c0_127 = arith.constant 0 : index
      %292 = vector.load %arg13[%c0_126, %c0_127] : memref<8x128xf32, #tpu.memory_space<vmem>>, vector<8x128xf32>
      tpu.vector_store %arg13[%c0_126, %c0_127], %291 {strides = array<i32>} : memref<8x128xf32, #tpu.memory_space<vmem>>, vector<8x128xf32>,
    } else {
    }
    %c0 = arith.constant 0 : index
    %c0_1 = arith.constant 0 : index
    %3 = vector.load %arg11[%c0, %c0_1] : memref<1x512xf32, #tpu.memory_space<vmem>>, vector<1x512xf32>
    %4 = vector.shape_cast %3 : vector<1x512xf32> to vector<1x512xf32>
    %5 = vector.broadcast %4 : vector<1x512xf32> to vector<8x512xf32>
    %c0_2 = arith.constant 0 : index
    %c0_3 = arith.constant 0 : index
    %6 = vector.load %arg12[%c0_2, %c0_3] : memref<8x128xf32, #tpu.memory_space<vmem>>, vector<8x128xf32>
    %c0_4 = arith.constant 0 : index
    %c0_5 = arith.constant 0 : index
    %7 = vector.load %arg13[%c0_4, %c0_5] : memref<8x128xf32, #tpu.memory_space<vmem>>, vector<8x128xf32>
    %c0_i32_6 = arith.constant 0 : i32
    %8 = arith.index_cast %c0_i32_6 : i32 to index
    %c0_7 = arith.constant 0 : index
    %c0_8 = arith.constant 0 : index
    %9 = vector.load %arg2[%8, %c0_7, %c0_8] : memref<8x8x128xbf16, #tpu.memory_space<vmem>>, vector<1x8x128xbf16>
    %10 = vector.shape_cast %9 : vector<1x8x128xbf16> to vector<8x128xbf16>
    %c0_9 = arith.constant 0 : index
    %c0_10 = arith.constant 0 : index
    %11 = vector.load %arg9[%c0_9, %c0_10] : memref<128x512xbf16, #tpu.memory_space<vmem>>, vector<128x512xbf16>
    %cst = arith.constant dense<0.000000e+00> : vector<8x512xf32>
    %12 = tpu.matmul %10, %11, %cst {dimension_numbers = #tpu.dot_dimension_numbers<[1], [0], [0], [1], [0, 0, 1, 1], [], []>} : vector<8x128xbf16>, vector<128x512xbf16>, vector<8x512xf32> -> vector<8x512xf32>
    %13 = arith.addf %5, %12 : vector<8x512xf32>
    %14 = arith.truncf %6 : vector<8x128xf32> to vector<8x128xbf16>
    %c0_11 = arith.constant 0 : index
    %c0_12 = arith.constant 0 : index
    %15 = vector.load %arg10[%c0_11, %c0_12] : memref<128x512xbf16, #tpu.memory_space<vmem>>, vector<128x512xbf16>
    %cst_13 = arith.constant dense<0.000000e+00> : vector<8x512xf32>
    %16 = tpu.matmul %14, %15, %cst_13 {dimension_numbers = #tpu.dot_dimension_numbers<[1], [0], [0], [1], [0, 0, 1, 1], [], []>} : vector<8x128xbf16>, vector<128x512xbf16>, vector<8x512xf32> -> vector<8x512xf32>
    %17 = arith.addf %13, %16 : vector<8x512xf32>
    %18 = arith.negf %17 : vector<8x512xf32>
    %19 = math.exp %18 : vector<8x512xf32>
    %cst_14 = arith.constant 1.000000e+00 : f32
    %20 = vector.broadcast %cst_14 : f32 to vector<8x512xf32>
    %21 = arith.addf %20, %19 : vector<8x512xf32>
    %22 = arith.divf %20, %21 : vector<8x512xf32>
    %23 = vector.extract_strided_slice %22 {offsets = [0, 0], sizes = [8, 128], strides = [1, 1]} : vector<8x512xf32> to vector<8x128xf32>
    %24 = vector.extract_strided_slice %22 {offsets = [0, 128], sizes = [8, 128], strides = [1, 1]} : vector<8x512xf32> to vector<8x128xf32>
    %25 = vector.extract_strided_slice %22 {offsets = [0, 256], sizes = [8, 128], strides = [1, 1]} : vector<8x512xf32> to vector<8x128xf32>
    %cst_15 = arith.constant 2.000000e+00 : f32
    %26 = vector.broadcast %cst_15 : f32 to vector<8x128xf32>
    %27 = arith.mulf %26, %25 : vector<8x128xf32>
    %cst_16 = arith.constant 1.000000e+00 : f32
    %28 = vector.broadcast %cst_16 : f32 to vector<8x128xf32>
    %29 = arith.subf %27, %28 : vector<8x128xf32>
    %30 = vector.extract_strided_slice %22 {offsets = [0, 384], sizes = [8, 128], strides = [1, 1]} : vector<8x512xf32> to vector<8x128xf32>
    %31 = arith.mulf %24, %7 : vector<8x128xf32>
    %32 = arith.mulf %23, %29 : vector<8x128xf32>
    %33 = arith.addf %31, %32 : vector<8x128xf32>
    %34 = math.tanh %33 : vector<8x128xf32>
    %35 = arith.mulf %30, %34 : vector<8x128xf32>
    %36 = arith.truncf %35 : vector<8x128xf32> to vector<8x128xbf16>
    %37 = arith.index_cast %c0_i32_6 : i32 to index
    %c0_17 = arith.constant 0 : index
    %c0_18 = arith.constant 0 : index
    %38 = vector.load %arg6[%37, %c0_17, %c0_18] : memref<8x8x128xbf16, #tpu.memory_space<vmem>>, vector<1x8x128xbf16>
    %39 = vector.shape_cast %38 : vector<1x8x128xbf16> to vector<8x128xbf16>
    %40 = vector.shape_cast %36 : vector<8x128xbf16> to vector<1x8x128xbf16>
    tpu.vector_store %arg6[%37, %c0_17, %c0_18], %40 {strides = array<i32>} : memref<8x8x128xbf16, #tpu.memory_space<vmem>>, vector<1x8x128xbf16>,
    %c1_i32 = arith.constant 1 : i32
    %41 = arith.index_cast %c1_i32 : i32 to index
    %c0_19 = arith.constant 0 : index
    %c0_20 = arith.constant 0 : index
    %42 = vector.load %arg2[%41, %c0_19, %c0_20] : memref<8x8x128xbf16, #tpu.memory_space<vmem>>, vector<1x8x128xbf16>
    %43 = vector.shape_cast %42 : vector<1x8x128xbf16> to vector<8x128xbf16>
    %c0_21 = arith.constant 0 : index
    %c0_22 = arith.constant 0 : index
    %44 = vector.load %arg9[%c0_21, %c0_22] : memref<128x512xbf16, #tpu.memory_space<vmem>>, vector<128x512xbf16>
    %cst_23 = arith.constant dense<0.000000e+00> : vector<8x512xf32>
    %45 = tpu.matmul %43, %44, %cst_23 {dimension_numbers = #tpu.dot_dimension_numbers<[1], [0], [0], [1], [0, 0, 1, 1], [], []>} : vector<8x128xbf16>, vector<128x512xbf16>, vector<8x512xf32> -> vector<8x512xf32>
    %46 = arith.addf %5, %45 : vector<8x512xf32>
    %47 = arith.truncf %35 : vector<8x128xf32> to vector<8x128xbf16>
    %c0_24 = arith.constant 0 : index
    %c0_25 = arith.constant 0 : index
    %48 = vector.load %arg10[%c0_24, %c0_25] : memref<128x512xbf16, #tpu.memory_space<vmem>>, vector<128x512xbf16>
    %cst_26 = arith.constant dense<0.000000e+00> : vector<8x512xf32>
    %49 = tpu.matmul %47, %48, %cst_26 {dimension_numbers = #tpu.dot_dimension_numbers<[1], [0], [0], [1], [0, 0, 1, 1], [], []>} : vector<8x128xbf16>, vector<128x512xbf16>, vector<8x512xf32> -> vector<8x512xf32>
    %50 = arith.addf %46, %49 : vector<8x512xf32>
    %51 = arith.negf %50 : vector<8x512xf32>
    %52 = math.exp %51 : vector<8x512xf32>
    %cst_27 = arith.constant 1.000000e+00 : f32
    %53 = vector.broadcast %cst_27 : f32 to vector<8x512xf32>
    %54 = arith.addf %53, %52 : vector<8x512xf32>
    %55 = arith.divf %53, %54 : vector<8x512xf32>
    %56 = vector.extract_strided_slice %55 {offsets = [0, 0], sizes = [8, 128], strides = [1, 1]} : vector<8x512xf32> to vector<8x128xf32>
    %57 = vector.extract_strided_slice %55 {offsets = [0, 128], sizes = [8, 128], strides = [1, 1]} : vector<8x512xf32> to vector<8x128xf32>
    %58 = vector.extract_strided_slice %55 {offsets = [0, 256], sizes = [8, 128], strides = [1, 1]} : vector<8x512xf32> to vector<8x128xf32>
    %cst_28 = arith.constant 2.000000e+00 : f32
    %59 = vector.broadcast %cst_28 : f32 to vector<8x128xf32>
    %60 = arith.mulf %59, %58 : vector<8x128xf32>
    %cst_29 = arith.constant 1.000000e+00 : f32
    %61 = vector.broadcast %cst_29 : f32 to vector<8x128xf32>
    %62 = arith.subf %60, %61 : vector<8x128xf32>
    %63 = vector.extract_strided_slice %55 {offsets = [0, 384], sizes = [8, 128], strides = [1, 1]} : vector<8x512xf32> to vector<8x128xf32>
    %64 = arith.mulf %57, %33 : vector<8x128xf32>
    %65 = arith.mulf %56, %62 : vector<8x128xf32>
    %66 = arith.addf %64, %65 : vector<8x128xf32>
    %67 = math.tanh %66 : vector<8x128xf32>
    %68 = arith.mulf %63, %67 : vector<8x128xf32>
    %69 = arith.truncf %68 : vector<8x128xf32> to vector<8x128xbf16>
    %70 = arith.index_cast %c1_i32 : i32 to index
    %c0_30 = arith.constant 0 : index
    %c0_31 = arith.constant 0 : index
    %71 = vector.load %arg6[%70, %c0_30, %c0_31] : memref<8x8x128xbf16, #tpu.memory_space<vmem>>, vector<1x8x128xbf16>
    %72 = vector.shape_cast %71 : vector<1x8x128xbf16> to vector<8x128xbf16>
    %73 = vector.shape_cast %69 : vector<8x128xbf16> to vector<1x8x128xbf16>
    tpu.vector_store %arg6[%70, %c0_30, %c0_31], %73 {strides = array<i32>} : memref<8x8x128xbf16, #tpu.memory_space<vmem>>, vector<1x8x128xbf16>,
    %c2_i32 = arith.constant 2 : i32
    %74 = arith.index_cast %c2_i32 : i32 to index
    %c0_32 = arith.constant 0 : index
    %c0_33 = arith.constant 0 : index
    %75 = vector.load %arg2[%74, %c0_32, %c0_33] : memref<8x8x128xbf16, #tpu.memory_space<vmem>>, vector<1x8x128xbf16>
    %76 = vector.shape_cast %75 : vector<1x8x128xbf16> to vector<8x128xbf16>
    %c0_34 = arith.constant 0 : index
    %c0_35 = arith.constant 0 : index
    %77 = vector.load %arg9[%c0_34, %c0_35] : memref<128x512xbf16, #tpu.memory_space<vmem>>, vector<128x512xbf16>
    %cst_36 = arith.constant dense<0.000000e+00> : vector<8x512xf32>
    %78 = tpu.matmul %76, %77, %cst_36 {dimension_numbers = #tpu.dot_dimension_numbers<[1], [0], [0], [1], [0, 0, 1, 1], [], []>} : vector<8x128xbf16>, vector<128x512xbf16>, vector<8x512xf32> -> vector<8x512xf32>
    %79 = arith.addf %5, %78 : vector<8x512xf32>
    %80 = arith.truncf %68 : vector<8x128xf32> to vector<8x128xbf16>
    %c0_37 = arith.constant 0 : index
    %c0_38 = arith.constant 0 : index
    %81 = vector.load %arg10[%c0_37, %c0_38] : memref<128x512xbf16, #tpu.memory_space<vmem>>, vector<128x512xbf16>
    %cst_39 = arith.constant dense<0.000000e+00> : vector<8x512xf32>
    %82 = tpu.matmul %80, %81, %cst_39 {dimension_numbers = #tpu.dot_dimension_numbers<[1], [0], [0], [1], [0, 0, 1, 1], [], []>} : vector<8x128xbf16>, vector<128x512xbf16>, vector<8x512xf32> -> vector<8x512xf32>
    %83 = arith.addf %79, %82 : vector<8x512xf32>
    %84 = arith.negf %83 : vector<8x512xf32>
    %85 = math.exp %84 : vector<8x512xf32>
    %cst_40 = arith.constant 1.000000e+00 : f32
    %86 = vector.broadcast %cst_40 : f32 to vector<8x512xf32>
    %87 = arith.addf %86, %85 : vector<8x512xf32>
    %88 = arith.divf %86, %87 : vector<8x512xf32>
    %89 = vector.extract_strided_slice %88 {offsets = [0, 0], sizes = [8, 128], strides = [1, 1]} : vector<8x512xf32> to vector<8x128xf32>
    %90 = vector.extract_strided_slice %88 {offsets = [0, 128], sizes = [8, 128], strides = [1, 1]} : vector<8x512xf32> to vector<8x128xf32>
    %91 = vector.extract_strided_slice %88 {offsets = [0, 256], sizes = [8, 128], strides = [1, 1]} : vector<8x512xf32> to vector<8x128xf32>
    %cst_41 = arith.constant 2.000000e+00 : f32
    %92 = vector.broadcast %cst_41 : f32 to vector<8x128xf32>
    %93 = arith.mulf %92, %91 : vector<8x128xf32>
    %cst_42 = arith.constant 1.000000e+00 : f32
    %94 = vector.broadcast %cst_42 : f32 to vector<8x128xf32>
    %95 = arith.subf %93, %94 : vector<8x128xf32>
    %96 = vector.extract_strided_slice %88 {offsets = [0, 384], sizes = [8, 128], strides = [1, 1]} : vector<8x512xf32> to vector<8x128xf32>
    %97 = arith.mulf %90, %66 : vector<8x128xf32>
    %98 = arith.mulf %89, %95 : vector<8x128xf32>
    %99 = arith.addf %97, %98 : vector<8x128xf32>
    %100 = math.tanh %99 : vector<8x128xf32>
    %101 = arith.mulf %96, %100 : vector<8x128xf32>
    %102 = arith.truncf %101 : vector<8x128xf32> to vector<8x128xbf16>
    %103 = arith.index_cast %c2_i32 : i32 to index
    %c0_43 = arith.constant 0 : index
    %c0_44 = arith.constant 0 : index
    %104 = vector.load %arg6[%103, %c0_43, %c0_44] : memref<8x8x128xbf16, #tpu.memory_space<vmem>>, vector<1x8x128xbf16>
    %105 = vector.shape_cast %104 : vector<1x8x128xbf16> to vector<8x128xbf16>
    %106 = vector.shape_cast %102 : vector<8x128xbf16> to vector<1x8x128xbf16>
    tpu.vector_store %arg6[%103, %c0_43, %c0_44], %106 {strides = array<i32>} : memref<8x8x128xbf16, #tpu.memory_space<vmem>>, vector<1x8x128xbf16>,
    %c3_i32 = arith.constant 3 : i32
    %107 = arith.index_cast %c3_i32 : i32 to index
    %c0_45 = arith.constant 0 : index
    %c0_46 = arith.constant 0 : index
    %108 = vector.load %arg2[%107, %c0_45, %c0_46] : memref<8x8x128xbf16, #tpu.memory_space<vmem>>, vector<1x8x128xbf16>
    %109 = vector.shape_cast %108 : vector<1x8x128xbf16> to vector<8x128xbf16>
    %c0_47 = arith.constant 0 : index
    %c0_48 = arith.constant 0 : index
    %110 = vector.load %arg9[%c0_47, %c0_48] : memref<128x512xbf16, #tpu.memory_space<vmem>>, vector<128x512xbf16>
    %cst_49 = arith.constant dense<0.000000e+00> : vector<8x512xf32>
    %111 = tpu.matmul %109, %110, %cst_49 {dimension_numbers = #tpu.dot_dimension_numbers<[1], [0], [0], [1], [0, 0, 1, 1], [], []>} : vector<8x128xbf16>, vector<128x512xbf16>, vector<8x512xf32> -> vector<8x512xf32>
    %112 = arith.addf %5, %111 : vector<8x512xf32>
    %113 = arith.truncf %101 : vector<8x128xf32> to vector<8x128xbf16>
    %c0_50 = arith.constant 0 : index
    %c0_51 = arith.constant 0 : index
    %114 = vector.load %arg10[%c0_50, %c0_51] : memref<128x512xbf16, #tpu.memory_space<vmem>>, vector<128x512xbf16>
    %cst_52 = arith.constant dense<0.000000e+00> : vector<8x512xf32>
    %115 = tpu.matmul %113, %114, %cst_52 {dimension_numbers = #tpu.dot_dimension_numbers<[1], [0], [0], [1], [0, 0, 1, 1], [], []>} : vector<8x128xbf16>, vector<128x512xbf16>, vector<8x512xf32> -> vector<8x512xf32>
    %116 = arith.addf %112, %115 : vector<8x512xf32>
    %117 = arith.negf %116 : vector<8x512xf32>
    %118 = math.exp %117 : vector<8x512xf32>
    %cst_53 = arith.constant 1.000000e+00 : f32
    %119 = vector.broadcast %cst_53 : f32 to vector<8x512xf32>
    %120 = arith.addf %119, %118 : vector<8x512xf32>
    %121 = arith.divf %119, %120 : vector<8x512xf32>
    %122 = vector.extract_strided_slice %121 {offsets = [0, 0], sizes = [8, 128], strides = [1, 1]} : vector<8x512xf32> to vector<8x128xf32>
    %123 = vector.extract_strided_slice %121 {offsets = [0, 128], sizes = [8, 128], strides = [1, 1]} : vector<8x512xf32> to vector<8x128xf32>
    %124 = vector.extract_strided_slice %121 {offsets = [0, 256], sizes = [8, 128], strides = [1, 1]} : vector<8x512xf32> to vector<8x128xf32>
    %cst_54 = arith.constant 2.000000e+00 : f32
    %125 = vector.broadcast %cst_54 : f32 to vector<8x128xf32>
    %126 = arith.mulf %125, %124 : vector<8x128xf32>
    %cst_55 = arith.constant 1.000000e+00 : f32
    %127 = vector.broadcast %cst_55 : f32 to vector<8x128xf32>
    %128 = arith.subf %126, %127 : vector<8x128xf32>
    %129 = vector.extract_strided_slice %121 {offsets = [0, 384], sizes = [8, 128], strides = [1, 1]} : vector<8x512xf32> to vector<8x128xf32>
    %130 = arith.mulf %123, %99 : vector<8x128xf32>
    %131 = arith.mulf %122, %128 : vector<8x128xf32>
    %132 = arith.addf %130, %131 : vector<8x128xf32>
    %133 = math.tanh %132 : vector<8x128xf32>
    %134 = arith.mulf %129, %133 : vector<8x128xf32>
    %135 = arith.truncf %134 : vector<8x128xf32> to vector<8x128xbf16>
    %136 = arith.index_cast %c3_i32 : i32 to index
    %c0_56 = arith.constant 0 : index
    %c0_57 = arith.constant 0 : index
    %137 = vector.load %arg6[%136, %c0_56, %c0_57] : memref<8x8x128xbf16, #tpu.memory_space<vmem>>, vector<1x8x128xbf16>
    %138 = vector.shape_cast %137 : vector<1x8x128xbf16> to vector<8x128xbf16>
    %139 = vector.shape_cast %135 : vector<8x128xbf16> to vector<1x8x128xbf16>
    tpu.vector_store %arg6[%136, %c0_56, %c0_57], %139 {strides = array<i32>} : memref<8x8x128xbf16, #tpu.memory_space<vmem>>, vector<1x8x128xbf16>,
    %c4_i32 = arith.constant 4 : i32
    %140 = arith.index_cast %c4_i32 : i32 to index
    %c0_58 = arith.constant 0 : index
    %c0_59 = arith.constant 0 : index
    %141 = vector.load %arg2[%140, %c0_58, %c0_59] : memref<8x8x128xbf16, #tpu.memory_space<vmem>>, vector<1x8x128xbf16>
    %142 = vector.shape_cast %141 : vector<1x8x128xbf16> to vector<8x128xbf16>
    %c0_60 = arith.constant 0 : index
    %c0_61 = arith.constant 0 : index
    %143 = vector.load %arg9[%c0_60, %c0_61] : memref<128x512xbf16, #tpu.memory_space<vmem>>, vector<128x512xbf16>
    %cst_62 = arith.constant dense<0.000000e+00> : vector<8x512xf32>
    %144 = tpu.matmul %142, %143, %cst_62 {dimension_numbers = #tpu.dot_dimension_numbers<[1], [0], [0], [1], [0, 0, 1, 1], [], []>} : vector<8x128xbf16>, vector<128x512xbf16>, vector<8x512xf32> -> vector<8x512xf32>
    %145 = arith.addf %5, %144 : vector<8x512xf32>
    %146 = arith.truncf %134 : vector<8x128xf32> to vector<8x128xbf16>
    %c0_63 = arith.constant 0 : index
    %c0_64 = arith.constant 0 : index
    %147 = vector.load %arg10[%c0_63, %c0_64] : memref<128x512xbf16, #tpu.memory_space<vmem>>, vector<128x512xbf16>
    %cst_65 = arith.constant dense<0.000000e+00> : vector<8x512xf32>
    %148 = tpu.matmul %146, %147, %cst_65 {dimension_numbers = #tpu.dot_dimension_numbers<[1], [0], [0], [1], [0, 0, 1, 1], [], []>} : vector<8x128xbf16>, vector<128x512xbf16>, vector<8x512xf32> -> vector<8x512xf32>
    %149 = arith.addf %145, %148 : vector<8x512xf32>
    %150 = arith.negf %149 : vector<8x512xf32>
    %151 = math.exp %150 : vector<8x512xf32>
    %cst_66 = arith.constant 1.000000e+00 : f32
    %152 = vector.broadcast %cst_66 : f32 to vector<8x512xf32>
    %153 = arith.addf %152, %151 : vector<8x512xf32>
    %154 = arith.divf %152, %153 : vector<8x512xf32>
    %155 = vector.extract_strided_slice %154 {offsets = [0, 0], sizes = [8, 128], strides = [1, 1]} : vector<8x512xf32> to vector<8x128xf32>
    %156 = vector.extract_strided_slice %154 {offsets = [0, 128], sizes = [8, 128], strides = [1, 1]} : vector<8x512xf32> to vector<8x128xf32>
    %157 = vector.extract_strided_slice %154 {offsets = [0, 256], sizes = [8, 128], strides = [1, 1]} : vector<8x512xf32> to vector<8x128xf32>
    %cst_67 = arith.constant 2.000000e+00 : f32
    %158 = vector.broadcast %cst_67 : f32 to vector<8x128xf32>
    %159 = arith.mulf %158, %157 : vector<8x128xf32>
    %cst_68 = arith.constant 1.000000e+00 : f32
    %160 = vector.broadcast %cst_68 : f32 to vector<8x128xf32>
    %161 = arith.subf %159, %160 : vector<8x128xf32>
    %162 = vector.extract_strided_slice %154 {offsets = [0, 384], sizes = [8, 128], strides = [1, 1]} : vector<8x512xf32> to vector<8x128xf32>
    %163 = arith.mulf %156, %132 : vector<8x128xf32>
    %164 = arith.mulf %155, %161 : vector<8x128xf32>
    %165 = arith.addf %163, %164 : vector<8x128xf32>
    %166 = math.tanh %165 : vector<8x128xf32>
    %167 = arith.mulf %162, %166 : vector<8x128xf32>
    %168 = arith.truncf %167 : vector<8x128xf32> to vector<8x128xbf16>
    %169 = arith.index_cast %c4_i32 : i32 to index
    %c0_69 = arith.constant 0 : index
    %c0_70 = arith.constant 0 : index
    %170 = vector.load %arg6[%169, %c0_69, %c0_70] : memref<8x8x128xbf16, #tpu.memory_space<vmem>>, vector<1x8x128xbf16>
    %171 = vector.shape_cast %170 : vector<1x8x128xbf16> to vector<8x128xbf16>
    %172 = vector.shape_cast %168 : vector<8x128xbf16> to vector<1x8x128xbf16>
    tpu.vector_store %arg6[%169, %c0_69, %c0_70], %172 {strides = array<i32>} : memref<8x8x128xbf16, #tpu.memory_space<vmem>>, vector<1x8x128xbf16>,
    %c5_i32 = arith.constant 5 : i32
    %173 = arith.index_cast %c5_i32 : i32 to index
    %c0_71 = arith.constant 0 : index
    %c0_72 = arith.constant 0 : index
    %174 = vector.load %arg2[%173, %c0_71, %c0_72] : memref<8x8x128xbf16, #tpu.memory_space<vmem>>, vector<1x8x128xbf16>
    %175 = vector.shape_cast %174 : vector<1x8x128xbf16> to vector<8x128xbf16>
    %c0_73 = arith.constant 0 : index
    %c0_74 = arith.constant 0 : index
    %176 = vector.load %arg9[%c0_73, %c0_74] : memref<128x512xbf16, #tpu.memory_space<vmem>>, vector<128x512xbf16>
    %cst_75 = arith.constant dense<0.000000e+00> : vector<8x512xf32>
    %177 = tpu.matmul %175, %176, %cst_75 {dimension_numbers = #tpu.dot_dimension_numbers<[1], [0], [0], [1], [0, 0, 1, 1], [], []>} : vector<8x128xbf16>, vector<128x512xbf16>, vector<8x512xf32> -> vector<8x512xf32>
    %178 = arith.addf %5, %177 : vector<8x512xf32>
    %179 = arith.truncf %167 : vector<8x128xf32> to vector<8x128xbf16>
    %c0_76 = arith.constant 0 : index
    %c0_77 = arith.constant 0 : index
    %180 = vector.load %arg10[%c0_76, %c0_77] : memref<128x512xbf16, #tpu.memory_space<vmem>>, vector<128x512xbf16>
    %cst_78 = arith.constant dense<0.000000e+00> : vector<8x512xf32>
    %181 = tpu.matmul %179, %180, %cst_78 {dimension_numbers = #tpu.dot_dimension_numbers<[1], [0], [0], [1], [0, 0, 1, 1], [], []>} : vector<8x128xbf16>, vector<128x512xbf16>, vector<8x512xf32> -> vector<8x512xf32>
    %182 = arith.addf %178, %181 : vector<8x512xf32>
    %183 = arith.negf %182 : vector<8x512xf32>
    %184 = math.exp %183 : vector<8x512xf32>
    %cst_79 = arith.constant 1.000000e+00 : f32
    %185 = vector.broadcast %cst_79 : f32 to vector<8x512xf32>
    %186 = arith.addf %185, %184 : vector<8x512xf32>
    %187 = arith.divf %185, %186 : vector<8x512xf32>
    %188 = vector.extract_strided_slice %187 {offsets = [0, 0], sizes = [8, 128], strides = [1, 1]} : vector<8x512xf32> to vector<8x128xf32>
    %189 = vector.extract_strided_slice %187 {offsets = [0, 128], sizes = [8, 128], strides = [1, 1]} : vector<8x512xf32> to vector<8x128xf32>
    %190 = vector.extract_strided_slice %187 {offsets = [0, 256], sizes = [8, 128], strides = [1, 1]} : vector<8x512xf32> to vector<8x128xf32>
    %cst_80 = arith.constant 2.000000e+00 : f32
    %191 = vector.broadcast %cst_80 : f32 to vector<8x128xf32>
    %192 = arith.mulf %191, %190 : vector<8x128xf32>
    %cst_81 = arith.constant 1.000000e+00 : f32
    %193 = vector.broadcast %cst_81 : f32 to vector<8x128xf32>
    %194 = arith.subf %192, %193 : vector<8x128xf32>
    %195 = vector.extract_strided_slice %187 {offsets = [0, 384], sizes = [8, 128], strides = [1, 1]} : vector<8x512xf32> to vector<8x128xf32>
    %196 = arith.mulf %189, %165 : vector<8x128xf32>
    %197 = arith.mulf %188, %194 : vector<8x128xf32>
    %198 = arith.addf %196, %197 : vector<8x128xf32>
    %199 = math.tanh %198 : vector<8x128xf32>
    %200 = arith.mulf %195, %199 : vector<8x128xf32>
    %201 = arith.truncf %200 : vector<8x128xf32> to vector<8x128xbf16>
    %202 = arith.index_cast %c5_i32 : i32 to index
    %c0_82 = arith.constant 0 : index
    %c0_83 = arith.constant 0 : index
    %203 = vector.load %arg6[%202, %c0_82, %c0_83] : memref<8x8x128xbf16, #tpu.memory_space<vmem>>, vector<1x8x128xbf16>
    %204 = vector.shape_cast %203 : vector<1x8x128xbf16> to vector<8x128xbf16>
    %205 = vector.shape_cast %201 : vector<8x128xbf16> to vector<1x8x128xbf16>
    tpu.vector_store %arg6[%202, %c0_82, %c0_83], %205 {strides = array<i32>} : memref<8x8x128xbf16, #tpu.memory_space<vmem>>, vector<1x8x128xbf16>,
    %c6_i32 = arith.constant 6 : i32
    %206 = arith.index_cast %c6_i32 : i32 to index
    %c0_84 = arith.constant 0 : index
    %c0_85 = arith.constant 0 : index
    %207 = vector.load %arg2[%206, %c0_84, %c0_85] : memref<8x8x128xbf16, #tpu.memory_space<vmem>>, vector<1x8x128xbf16>
    %208 = vector.shape_cast %207 : vector<1x8x128xbf16> to vector<8x128xbf16>
    %c0_86 = arith.constant 0 : index
    %c0_87 = arith.constant 0 : index
    %209 = vector.load %arg9[%c0_86, %c0_87] : memref<128x512xbf16, #tpu.memory_space<vmem>>, vector<128x512xbf16>
    %cst_88 = arith.constant dense<0.000000e+00> : vector<8x512xf32>
    %210 = tpu.matmul %208, %209, %cst_88 {dimension_numbers = #tpu.dot_dimension_numbers<[1], [0], [0], [1], [0, 0, 1, 1], [], []>} : vector<8x128xbf16>, vector<128x512xbf16>, vector<8x512xf32> -> vector<8x512xf32>
    %211 = arith.addf %5, %210 : vector<8x512xf32>
    %212 = arith.truncf %200 : vector<8x128xf32> to vector<8x128xbf16>
    %c0_89 = arith.constant 0 : index
    %c0_90 = arith.constant 0 : index
    %213 = vector.load %arg10[%c0_89, %c0_90] : memref<128x512xbf16, #tpu.memory_space<vmem>>, vector<128x512xbf16>
    %cst_91 = arith.constant dense<0.000000e+00> : vector<8x512xf32>
    %214 = tpu.matmul %212, %213, %cst_91 {dimension_numbers = #tpu.dot_dimension_numbers<[1], [0], [0], [1], [0, 0, 1, 1], [], []>} : vector<8x128xbf16>, vector<128x512xbf16>, vector<8x512xf32> -> vector<8x512xf32>
    %215 = arith.addf %211, %214 : vector<8x512xf32>
    %216 = arith.negf %215 : vector<8x512xf32>
    %217 = math.exp %216 : vector<8x512xf32>
    %cst_92 = arith.constant 1.000000e+00 : f32
    %218 = vector.broadcast %cst_92 : f32 to vector<8x512xf32>
    %219 = arith.addf %218, %217 : vector<8x512xf32>
    %220 = arith.divf %218, %219 : vector<8x512xf32>
    %221 = vector.extract_strided_slice %220 {offsets = [0, 0], sizes = [8, 128], strides = [1, 1]} : vector<8x512xf32> to vector<8x128xf32>
    %222 = vector.extract_strided_slice %220 {offsets = [0, 128], sizes = [8, 128], strides = [1, 1]} : vector<8x512xf32> to vector<8x128xf32>
    %223 = vector.extract_strided_slice %220 {offsets = [0, 256], sizes = [8, 128], strides = [1, 1]} : vector<8x512xf32> to vector<8x128xf32>
    %cst_93 = arith.constant 2.000000e+00 : f32
    %224 = vector.broadcast %cst_93 : f32 to vector<8x128xf32>
    %225 = arith.mulf %224, %223 : vector<8x128xf32>
    %cst_94 = arith.constant 1.000000e+00 : f32
    %226 = vector.broadcast %cst_94 : f32 to vector<8x128xf32>
    %227 = arith.subf %225, %226 : vector<8x128xf32>
    %228 = vector.extract_strided_slice %220 {offsets = [0, 384], sizes = [8, 128], strides = [1, 1]} : vector<8x512xf32> to vector<8x128xf32>
    %229 = arith.mulf %222, %198 : vector<8x128xf32>
    %230 = arith.mulf %221, %227 : vector<8x128xf32>
    %231 = arith.addf %229, %230 : vector<8x128xf32>
    %232 = math.tanh %231 : vector<8x128xf32>
    %233 = arith.mulf %228, %232 : vector<8x128xf32>
    %234 = arith.truncf %233 : vector<8x128xf32> to vector<8x128xbf16>
    %235 = arith.index_cast %c6_i32 : i32 to index
    %c0_95 = arith.constant 0 : index
    %c0_96 = arith.constant 0 : index
    %236 = vector.load %arg6[%235, %c0_95, %c0_96] : memref<8x8x128xbf16, #tpu.memory_space<vmem>>, vector<1x8x128xbf16>
    %237 = vector.shape_cast %236 : vector<1x8x128xbf16> to vector<8x128xbf16>
    %238 = vector.shape_cast %234 : vector<8x128xbf16> to vector<1x8x128xbf16>
    tpu.vector_store %arg6[%235, %c0_95, %c0_96], %238 {strides = array<i32>} : memref<8x8x128xbf16, #tpu.memory_space<vmem>>, vector<1x8x128xbf16>,
    %c7_i32 = arith.constant 7 : i32
    %239 = arith.index_cast %c7_i32 : i32 to index
    %c0_97 = arith.constant 0 : index
    %c0_98 = arith.constant 0 : index
    %240 = vector.load %arg2[%239, %c0_97, %c0_98] : memref<8x8x128xbf16, #tpu.memory_space<vmem>>, vector<1x8x128xbf16>
    %241 = vector.shape_cast %240 : vector<1x8x128xbf16> to vector<8x128xbf16>
    %c0_99 = arith.constant 0 : index
    %c0_100 = arith.constant 0 : index
    %242 = vector.load %arg9[%c0_99, %c0_100] : memref<128x512xbf16, #tpu.memory_space<vmem>>, vector<128x512xbf16>
    %cst_101 = arith.constant dense<0.000000e+00> : vector<8x512xf32>
    %243 = tpu.matmul %241, %242, %cst_101 {dimension_numbers = #tpu.dot_dimension_numbers<[1], [0], [0], [1], [0, 0, 1, 1], [], []>} : vector<8x128xbf16>, vector<128x512xbf16>, vector<8x512xf32> -> vector<8x512xf32>
    %244 = arith.addf %5, %243 : vector<8x512xf32>
    %245 = arith.truncf %233 : vector<8x128xf32> to vector<8x128xbf16>
    %c0_102 = arith.constant 0 : index
    %c0_103 = arith.constant 0 : index
    %246 = vector.load %arg10[%c0_102, %c0_103] : memref<128x512xbf16, #tpu.memory_space<vmem>>, vector<128x512xbf16>
    %cst_104 = arith.constant dense<0.000000e+00> : vector<8x512xf32>
    %247 = tpu.matmul %245, %246, %cst_104 {dimension_numbers = #tpu.dot_dimension_numbers<[1], [0], [0], [1], [0, 0, 1, 1], [], []>} : vector<8x128xbf16>, vector<128x512xbf16>, vector<8x512xf32> -> vector<8x512xf32>
    %248 = arith.addf %244, %247 : vector<8x512xf32>
    %249 = arith.negf %248 : vector<8x512xf32>
    %250 = math.exp %249 : vector<8x512xf32>
    %cst_105 = arith.constant 1.000000e+00 : f32
    %251 = vector.broadcast %cst_105 : f32 to vector<8x512xf32>
    %252 = arith.addf %251, %250 : vector<8x512xf32>
    %253 = arith.divf %251, %252 : vector<8x512xf32>
    %254 = vector.extract_strided_slice %253 {offsets = [0, 0], sizes = [8, 128], strides = [1, 1]} : vector<8x512xf32> to vector<8x128xf32>
    %255 = vector.extract_strided_slice %253 {offsets = [0, 128], sizes = [8, 128], strides = [1, 1]} : vector<8x512xf32> to vector<8x128xf32>
    %256 = vector.extract_strided_slice %253 {offsets = [0, 256], sizes = [8, 128], strides = [1, 1]} : vector<8x512xf32> to vector<8x128xf32>
    %cst_106 = arith.constant 2.000000e+00 : f32
    %257 = vector.broadcast %cst_106 : f32 to vector<8x128xf32>
    %258 = arith.mulf %257, %256 : vector<8x128xf32>
    %cst_107 = arith.constant 1.000000e+00 : f32
    %259 = vector.broadcast %cst_107 : f32 to vector<8x128xf32>
    %260 = arith.subf %258, %259 : vector<8x128xf32>
    %261 = vector.extract_strided_slice %253 {offsets = [0, 384], sizes = [8, 128], strides = [1, 1]} : vector<8x512xf32> to vector<8x128xf32>
    %262 = arith.mulf %255, %231 : vector<8x128xf32>
    %263 = arith.mulf %254, %260 : vector<8x128xf32>
    %264 = arith.addf %262, %263 : vector<8x128xf32>
    %265 = math.tanh %264 : vector<8x128xf32>
    %266 = arith.mulf %261, %265 : vector<8x128xf32>
    %267 = arith.truncf %266 : vector<8x128xf32> to vector<8x128xbf16>
    %268 = arith.index_cast %c7_i32 : i32 to index
    %c0_108 = arith.constant 0 : index
    %c0_109 = arith.constant 0 : index
    %269 = vector.load %arg6[%268, %c0_108, %c0_109] : memref<8x8x128xbf16, #tpu.memory_space<vmem>>, vector<1x8x128xbf16>
    %270 = vector.shape_cast %269 : vector<1x8x128xbf16> to vector<8x128xbf16>
    %271 = vector.shape_cast %267 : vector<8x128xbf16> to vector<1x8x128xbf16>
    tpu.vector_store %arg6[%268, %c0_108, %c0_109], %271 {strides = array<i32>} : memref<8x8x128xbf16, #tpu.memory_space<vmem>>, vector<1x8x128xbf16>,
    %c8_i32 = arith.constant 8 : i32
    %c0_110 = arith.constant 0 : index
    %c0_111 = arith.constant 0 : index
    %272 = vector.load %arg12[%c0_110, %c0_111] : memref<8x128xf32, #tpu.memory_space<vmem>>, vector<8x128xf32>
    tpu.vector_store %arg12[%c0_110, %c0_111], %266 {strides = array<i32>} : memref<8x128xf32, #tpu.memory_space<vmem>>, vector<8x128xf32>,
    %c0_112 = arith.constant 0 : index
    %c0_113 = arith.constant 0 : index
    %273 = vector.load %arg13[%c0_112, %c0_113] : memref<8x128xf32, #tpu.memory_space<vmem>>, vector<8x128xf32>
    tpu.vector_store %arg13[%c0_112, %c0_113], %264 {strides = array<i32>} : memref<8x128xf32, #tpu.memory_space<vmem>>, vector<8x128xf32>,
    %c0_i32_114 = arith.constant 0 : i32
    %274 = arith.cmpi eq, %arg1, %c0_i32_114 : i32
    %275 = arith.extui %274 : i1 to i32
    %c0_i32_115 = arith.constant 0 : i32
    %276 = arith.cmpi ne, %275, %c0_i32_115 : i32
    scf.if %276 {
      %c0_116 = arith.constant 0 : index
      %c0_117 = arith.constant 0 : index
      %277 = vector.load %arg7[%c0_116, %c0_117] : memref<8x128xf32, #tpu.memory_space<vmem>>, vector<8x128xf32>
      tpu.vector_store %arg7[%c0_116, %c0_117], %266 {strides = array<i32>} : memref<8x128xf32, #tpu.memory_space<vmem>>, vector<8x128xf32>,
      %c0_118 = arith.constant 0 : index
      %c0_119 = arith.constant 0 : index
      %278 = vector.load %arg8[%c0_118, %c0_119] : memref<8x128xf32, #tpu.memory_space<vmem>>, vector<8x128xf32>
      tpu.vector_store %arg8[%c0_118, %c0_119], %264 {strides = array<i32>} : memref<8x128xf32, #tpu.memory_space<vmem>>, vector<8x128xf32>,
    } else {
    }
    return
  }
  func.func @transform_0(%arg0: i32, %arg1: i32) -> (i32, i32, i32) {
    %c0_i32 = arith.constant 0 : i32
    %c0_i32_0 = arith.constant 0 : i32
    return %arg1, %arg0, %c0_i32 : i32, i32, i32
  }
  func.func @transform_4(%arg0: i32, %arg1: i32) -> (i32, i32, i32) {
    %c0_i32 = arith.constant 0 : i32
    %c0_i32_0 = arith.constant 0 : i32
    return %arg1, %arg0, %c0_i32 : i32, i32, i32
  }
  func.func @transform_5(%arg0: i32, %arg1: i32) -> (i32, i32) {
    %c0_i32 = arith.constant 0 : i32
    %c0_i32_0 = arith.constant 0 : i32
    return %arg0, %c0_i32 : i32, i32
  }
  func.func @transform_6(%arg0: i32, %arg1: i32) -> (i32, i32) {
    %c0_i32 = arith.constant 0 : i32
    %c0_i32_0 = arith.constant 0 : i32
    return %arg0, %c0_i32 : i32, i32
  }
}

</mosaic_0001>

<llo_original>
// kernel: tpu_custom_call.1
$region0: #{tpu_custom_call.1}
  #allocation0 [shape = 'u32[]', space=smem, size = 0x4, offset = 0x4, fixed_abs, tag = 'smem constant byte address 0x4 - core index']
  #allocation1 [shape = 'u32[144,128]{1,0:T(1,128)}', space=vmem, size = 0x12000, scoped, tag = 'internal scratch']
  #allocation2 [shape = 'bf16[128,512]{1,0:T(8,128)(2,1)}', space=vmem, size = 0x20000, scoped, tag = 'scratch operand']
  #allocation3 [shape = 'bf16[128,512]{1,0:T(8,128)(2,1)}', space=vmem, size = 0x20000, scoped, tag = 'scratch operand']
  #allocation4 [shape = 'f32[1,512]{1,0:T(1,128)}', space=vmem, size = 0x800, scoped, tag = 'scratch operand']
  #allocation5 [shape = 'f32[8,128]{1,0:T(8,128)}', space=vmem, size = 0x1000, scoped, tag = 'scratch operand']
  #allocation6 [shape = 'f32[8,128]{1,0:T(8,128)}', space=vmem, size = 0x1000, scoped, tag = 'scratch operand']
  #allocation7 [shape = 's32[3]{0}', space=sflag, size = 0xc, scoped, tag = 'scratch operand']
  #allocation15 [shape = 's32[]', space=sflag, size = 0x4, offset = 0, fixed_abs, tag = 'sflag constant byte address 0x0 - dummy sync flag']
  #allocation16 [shape = 's32[]', space=sflag, size = 0x4, offset = 0, fixed_abs, tag = 'sflag constant byte address 0x0 - dummy sync flag']
  #allocation17 [shape = 'u32[]', space=smem, size = 0x4, offset = 0x44, fixed_abs, tag = 'smem constant byte address 0x44 - assertion arg 0']
  #allocation18 [shape = 'u32[]', space=smem, size = 0x4, offset = 0x48, fixed_abs, tag = 'smem constant byte address 0x48 - assertion arg 1']
  #allocation19 [shape = 's32[]', space=sflag, size = 0x4, offset = 0, fixed_abs, tag = 'sflag constant byte address 0x0 - dummy sync flag']
  #allocation20 [shape = 's32[]', space=sflag, size = 0x4, offset = 0, fixed_abs, tag = 'sflag constant byte address 0x0 - dummy sync flag']
  #allocation21 [shape = 's32[]', space=sflag, size = 0x4, offset = 0, fixed_abs, tag = 'sflag constant byte address 0x0 - dummy sync flag']
  %s0 = inlined_call_operand.hbm [shape: bf16[8,8,128], index: 0, kind: input, shape index: {}]
  %s1 = inlined_call_operand.hbm [shape: bf16[128,512], index: 1, kind: input, shape index: {}]
  %s2 = inlined_call_operand.hbm [shape: bf16[128,512], index: 2, kind: input, shape index: {}]
  %s3 = inlined_call_operand.vmem [shape: f32[1,512], index: 3, kind: input, shape index: {}]
  %s4 = inlined_call_operand.hbm [shape: bf16[8,8,128], index: 4, kind: output, shape index: {0}]
  %s5 = inlined_call_operand.hbm [shape: f32[8,128], index: 5, kind: output, shape index: {1}]
  %s6 = inlined_call_operand.hbm [shape: f32[8,128], index: 6, kind: output, shape index: {2}]
  %7 = xla_tuple %s4, %s5, %s6
  %s8 = sld [smem:[#allocation0]]
  $region80: #{tpu_custom_call.1} parent=0
    _
  %s10 = ssub.s32 1, %s8
  %s11 = scalar_select 0, %s10, %s8
  $region1: #{tpu_custom_call.1} parent=0
    #allocation8 [shape = 'u8[16384]{0}', space=vmem, size = 0x4000, scoped, tag = 'input window, operand 0, single buffered']
    #allocation9 [shape = 's32[1]{0}', space=sflag, size = 0x4, scoped, tag = 'scoped memory for tpu_custom_call.1']
    #allocation10 [shape = 's32[1]{0}', space=sflag, size = 0x4, scoped, tag = 'scoped memory for tpu_custom_call.1']
    #allocation11 [shape = 'u8[16384]{0}', space=vmem, size = 0x4000, scoped, tag = 'output window, operand 0, single buffered']
    #allocation12 [shape = 'u8[4096]{0}', space=vmem, size = 0x1000, scoped, tag = 'output window, operand 1, single buffered']
    #allocation13 [shape = 's32[1]{0}', space=sflag, size = 0x4, scoped, tag = 'scoped memory for tpu_custom_call.1']
    #allocation14 [shape = 'u8[4096]{0}', space=vmem, size = 0x1000, scoped, tag = 'output window, operand 2, single buffered']
    %12 = vsyncpa [#allocation9], 0
    %13 = vsyncpa [#allocation10], 0
    %14 = vsyncpa [#allocation13], 0
    // Predicated region
    $region2: #{tpu_custom_call.1} parent=1 // pred_check
      _
    $region3: #{tpu_custom_call.1} parent=1 // pred_check_branch
      %16 = sbr.rel (0) target = $region5
    $region4: #{tpu_custom_call.1} parent=1 // pred_region
      %s18 = ssub.s32 512, 512
      %19 = vsyncadd [#allocation9], %s18
      %s20 = sshll.u32 [#allocation8], 4
      %s21 = int_to_ptr.vmem [resolvable:$true] %s20
      %26 = dma.hbm_to_vmem [thread:$0]  %s0, 512, %s21, [#allocation9], 64, 64, 4
    $region5: #{tpu_custom_call.1} parent=1 // pred_fallthru
      _
    // Predicated region
    $region6: #{tpu_custom_call.1} parent=1 // pred_check
      _
    $region7: #{tpu_custom_call.1} parent=1 // pred_check_branch
      %28 = sbr.rel (0) target = $region9
    $region8: #{tpu_custom_call.1} parent=1 // pred_region
      %29 = dma.done [#allocation9], 512
    $region9: #{tpu_custom_call.1} parent=1 // pred_fallthru
      _
    %p31 = scmp.eq.s32.totalorder 0, 0
    // Predicated region
    $region10: #{tpu_custom_call.1} parent=1 // pred_check
      %p32 = pneg %p31
    $region11: #{tpu_custom_call.1} parent=1 // pred_check_branch
      %34 = sbr.rel (%p32) target = $region13
    $region12: #{tpu_custom_call.1} parent=1 // pred_region
      // Predicated region
      $region14: #{tpu_custom_call.1} parent=12 // pred_check
        _
      $region15: #{tpu_custom_call.1} parent=12 // pred_check_branch
        %36 = sbr.rel target = $region17
      $region16: #{tpu_custom_call.1} parent=12 // pred_region
        %37 = sst [smem:[#allocation17]] [#allocation16]
        %38 = sst [smem:[#allocation18]] [#allocation15]
      $region17: #{tpu_custom_call.1} parent=12 // pred_fallthru
        _
      %40 = shalt.err (0)
      %s42 = sshll.u32 [#allocation2], 4
      %s43 = int_to_ptr.vmem [resolvable:$true] %s42
      %45 = dma.hbm_to_vmem [thread:$0]  %s1, 4096, %s43, [#allocation7]
      %s46 = scalar_lea.sflag [#allocation7], 1
      // Predicated region
      $region18: #{tpu_custom_call.1} parent=12 // pred_check
        _
      $region19: #{tpu_custom_call.1} parent=12 // pred_check_branch
        %48 = sbr.rel target = $region21
      $region20: #{tpu_custom_call.1} parent=12 // pred_region
        %49 = sst [smem:[#allocation17]] [#allocation20]
        %50 = sst [smem:[#allocation18]] [#allocation19]
      $region21: #{tpu_custom_call.1} parent=12 // pred_fallthru
        _
      %52 = shalt.err (0)
      %s54 = sshll.u32 [#allocation3], 4
      %s55 = int_to_ptr.vmem [resolvable:$true] %s54
      %57 = dma.hbm_to_vmem [thread:$0]  %s2, 4096, %s55, %s46
      %s58 = scalar_lea.sflag [#allocation7], 2
      %p60 = scmp.lt.u32.totalorder 4, 8
      %p61 = pneg %p60
      // Predicated region
      $region22: #{tpu_custom_call.1} parent=12 // pred_check
        _
      $region23: #{tpu_custom_call.1} parent=12 // pred_check_branch
        %63 = sbr.rel (%p60) target = $region25
      $region24: #{tpu_custom_call.1} parent=12 // pred_region
        %s79 = sand.u32 4, 7
        %p80 = scmp.eq.s32.totalorder %s79, 0
        %p81 = pneg %p80
        // Predicated region
        $region37: #{tpu_custom_call.1} parent=24 // pred_check
          _
        $region38: #{tpu_custom_call.1} parent=24 // pred_check_branch
          %83 = sbr.rel (%p80) target = $region40
        $region39: #{tpu_custom_call.1} parent=24 // pred_region
          %s84 = sand.u32 4, 7
          %s85 = ssub.s32 4, %s84
          %s86 = scalar_lea.vmem %s3, %s85
          %s87 = ssub.s32 4, %s84
          %s88 = scalar_lea.vmem [#allocation4], %s87
          %s89 = sshll.u32 1, %s84
          %s90 = ssub.s32 %s89, 1
          loop: start=0, step=1, limit=1
          $region41: #{tpu_custom_call.1} parent=39 // loop_pre_header
            _
          $region42: #{tpu_custom_call.1} parent=39 // loop_header
            %s92 = sphi 0, %s96
            %p93 = scmp.ge.s32.totalorder %s92, 1
            %s97 = sphi %s86, %s86
            %s98 = sphi %s88, %s88
          $region43: #{tpu_custom_call.1} parent=39 // loop_header_branch
            %95 = sbr.rel (%p93) target = $region47
          $region44: #{tpu_custom_call.1} parent=39 // loop_body
            %v99 = vld [vmem:[%s97] sm:%s90]
            %100 = vst [vmem:[%s98] sm:%s90] %v99
          $region45: #{tpu_custom_call.1} parent=39 // loop_footer
            %s96 = sadd.s32 1, %s92
          $region46: #{tpu_custom_call.1} parent=39 // loop_footer_branch
            %91 = sbr.rel target = $region42
          $region47: #{tpu_custom_call.1} parent=39 // loop_exit
            _
        $region40: #{tpu_custom_call.1} parent=24 // pred_fallthru
          _
      $region25: #{tpu_custom_call.1} parent=12 // pred_fallthru
        _
      // Predicated region
      $region26: #{tpu_custom_call.1} parent=12 // pred_check
        %p64 = pneg %p60
      $region27: #{tpu_custom_call.1} parent=12 // pred_check_branch
        %66 = sbr.rel (%p64) target = $region29
      $region28: #{tpu_custom_call.1} parent=12 // pred_region
        %s67 = sshll.u32 1, 4
        %s68 = ssub.s32 %s67, 1
        loop: start=0, step=1, limit=1
        $region30: #{tpu_custom_call.1} parent=28 // loop_pre_header
          _
        $region31: #{tpu_custom_call.1} parent=28 // loop_header
          %s70 = sphi 0, %s74
          %p71 = scmp.ge.s32.totalorder %s70, 1
          %s75 = sphi %s3, %s3
          %s76 = sphi [#allocation4], [#allocation4]
        $region32: #{tpu_custom_call.1} parent=28 // loop_header_branch
          %73 = sbr.rel (%p71) target = $region36
        $region33: #{tpu_custom_call.1} parent=28 // loop_body
          %v77 = vld [vmem:[%s75] sm:%s68]
          %78 = vst [vmem:[%s76] sm:%s68] %v77
        $region34: #{tpu_custom_call.1} parent=28 // loop_footer
          %s74 = sadd.s32 1, %s70
        $region35: #{tpu_custom_call.1} parent=28 // loop_footer_branch
          %69 = sbr.rel target = $region31
        $region36: #{tpu_custom_call.1} parent=28 // loop_exit
          _
      $region29: #{tpu_custom_call.1} parent=12 // pred_fallthru
        _
      // Predicated region
      $region48: #{tpu_custom_call.1} parent=12 // pred_check
        _
      $region49: #{tpu_custom_call.1} parent=12 // pred_check_branch
        %103 = sbr.rel (0) target = $region51
      $region50: #{tpu_custom_call.1} parent=12 // pred_region
        %104 = vsyncadd %s58, 64
      $region51: #{tpu_custom_call.1} parent=12 // pred_fallthru
        _
      %s105 = smul.u32 4, 16
      %s106 = smul.u32 %s105, 4
      %s107 = sshll.u32 %s106, 4
      %108 = dma.done [#allocation7], %s107
      %s109 = sshll.u32 %s106, 4
      %110 = dma.done %s46, %s109
      %s111 = smul.u32 1, 4
      %s112 = sshll.u32 %s111, 4
      %113 = dma.done %s58, %s112
      %114 = vst [vmem:[#allocation5] sm:$0xff] 0.0
      %115 = vst [vmem:[#allocation6] sm:$0xff] 0.0
    $region13: #{tpu_custom_call.1} parent=1 // pred_fallthru
      _
    %v116 = vld [vmem:[#allocation4] sm:$0xf]
    %v118 = vlaneseq
    %v119 = vshrl.u32 %v118, 7
    %v120 = vsub.s32 0, %v119
    %v121 = vrot.slane %v116, %v120
    %v122 = vlaneseq
    %v123 = vshrl.u32 %v122, 7
    %v124 = vsub.s32 1, %v123
    %v125 = vrot.slane %v116, %v124
    %v126 = vlaneseq
    %v127 = vshrl.u32 %v126, 7
    %v128 = vsub.s32 2, %v127
    %v129 = vrot.slane %v116, %v128
    %v130 = vlaneseq
    %v131 = vshrl.u32 %v130, 7
    %v132 = vsub.s32 3, %v131
    %v133 = vrot.slane %v116, %v132
    %v138 = vld [vmem:[#allocation5] sm:$0xff]
    %v139 = vld [vmem:[#allocation6] sm:$0xff]
    %v140 = vld [vmem:[#allocation8] sm:$0xf]
    %v141 = vld [vmem:[#allocation2] sm:$0xff]
    %v142 = vld [vmem:[#allocation2 + $0x8] sm:$0xff]
    %v143 = vld [vmem:[#allocation2 + $0x10] sm:$0xff]
    %v144 = vld [vmem:[#allocation2 + $0x18] sm:$0xff]
    %v145 = vld [vmem:[#allocation2 + $0x20] sm:$0xff]
    %v146 = vld [vmem:[#allocation2 + $0x28] sm:$0xff]
    %v147 = vld [vmem:[#allocation2 + $0x30] sm:$0xff]
    %v148 = vld [vmem:[#allocation2 + $0x38] sm:$0xff]
    %v149 = vld [vmem:[#allocation2 + $0x40] sm:$0xff]
    %v150 = vld [vmem:[#allocation2 + $0x48] sm:$0xff]
    %v151 = vld [vmem:[#allocation2 + $0x50] sm:$0xff]
    %v152 = vld [vmem:[#allocation2 + $0x58] sm:$0xff]
    %v153 = vld [vmem:[#allocation2 + $0x60] sm:$0xff]
    %v154 = vld [vmem:[#allocation2 + $0x68] sm:$0xff]
    %v155 = vld [vmem:[#allocation2 + $0x70] sm:$0xff]
    %v156 = vld [vmem:[#allocation2 + $0x78] sm:$0xff]
    %v157 = vld [vmem:[#allocation2 + $0x80] sm:$0xff]
    %v158 = vld [vmem:[#allocation2 + $0x88] sm:$0xff]
    %v159 = vld [vmem:[#allocation2 + $0x90] sm:$0xff]
    %v160 = vld [vmem:[#allocation2 + $0x98] sm:$0xff]
    %v161 = vld [vmem:[#allocation2 + $0xa0] sm:$0xff]
    %v162 = vld [vmem:[#allocation2 + $0xa8] sm:$0xff]
    %v163 = vld [vmem:[#allocation2 + $0xb0] sm:$0xff]
    %v164 = vld [vmem:[#allocation2 + $0xb8] sm:$0xff]
    %v165 = vld [vmem:[#allocation2 + $0xc0] sm:$0xff]
    %v166 = vld [vmem:[#allocation2 + $0xc8] sm:$0xff]
    %v167 = vld [vmem:[#allocation2 + $0xd0] sm:$0xff]
    %v168 = vld [vmem:[#allocation2 + $0xd8] sm:$0xff]
    %v169 = vld [vmem:[#allocation2 + $0xe0] sm:$0xff]
    %v170 = vld [vmem:[#allocation2 + $0xe8] sm:$0xff]
    %v171 = vld [vmem:[#allocation2 + $0xf0] sm:$0xff]
    %v172 = vld [vmem:[#allocation2 + $0xf8] sm:$0xff]
    %v205 = vunpack.c.l.b16 %v141
    %v206 = vunpack.c.h.b16 %v141
    %v207 = vunpack.c.l.b16 %v142
    %v208 = vunpack.c.h.b16 %v142
    %v209 = vunpack.c.l.b16 %v143
    %v210 = vunpack.c.h.b16 %v143
    %v211 = vunpack.c.l.b16 %v144
    %v212 = vunpack.c.h.b16 %v144
    %v213 = vunpack.c.l.b16 %v145
    %v214 = vunpack.c.h.b16 %v145
    %v215 = vunpack.c.l.b16 %v146
    %v216 = vunpack.c.h.b16 %v146
    %v217 = vunpack.c.l.b16 %v147
    %v218 = vunpack.c.h.b16 %v147
    %v219 = vunpack.c.l.b16 %v148
    %v220 = vunpack.c.h.b16 %v148
    %v221 = vunpack.c.l.b16 %v149
    %v222 = vunpack.c.h.b16 %v149
    %v223 = vunpack.c.l.b16 %v150
    %v224 = vunpack.c.h.b16 %v150
    %v225 = vunpack.c.l.b16 %v151
    %v226 = vunpack.c.h.b16 %v151
    %v227 = vunpack.c.l.b16 %v152
    %v228 = vunpack.c.h.b16 %v152
    %v229 = vunpack.c.l.b16 %v153
    %v230 = vunpack.c.h.b16 %v153
    %v231 = vunpack.c.l.b16 %v154
    %v232 = vunpack.c.h.b16 %v154
    %v233 = vunpack.c.l.b16 %v155
    %v234 = vunpack.c.h.b16 %v155
    %v235 = vunpack.c.l.b16 %v156
    %v236 = vunpack.c.h.b16 %v156
    %v237 = vunpack.c.l.b16 %v157
    %v238 = vunpack.c.h.b16 %v157
    %v239 = vunpack.c.l.b16 %v158
    %v240 = vunpack.c.h.b16 %v158
    %v241 = vunpack.c.l.b16 %v159
    %v242 = vunpack.c.h.b16 %v159
    %v243 = vunpack.c.l.b16 %v160
    %v244 = vunpack.c.h.b16 %v160
    %v245 = vunpack.c.l.b16 %v161
    %v246 = vunpack.c.h.b16 %v161
    %v247 = vunpack.c.l.b16 %v162
    %v248 = vunpack.c.h.b16 %v162
    %v249 = vunpack.c.l.b16 %v163
    %v250 = vunpack.c.h.b16 %v163
    %v251 = vunpack.c.l.b16 %v164
    %v252 = vunpack.c.h.b16 %v164
    %v253 = vunpack.c.l.b16 %v165
    %v254 = vunpack.c.h.b16 %v165
    %v255 = vunpack.c.l.b16 %v166
    %v256 = vunpack.c.h.b16 %v166
    %v257 = vunpack.c.l.b16 %v167
    %v258 = vunpack.c.h.b16 %v167
    %v259 = vunpack.c.l.b16 %v168
    %v260 = vunpack.c.h.b16 %v168
    %v261 = vunpack.c.l.b16 %v169
    %v262 = vunpack.c.h.b16 %v169
    %v263 = vunpack.c.l.b16 %v170
    %v264 = vunpack.c.h.b16 %v170
    %v265 = vunpack.c.l.b16 %v171
    %v266 = vunpack.c.h.b16 %v171
    %v267 = vunpack.c.l.b16 %v172
    %v268 = vunpack.c.h.b16 %v172
    %v269 = vpack.c.b16 %v209, %v205
    %v270 = vpack.c.b16 %v210, %v206
    %v271 = vpack.c.b16 %v211, %v207
    %v272 = vpack.c.b16 %v212, %v208
    %v273 = vpack.c.b16 %v217, %v213
    %v274 = vpack.c.b16 %v218, %v214
    %v275 = vpack.c.b16 %v219, %v215
    %v276 = vpack.c.b16 %v220, %v216
    %v277 = vpack.c.b16 %v225, %v221
    %v278 = vpack.c.b16 %v226, %v222
    %v279 = vpack.c.b16 %v227, %v223
    %v280 = vpack.c.b16 %v228, %v224
    %v281 = vpack.c.b16 %v233, %v229
    %v282 = vpack.c.b16 %v234, %v230
    %v283 = vpack.c.b16 %v235, %v231
    %v284 = vpack.c.b16 %v236, %v232
    %v285 = vpack.c.b16 %v241, %v237
    %v286 = vpack.c.b16 %v242, %v238
    %v287 = vpack.c.b16 %v243, %v239
    %v288 = vpack.c.b16 %v244, %v240
    %v289 = vpack.c.b16 %v249, %v245
    %v290 = vpack.c.b16 %v250, %v246
    %v291 = vpack.c.b16 %v251, %v247
    %v292 = vpack.c.b16 %v252, %v248
    %v293 = vpack.c.b16 %v257, %v253
    %v294 = vpack.c.b16 %v258, %v254
    %v295 = vpack.c.b16 %v259, %v255
    %v296 = vpack.c.b16 %v260, %v256
    %v297 = vpack.c.b16 %v265, %v261
    %v298 = vpack.c.b16 %v266, %v262
    %v299 = vpack.c.b16 %v267, %v263
    %v300 = vpack.c.b16 %v268, %v264
    %333 = vmatprep.subr.bf16.mxu0 %v298
    %334 = vmatpush1.bf16.msra.mxu0 %v297
    %335 = vmatprep.subr.bf16.mxu0 %v294
    %336 = vmatpush1.bf16.msra.mxu0 %v293
    %337 = vmatprep.subr.bf16.mxu0 %v290
    %338 = vmatpush1.bf16.msra.mxu0 %v289
    %339 = vmatprep.subr.bf16.mxu0 %v286
    %340 = vmatpush1.bf16.msra.mxu0 %v285
    %341 = vmatprep.subr.bf16.mxu0 %v282
    %342 = vmatpush1.bf16.msra.mxu0 %v281
    %343 = vmatprep.subr.bf16.mxu0 %v278
    %344 = vmatpush1.bf16.msra.mxu0 %v277
    %345 = vmatprep.subr.bf16.mxu0 %v274
    %346 = vmatpush1.bf16.msra.mxu0 %v273
    %347 = vmatprep.subr.bf16.mxu0 %v270
    %348 = vmatpush1.bf16.msra.mxu0 %v269
    %349 = vmatprep.subr.bf16.mxu0 0
    %350 = vmatpush2.bf16.msra.mxu0 0
    %351 = vmatprep.subr.bf16.mxu0 0
    %352 = vmatpush2.bf16.msra.mxu0 0
    %353 = vmatprep.subr.bf16.mxu0 0
    %354 = vmatpush2.bf16.msra.mxu0 0
    %355 = vmatprep.subr.bf16.mxu0 0
    %356 = vmatpush2.bf16.msra.mxu0 0
    %357 = vmatprep.subr.bf16.mxu0 0
    %358 = vmatpush2.bf16.msra.mxu0 0
    %359 = vmatprep.subr.bf16.mxu0 0
    %360 = vmatpush2.bf16.msra.mxu0 0
    %361 = vmatprep.subr.bf16.mxu0 0
    %362 = vmatpush2.bf16.msra.mxu0 0
    %363 = vmatprep.subr.bf16.mxu0 0
    %364 = vmatpush2.bf16.msra.mxu0 0
    %365 = vmatprep.mubr.bf16.mxu0 0
    %366 = vmatmul.mubr.bf16.gmra.mxu0 %v140
    %v367 = vpop.f32.mrf.mxu0
    %v368 = vadd.f32 0.0, %v367
    %v369 = vpop.f32.mrf.mxu0
    %v370 = vadd.f32 0.0, %v369
    %v371 = vpop.f32.mrf.mxu0
    %v372 = vpop.f32.mrf.mxu0
    %373 = vdwg.mxu0
    %374 = vmatprep.subr.bf16.mxu0 %v300
    %375 = vmatpush1.bf16.msra.mxu0 %v299
    %376 = vmatprep.subr.bf16.mxu0 %v296
    %377 = vmatpush1.bf16.msra.mxu0 %v295
    %378 = vmatprep.subr.bf16.mxu0 %v292
    %379 = vmatpush1.bf16.msra.mxu0 %v291
    %380 = vmatprep.subr.bf16.mxu0 %v288
    %381 = vmatpush1.bf16.msra.mxu0 %v287
    %382 = vmatprep.subr.bf16.mxu0 %v284
    %383 = vmatpush1.bf16.msra.mxu0 %v283
    %384 = vmatprep.subr.bf16.mxu0 %v280
    %385 = vmatpush1.bf16.msra.mxu0 %v279
    %386 = vmatprep.subr.bf16.mxu0 %v276
    %387 = vmatpush1.bf16.msra.mxu0 %v275
    %388 = vmatprep.subr.bf16.mxu0 %v272
    %389 = vmatpush1.bf16.msra.mxu0 %v271
    %390 = vmatprep.subr.bf16.mxu0 0
    %391 = vmatpush2.bf16.msra.mxu0 0
    %392 = vmatprep.subr.bf16.mxu0 0
    %393 = vmatpush2.bf16.msra.mxu0 0
    %394 = vmatprep.subr.bf16.mxu0 0
    %395 = vmatpush2.bf16.msra.mxu0 0
    %396 = vmatprep.subr.bf16.mxu0 0
    %397 = vmatpush2.bf16.msra.mxu0 0
    %398 = vmatprep.subr.bf16.mxu0 0
    %399 = vmatpush2.bf16.msra.mxu0 0
    %400 = vmatprep.subr.bf16.mxu0 0
    %401 = vmatpush2.bf16.msra.mxu0 0
    %402 = vmatprep.subr.bf16.mxu0 0
    %403 = vmatpush2.bf16.msra.mxu0 0
    %404 = vmatprep.subr.bf16.mxu0 0
    %405 = vmatpush2.bf16.msra.mxu0 0
    %406 = vmatprep.mubr.bf16.mxu0 0
    %407 = vmatmul.mubr.bf16.gmra.mxu0 %v140
    %v408 = vpop.f32.mrf.mxu0
    %v409 = vadd.f32 0.0, %v408
    %v410 = vpop.f32.mrf.mxu0
    %v411 = vadd.f32 0.0, %v410
    %v412 = vpop.f32.mrf.mxu0
    %v413 = vpop.f32.mrf.mxu0
    %414 = vdwg.mxu0
    %v415 = vadd.f32 %v121, %v368
    %v416 = vadd.f32 %v125, %v370
    %v417 = vadd.f32 %v129, %v409
    %v418 = vadd.f32 %v133, %v411
    %v419 = vpack.c.bf16 %v138, %v138
    %v420 = vld [vmem:[#allocation3] sm:$0xff]
    %v421 = vld [vmem:[#allocation3 + $0x8] sm:$0xff]
    %v422 = vld [vmem:[#allocation3 + $0x10] sm:$0xff]
    %v423 = vld [vmem:[#allocation3 + $0x18] sm:$0xff]
    %v424 = vld [vmem:[#allocation3 + $0x20] sm:$0xff]
    %v425 = vld [vmem:[#allocation3 + $0x28] sm:$0xff]
    %v426 = vld [vmem:[#allocation3 + $0x30] sm:$0xff]
    %v427 = vld [vmem:[#allocation3 + $0x38] sm:$0xff]
    %v428 = vld [vmem:[#allocation3 + $0x40] sm:$0xff]
    %v429 = vld [vmem:[#allocation3 + $0x48] sm:$0xff]
    %v430 = vld [vmem:[#allocation3 + $0x50] sm:$0xff]
    %v431 = vld [vmem:[#allocation3 + $0x58] sm:$0xff]
    %v432 = vld [vmem:[#allocation3 + $0x60] sm:$0xff]
    %v433 = vld [vmem:[#allocation3 + $0x68] sm:$0xff]
    %v434 = vld [vmem:[#allocation3 + $0x70] sm:$0xff]
    %v435 = vld [vmem:[#allocation3 + $0x78] sm:$0xff]
    %v436 = vld [vmem:[#allocation3 + $0x80] sm:$0xff]
    %v437 = vld [vmem:[#allocation3 + $0x88] sm:$0xff]
    %v438 = vld [vmem:[#allocation3 + $0x90] sm:$0xff]
    %v439 = vld [vmem:[#allocation3 + $0x98] sm:$0xff]
    %v440 = vld [vmem:[#allocation3 + $0xa0] sm:$0xff]
    %v441 = vld [vmem:[#allocation3 + $0xa8] sm:$0xff]
    %v442 = vld [vmem:[#allocation3 + $0xb0] sm:$0xff]
    %v443 = vld [vmem:[#allocation3 + $0xb8] sm:$0xff]
    %v444 = vld [vmem:[#allocation3 + $0xc0] sm:$0xff]
    %v445 = vld [vmem:[#allocation3 + $0xc8] sm:$0xff]
    %v446 = vld [vmem:[#allocation3 + $0xd0] sm:$0xff]
    %v447 = vld [vmem:[#allocation3 + $0xd8] sm:$0xff]
    %v448 = vld [vmem:[#allocation3 + $0xe0] sm:$0xff]
    %v449 = vld [vmem:[#allocation3 + $0xe8] sm:$0xff]
    %v450 = vld [vmem:[#allocation3 + $0xf0] sm:$0xff]
    %v451 = vld [vmem:[#allocation3 + $0xf8] sm:$0xff]
    %v484 = vunpack.c.l.b16 %v420
    %v485 = vunpack.c.h.b16 %v420
    %v486 = vunpack.c.l.b16 %v421
    %v487 = vunpack.c.h.b16 %v421
    %v488 = vunpack.c.l.b16 %v422
    %v489 = vunpack.c.h.b16 %v422
    %v490 = vunpack.c.l.b16 %v423
    %v491 = vunpack.c.h.b16 %v423
    %v492 = vunpack.c.l.b16 %v424
    %v493 = vunpack.c.h.b16 %v424
    %v494 = vunpack.c.l.b16 %v425
    %v495 = vunpack.c.h.b16 %v425
    %v496 = vunpack.c.l.b16 %v426
    %v497 = vunpack.c.h.b16 %v426
    %v498 = vunpack.c.l.b16 %v427
    %v499 = vunpack.c.h.b16 %v427
    %v500 = vunpack.c.l.b16 %v428
    %v501 = vunpack.c.h.b16 %v428
    %v502 = vunpack.c.l.b16 %v429
    %v503 = vunpack.c.h.b16 %v429
    %v504 = vunpack.c.l.b16 %v430
    %v505 = vunpack.c.h.b16 %v430
    %v506 = vunpack.c.l.b16 %v431
    %v507 = vunpack.c.h.b16 %v431
    %v508 = vunpack.c.l.b16 %v432
    %v509 = vunpack.c.h.b16 %v432
    %v510 = vunpack.c.l.b16 %v433
    %v511 = vunpack.c.h.b16 %v433
    %v512 = vunpack.c.l.b16 %v434
    %v513 = vunpack.c.h.b16 %v434
    %v514 = vunpack.c.l.b16 %v435
    %v515 = vunpack.c.h.b16 %v435
    %v516 = vunpack.c.l.b16 %v436
    %v517 = vunpack.c.h.b16 %v436
    %v518 = vunpack.c.l.b16 %v437
    %v519 = vunpack.c.h.b16 %v437
    %v520 = vunpack.c.l.b16 %v438
    %v521 = vunpack.c.h.b16 %v438
    %v522 = vunpack.c.l.b16 %v439
    %v523 = vunpack.c.h.b16 %v439
    %v524 = vunpack.c.l.b16 %v440
    %v525 = vunpack.c.h.b16 %v440
    %v526 = vunpack.c.l.b16 %v441
    %v527 = vunpack.c.h.b16 %v441
    %v528 = vunpack.c.l.b16 %v442
    %v529 = vunpack.c.h.b16 %v442
    %v530 = vunpack.c.l.b16 %v443
    %v531 = vunpack.c.h.b16 %v443
    %v532 = vunpack.c.l.b16 %v444
    %v533 = vunpack.c.h.b16 %v444
    %v534 = vunpack.c.l.b16 %v445
    %v535 = vunpack.c.h.b16 %v445
    %v536 = vunpack.c.l.b16 %v446
    %v537 = vunpack.c.h.b16 %v446
    %v538 = vunpack.c.l.b16 %v447
    %v539 = vunpack.c.h.b16 %v447
    %v540 = vunpack.c.l.b16 %v448
    %v541 = vunpack.c.h.b16 %v448
    %v542 = vunpack.c.l.b16 %v449
    %v543 = vunpack.c.h.b16 %v449
    %v544 = vunpack.c.l.b16 %v450
    %v545 = vunpack.c.h.b16 %v450
    %v546 = vunpack.c.l.b16 %v451
    %v547 = vunpack.c.h.b16 %v451
    %v548 = vpack.c.b16 %v488, %v484
    %v549 = vpack.c.b16 %v489, %v485
    %v550 = vpack.c.b16 %v490, %v486
    %v551 = vpack.c.b16 %v491, %v487
    %v552 = vpack.c.b16 %v496, %v492
    %v553 = vpack.c.b16 %v497, %v493
    %v554 = vpack.c.b16 %v498, %v494
    %v555 = vpack.c.b16 %v499, %v495
    %v556 = vpack.c.b16 %v504, %v500
    %v557 = vpack.c.b16 %v505, %v501
    %v558 = vpack.c.b16 %v506, %v502
    %v559 = vpack.c.b16 %v507, %v503
    %v560 = vpack.c.b16 %v512, %v508
    %v561 = vpack.c.b16 %v513, %v509
    %v562 = vpack.c.b16 %v514, %v510
    %v563 = vpack.c.b16 %v515, %v511
    %v564 = vpack.c.b16 %v520, %v516
    %v565 = vpack.c.b16 %v521, %v517
    %v566 = vpack.c.b16 %v522, %v518
    %v567 = vpack.c.b16 %v523, %v519
    %v568 = vpack.c.b16 %v528, %v524
    %v569 = vpack.c.b16 %v529, %v525
    %v570 = vpack.c.b16 %v530, %v526
    %v571 = vpack.c.b16 %v531, %v527
    %v572 = vpack.c.b16 %v536, %v532
    %v573 = vpack.c.b16 %v537, %v533
    %v574 = vpack.c.b16 %v538, %v534
    %v575 = vpack.c.b16 %v539, %v535
    %v576 = vpack.c.b16 %v544, %v540
    %v577 = vpack.c.b16 %v545, %v541
    %v578 = vpack.c.b16 %v546, %v542
    %v579 = vpack.c.b16 %v547, %v543
    %612 = vmatprep.subr.bf16.mxu0 %v577
    %613 = vmatpush1.bf16.msra.mxu0 %v576
    %614 = vmatprep.subr.bf16.mxu0 %v573
    %615 = vmatpush1.bf16.msra.mxu0 %v572
    %616 = vmatprep.subr.bf16.mxu0 %v569
    %617 = vmatpush1.bf16.msra.mxu0 %v568
    %618 = vmatprep.subr.bf16.mxu0 %v565
    %619 = vmatpush1.bf16.msra.mxu0 %v564
    %620 = vmatprep.subr.bf16.mxu0 %v561
    %621 = vmatpush1.bf16.msra.mxu0 %v560
    %622 = vmatprep.subr.bf16.mxu0 %v557
    %623 = vmatpush1.bf16.msra.mxu0 %v556
    %624 = vmatprep.subr.bf16.mxu0 %v553
    %625 = vmatpush1.bf16.msra.mxu0 %v552
    %626 = vmatprep.subr.bf16.mxu0 %v549
    %627 = vmatpush1.bf16.msra.mxu0 %v548
    %628 = vmatprep.subr.bf16.mxu0 0
    %629 = vmatpush2.bf16.msra.mxu0 0
    %630 = vmatprep.subr.bf16.mxu0 0
    %631 = vmatpush2.bf16.msra.mxu0 0
    %632 = vmatprep.subr.bf16.mxu0 0
    %633 = vmatpush2.bf16.msra.mxu0 0
    %634 = vmatprep.subr.bf16.mxu0 0
    %635 = vmatpush2.bf16.msra.mxu0 0
    %636 = vmatprep.subr.bf16.mxu0 0
    %637 = vmatpush2.bf16.msra.mxu0 0
    %638 = vmatprep.subr.bf16.mxu0 0
    %639 = vmatpush2.bf16.msra.mxu0 0
    %640 = vmatprep.subr.bf16.mxu0 0
    %641 = vmatpush2.bf16.msra.mxu0 0
    %642 = vmatprep.subr.bf16.mxu0 0
    %643 = vmatpush2.bf16.msra.mxu0 0
    %644 = vmatprep.mubr.bf16.mxu0 0
    %645 = vmatmul.mubr.bf16.gmra.mxu0 %v419
    %v646 = vpop.f32.mrf.mxu0
    %v647 = vadd.f32 0.0, %v646
    %v648 = vpop.f32.mrf.mxu0
    %v649 = vadd.f32 0.0, %v648
    %v650 = vpop.f32.mrf.mxu0
    %v651 = vpop.f32.mrf.mxu0
    %652 = vdwg.mxu0
    %653 = vmatprep.subr.bf16.mxu0 %v579
    %654 = vmatpush1.bf16.msra.mxu0 %v578
    %655 = vmatprep.subr.bf16.mxu0 %v575
    %656 = vmatpush1.bf16.msra.mxu0 %v574
    %657 = vmatprep.subr.bf16.mxu0 %v571
    %658 = vmatpush1.bf16.msra.mxu0 %v570
    %659 = vmatprep.subr.bf16.mxu0 %v567
    %660 = vmatpush1.bf16.msra.mxu0 %v566
    %661 = vmatprep.subr.bf16.mxu0 %v563
    %662 = vmatpush1.bf16.msra.mxu0 %v562
    %663 = vmatprep.subr.bf16.mxu0 %v559
    %664 = vmatpush1.bf16.msra.mxu0 %v558
    %665 = vmatprep.subr.bf16.mxu0 %v555
    %666 = vmatpush1.bf16.msra.mxu0 %v554
    %667 = vmatprep.subr.bf16.mxu0 %v551
    %668 = vmatpush1.bf16.msra.mxu0 %v550
    %669 = vmatprep.subr.bf16.mxu0 0
    %670 = vmatpush2.bf16.msra.mxu0 0
    %671 = vmatprep.subr.bf16.mxu0 0
    %672 = vmatpush2.bf16.msra.mxu0 0
    %673 = vmatprep.subr.bf16.mxu0 0
    %674 = vmatpush2.bf16.msra.mxu0 0
    %675 = vmatprep.subr.bf16.mxu0 0
    %676 = vmatpush2.bf16.msra.mxu0 0
    %677 = vmatprep.subr.bf16.mxu0 0
    %678 = vmatpush2.bf16.msra.mxu0 0
    %679 = vmatprep.subr.bf16.mxu0 0
    %680 = vmatpush2.bf16.msra.mxu0 0
    %681 = vmatprep.subr.bf16.mxu0 0
    %682 = vmatpush2.bf16.msra.mxu0 0
    %683 = vmatprep.subr.bf16.mxu0 0
    %684 = vmatpush2.bf16.msra.mxu0 0
    %685 = vmatprep.mubr.bf16.mxu0 0
    %686 = vmatmul.mubr.bf16.gmra.mxu0 %v419
    %v687 = vpop.f32.mrf.mxu0
    %v688 = vadd.f32 0.0, %v687
    %v689 = vpop.f32.mrf.mxu0
    %v690 = vadd.f32 0.0, %v689
    %v691 = vpop.f32.mrf.mxu0
    %v692 = vpop.f32.mrf.mxu0
    %693 = vdwg.mxu0
    %v694 = vadd.f32 %v415, %v647
    %v695 = vadd.f32 %v416, %v649
    %v696 = vadd.f32 %v417, %v688
    %v697 = vadd.f32 %v418, %v690
    %v698 = vxor.u32 %v694, 2147483648
    %v699 = vxor.u32 %v695, 2147483648
    %v700 = vxor.u32 %v696, 2147483648
    %v701 = vxor.u32 %v697, 2147483648
    %v702 = vmul.f32 %v698, 1.442695
    %v703 = vpow.pop %v702
    %v704 = vmul.f32 %v699, 1.442695
    %v705 = vpow.pop %v704
    %v706 = vmul.f32 %v700, 1.442695
    %v707 = vpow.pop %v706
    %v708 = vmul.f32 %v701, 1.442695
    %v709 = vpow.pop %v708
    %v710 = vadd.f32 %v703, 1.0
    %v711 = vadd.f32 %v705, 1.0
    %v712 = vadd.f32 %v707, 1.0
    %v713 = vadd.f32 %v709, 1.0
    %v714 = vrcp.pop %v710
    %v715 = vmul.f32 1.0, %v714
    %v716 = vrcp.pop %v711
    %v717 = vmul.f32 1.0, %v716
    %v718 = vrcp.pop %v712
    %v719 = vmul.f32 1.0, %v718
    %v720 = vrcp.pop %v713
    %v721 = vmul.f32 1.0, %v720
    %v722 = vmul.f32 %v719, 2.0
    %v723 = vsub.f32 %v722, 1.0
    %v724 = vmul.f32 %v717, %v139
    %v725 = vmul.f32 %v715, %v723
    %v726 = vadd.f32 %v724, %v725
    %v727 = vtanh.pop %v726
    %v728 = vmul.f32 %v721, %v727
    %v729 = vpack.c.bf16 %v728, %v728
    %730 = vst [vmem:[#allocation11] sm:$0xf] %v729
    %s731 = scalar_lea.vmem [#allocation8], 4
    %v732 = vld [vmem:[%s731] sm:$0xf]
    %v733 = vld [vmem:[#allocation2] sm:$0xff]
    %v734 = vld [vmem:[#allocation2 + $0x8] sm:$0xff]
    %v735 = vld [vmem:[#allocation2 + $0x10] sm:$0xff]
    %v736 = vld [vmem:[#allocation2 + $0x18] sm:$0xff]
    %v737 = vld [vmem:[#allocation2 + $0x20] sm:$0xff]
    %v738 = vld [vmem:[#allocation2 + $0x28] sm:$0xff]
    %v739 = vld [vmem:[#allocation2 + $0x30] sm:$0xff]
    %v740 = vld [vmem:[#allocation2 + $0x38] sm:$0xff]
    %v741 = vld [vmem:[#allocation2 + $0x40] sm:$0xff]
    %v742 = vld [vmem:[#allocation2 + $0x48] sm:$0xff]
    %v743 = vld [vmem:[#allocation2 + $0x50] sm:$0xff]
    %v744 = vld [vmem:[#allocation2 + $0x58] sm:$0xff]
    %v745 = vld [vmem:[#allocation2 + $0x60] sm:$0xff]
    %v746 = vld [vmem:[#allocation2 + $0x68] sm:$0xff]
    %v747 = vld [vmem:[#allocation2 + $0x70] sm:$0xff]
    %v748 = vld [vmem:[#allocation2 + $0x78] sm:$0xff]
    %v749 = vld [vmem:[#allocation2 + $0x80] sm:$0xff]
    %v750 = vld [vmem:[#allocation2 + $0x88] sm:$0xff]
    %v751 = vld [vmem:[#allocation2 + $0x90] sm:$0xff]
    %v752 = vld [vmem:[#allocation2 + $0x98] sm:$0xff]
    %v753 = vld [vmem:[#allocation2 + $0xa0] sm:$0xff]
    %v754 = vld [vmem:[#allocation2 + $0xa8] sm:$0xff]
    %v755 = vld [vmem:[#allocation2 + $0xb0] sm:$0xff]
    %v756 = vld [vmem:[#allocation2 + $0xb8] sm:$0xff]
    %v757 = vld [vmem:[#allocation2 + $0xc0] sm:$0xff]
    %v758 = vld [vmem:[#allocation2 + $0xc8] sm:$0xff]
    %v759 = vld [vmem:[#allocation2 + $0xd0] sm:$0xff]
    %v760 = vld [vmem:[#allocation2 + $0xd8] sm:$0xff]
    %v761 = vld [vmem:[#allocation2 + $0xe0] sm:$0xff]
    %v762 = vld [vmem:[#allocation2 + $0xe8] sm:$0xff]
    %v763 = vld [vmem:[#allocation2 + $0xf0] sm:$0xff]
    %v764 = vld [vmem:[#allocation2 + $0xf8] sm:$0xff]
    %v797 = vunpack.c.l.b16 %v733
    %v798 = vunpack.c.h.b16 %v733
    %v799 = vunpack.c.l.b16 %v734
    %v800 = vunpack.c.h.b16 %v734
    %v801 = vunpack.c.l.b16 %v735
    %v802 = vunpack.c.h.b16 %v735
    %v803 = vunpack.c.l.b16 %v736
    %v804 = vunpack.c.h.b16 %v736
    %v805 = vunpack.c.l.b16 %v737
    %v806 = vunpack.c.h.b16 %v737
    %v807 = vunpack.c.l.b16 %v738
    %v808 = vunpack.c.h.b16 %v738
    %v809 = vunpack.c.l.b16 %v739
    %v810 = vunpack.c.h.b16 %v739
    %v811 = vunpack.c.l.b16 %v740
    %v812 = vunpack.c.h.b16 %v740
    %v813 = vunpack.c.l.b16 %v741
    %v814 = vunpack.c.h.b16 %v741
    %v815 = vunpack.c.l.b16 %v742
    %v816 = vunpack.c.h.b16 %v742
    %v817 = vunpack.c.l.b16 %v743
    %v818 = vunpack.c.h.b16 %v743
    %v819 = vunpack.c.l.b16 %v744
    %v820 = vunpack.c.h.b16 %v744
    %v821 = vunpack.c.l.b16 %v745
    %v822 = vunpack.c.h.b16 %v745
    %v823 = vunpack.c.l.b16 %v746
    %v824 = vunpack.c.h.b16 %v746
    %v825 = vunpack.c.l.b16 %v747
    %v826 = vunpack.c.h.b16 %v747
    %v827 = vunpack.c.l.b16 %v748
    %v828 = vunpack.c.h.b16 %v748
    %v829 = vunpack.c.l.b16 %v749
    %v830 = vunpack.c.h.b16 %v749
    %v831 = vunpack.c.l.b16 %v750
    %v832 = vunpack.c.h.b16 %v750
    %v833 = vunpack.c.l.b16 %v751
    %v834 = vunpack.c.h.b16 %v751
    %v835 = vunpack.c.l.b16 %v752
    %v836 = vunpack.c.h.b16 %v752
    %v837 = vunpack.c.l.b16 %v753
    %v838 = vunpack.c.h.b16 %v753
    %v839 = vunpack.c.l.b16 %v754
    %v840 = vunpack.c.h.b16 %v754
    %v841 = vunpack.c.l.b16 %v755
    %v842 = vunpack.c.h.b16 %v755
    %v843 = vunpack.c.l.b16 %v756
    %v844 = vunpack.c.h.b16 %v756
    %v845 = vunpack.c.l.b16 %v757
    %v846 = vunpack.c.h.b16 %v757
    %v847 = vunpack.c.l.b16 %v758
    %v848 = vunpack.c.h.b16 %v758
    %v849 = vunpack.c.l.b16 %v759
    %v850 = vunpack.c.h.b16 %v759
    %v851 = vunpack.c.l.b16 %v760
    %v852 = vunpack.c.h.b16 %v760
    %v853 = vunpack.c.l.b16 %v761
    %v854 = vunpack.c.h.b16 %v761
    %v855 = vunpack.c.l.b16 %v762
    %v856 = vunpack.c.h.b16 %v762
    %v857 = vunpack.c.l.b16 %v763
    %v858 = vunpack.c.h.b16 %v763
    %v859 = vunpack.c.l.b16 %v764
    %v860 = vunpack.c.h.b16 %v764
    %v861 = vpack.c.b16 %v801, %v797
    %v862 = vpack.c.b16 %v802, %v798
    %v863 = vpack.c.b16 %v803, %v799
    %v864 = vpack.c.b16 %v804, %v800
    %v865 = vpack.c.b16 %v809, %v805
    %v866 = vpack.c.b16 %v810, %v806
    %v867 = vpack.c.b16 %v811, %v807
    %v868 = vpack.c.b16 %v812, %v808
    %v869 = vpack.c.b16 %v817, %v813
    %v870 = vpack.c.b16 %v818, %v814
    %v871 = vpack.c.b16 %v819, %v815
    %v872 = vpack.c.b16 %v820, %v816
    %v873 = vpack.c.b16 %v825, %v821
    %v874 = vpack.c.b16 %v826, %v822
    %v875 = vpack.c.b16 %v827, %v823
    %v876 = vpack.c.b16 %v828, %v824
    %v877 = vpack.c.b16 %v833, %v829
    %v878 = vpack.c.b16 %v834, %v830
    %v879 = vpack.c.b16 %v835, %v831
    %v880 = vpack.c.b16 %v836, %v832
    %v881 = vpack.c.b16 %v841, %v837
    %v882 = vpack.c.b16 %v842, %v838
    %v883 = vpack.c.b16 %v843, %v839
    %v884 = vpack.c.b16 %v844, %v840
    %v885 = vpack.c.b16 %v849, %v845
    %v886 = vpack.c.b16 %v850, %v846
    %v887 = vpack.c.b16 %v851, %v847
    %v888 = vpack.c.b16 %v852, %v848
    %v889 = vpack.c.b16 %v857, %v853
    %v890 = vpack.c.b16 %v858, %v854
    %v891 = vpack.c.b16 %v859, %v855
    %v892 = vpack.c.b16 %v860, %v856
    %925 = vmatprep.subr.bf16.mxu0 %v890
    %926 = vmatpush1.bf16.msra.mxu0 %v889
    %927 = vmatprep.subr.bf16.mxu0 %v886
    %928 = vmatpush1.bf16.msra.mxu0 %v885
    %929 = vmatprep.subr.bf16.mxu0 %v882
    %930 = vmatpush1.bf16.msra.mxu0 %v881
    %931 = vmatprep.subr.bf16.mxu0 %v878
    %932 = vmatpush1.bf16.msra.mxu0 %v877
    %933 = vmatprep.subr.bf16.mxu0 %v874
    %934 = vmatpush1.bf16.msra.mxu0 %v873
    %935 = vmatprep.subr.bf16.mxu0 %v870
    %936 = vmatpush1.bf16.msra.mxu0 %v869
    %937 = vmatprep.subr.bf16.mxu0 %v866
    %938 = vmatpush1.bf16.msra.mxu0 %v865
    %939 = vmatprep.subr.bf16.mxu0 %v862
    %940 = vmatpush1.bf16.msra.mxu0 %v861
    %941 = vmatprep.subr.bf16.mxu0 0
    %942 = vmatpush2.bf16.msra.mxu0 0
    %943 = vmatprep.subr.bf16.mxu0 0
    %944 = vmatpush2.bf16.msra.mxu0 0
    %945 = vmatprep.subr.bf16.mxu0 0
    %946 = vmatpush2.bf16.msra.mxu0 0
    %947 = vmatprep.subr.bf16.mxu0 0
    %948 = vmatpush2.bf16.msra.mxu0 0
    %949 = vmatprep.subr.bf16.mxu0 0
    %950 = vmatpush2.bf16.msra.mxu0 0
    %951 = vmatprep.subr.bf16.mxu0 0
    %952 = vmatpush2.bf16.msra.mxu0 0
    %953 = vmatprep.subr.bf16.mxu0 0
    %954 = vmatpush2.bf16.msra.mxu0 0
    %955 = vmatprep.subr.bf16.mxu0 0
    %956 = vmatpush2.bf16.msra.mxu0 0
    %957 = vmatprep.mubr.bf16.mxu0 0
    %958 = vmatmul.mubr.bf16.gmra.mxu0 %v732
    %v959 = vpop.f32.mrf.mxu0
    %v960 = vadd.f32 0.0, %v959
    %v961 = vpop.f32.mrf.mxu0
    %v962 = vadd.f32 0.0, %v961
    %v963 = vpop.f32.mrf.mxu0
    %v964 = vpop.f32.mrf.mxu0
    %965 = vdwg.mxu0
    %966 = vmatprep.subr.bf16.mxu0 %v892
    %967 = vmatpush1.bf16.msra.mxu0 %v891
    %968 = vmatprep.subr.bf16.mxu0 %v888
    %969 = vmatpush1.bf16.msra.mxu0 %v887
    %970 = vmatprep.subr.bf16.mxu0 %v884
    %971 = vmatpush1.bf16.msra.mxu0 %v883
    %972 = vmatprep.subr.bf16.mxu0 %v880
    %973 = vmatpush1.bf16.msra.mxu0 %v879
    %974 = vmatprep.subr.bf16.mxu0 %v876
    %975 = vmatpush1.bf16.msra.mxu0 %v875
    %976 = vmatprep.subr.bf16.mxu0 %v872
    %977 = vmatpush1.bf16.msra.mxu0 %v871
    %978 = vmatprep.subr.bf16.mxu0 %v868
    %979 = vmatpush1.bf16.msra.mxu0 %v867
    %980 = vmatprep.subr.bf16.mxu0 %v864
    %981 = vmatpush1.bf16.msra.mxu0 %v863
    %982 = vmatprep.subr.bf16.mxu0 0
    %983 = vmatpush2.bf16.msra.mxu0 0
    %984 = vmatprep.subr.bf16.mxu0 0
    %985 = vmatpush2.bf16.msra.mxu0 0
    %986 = vmatprep.subr.bf16.mxu0 0
    %987 = vmatpush2.bf16.msra.mxu0 0
    %988 = vmatprep.subr.bf16.mxu0 0
    %989 = vmatpush2.bf16.msra.mxu0 0
    %990 = vmatprep.subr.bf16.mxu0 0
    %991 = vmatpush2.bf16.msra.mxu0 0
    %992 = vmatprep.subr.bf16.mxu0 0
    %993 = vmatpush2.bf16.msra.mxu0 0
    %994 = vmatprep.subr.bf16.mxu0 0
    %995 = vmatpush2.bf16.msra.mxu0 0
    %996 = vmatprep.subr.bf16.mxu0 0
    %997 = vmatpush2.bf16.msra.mxu0 0
    %998 = vmatprep.mubr.bf16.mxu0 0
    %999 = vmatmul.mubr.bf16.gmra.mxu0 %v732
    %v1000 = vpop.f32.mrf.mxu0
    %v1001 = vadd.f32 0.0, %v1000
    %v1002 = vpop.f32.mrf.mxu0
    %v1003 = vadd.f32 0.0, %v1002
    %v1004 = vpop.f32.mrf.mxu0
    %v1005 = vpop.f32.mrf.mxu0
    %1006 = vdwg.mxu0
    %v1007 = vadd.f32 %v121, %v960
    %v1008 = vadd.f32 %v125, %v962
    %v1009 = vadd.f32 %v129, %v1001
    %v1010 = vadd.f32 %v133, %v1003
    %v1011 = vld [vmem:[#allocation3] sm:$0xff]
    %v1012 = vld [vmem:[#allocation3 + $0x8] sm:$0xff]
    %v1013 = vld [vmem:[#allocation3 + $0x10] sm:$0xff]
    %v1014 = vld [vmem:[#allocation3 + $0x18] sm:$0xff]
    %v1015 = vld [vmem:[#allocation3 + $0x20] sm:$0xff]
    %v1016 = vld [vmem:[#allocation3 + $0x28] sm:$0xff]
    %v1017 = vld [vmem:[#allocation3 + $0x30] sm:$0xff]
    %v1018 = vld [vmem:[#allocation3 + $0x38] sm:$0xff]
    %v1019 = vld [vmem:[#allocation3 + $0x40] sm:$0xff]
    %v1020 = vld [vmem:[#allocation3 + $0x48] sm:$0xff]
    %v1021 = vld [vmem:[#allocation3 + $0x50] sm:$0xff]
    %v1022 = vld [vmem:[#allocation3 + $0x58] sm:$0xff]
    %v1023 = vld [vmem:[#allocation3 + $0x60] sm:$0xff]
    %v1024 = vld [vmem:[#allocation3 + $0x68] sm:$0xff]
    %v1025 = vld [vmem:[#allocation3 + $0x70] sm:$0xff]
    %v1026 = vld [vmem:[#allocation3 + $0x78] sm:$0xff]
    %v1027 = vld [vmem:[#allocation3 + $0x80] sm:$0xff]
    %v1028 = vld [vmem:[#allocation3 + $0x88] sm:$0xff]
    %v1029 = vld [vmem:[#allocation3 + $0x90] sm:$0xff]
    %v1030 = vld [vmem:[#allocation3 + $0x98] sm:$0xff]
    %v1031 = vld [vmem:[#allocation3 + $0xa0] sm:$0xff]
    %v1032 = vld [vmem:[#allocation3 + $0xa8] sm:$0xff]
    %v1033 = vld [vmem:[#allocation3 + $0xb0] sm:$0xff]
    %v1034 = vld [vmem:[#allocation3 + $0xb8] sm:$0xff]
    %v1035 = vld [vmem:[#allocation3 + $0xc0] sm:$0xff]
    %v1036 = vld [vmem:[#allocation3 + $0xc8] sm:$0xff]
    %v1037 = vld [vmem:[#allocation3 + $0xd0] sm:$0xff]
    %v1038 = vld [vmem:[#allocation3 + $0xd8] sm:$0xff]
    %v1039 = vld [vmem:[#allocation3 + $0xe0] sm:$0xff]
    %v1040 = vld [vmem:[#allocation3 + $0xe8] sm:$0xff]
    %v1041 = vld [vmem:[#allocation3 + $0xf0] sm:$0xff]
    %v1042 = vld [vmem:[#allocation3 + $0xf8] sm:$0xff]
    %v1075 = vunpack.c.l.b16 %v1011
    %v1076 = vunpack.c.h.b16 %v1011
    %v1077 = vunpack.c.l.b16 %v1012
    %v1078 = vunpack.c.h.b16 %v1012
    %v1079 = vunpack.c.l.b16 %v1013
    %v1080 = vunpack.c.h.b16 %v1013
    %v1081 = vunpack.c.l.b16 %v1014
    %v1082 = vunpack.c.h.b16 %v1014
    %v1083 = vunpack.c.l.b16 %v1015
    %v1084 = vunpack.c.h.b16 %v1015
    %v1085 = vunpack.c.l.b16 %v1016
    %v1086 = vunpack.c.h.b16 %v1016
    %v1087 = vunpack.c.l.b16 %v1017
    %v1088 = vunpack.c.h.b16 %v1017
    %v1089 = vunpack.c.l.b16 %v1018
    %v1090 = vunpack.c.h.b16 %v1018
    %v1091 = vunpack.c.l.b16 %v1019
    %v1092 = vunpack.c.h.b16 %v1019
    %v1093 = vunpack.c.l.b16 %v1020
    %v1094 = vunpack.c.h.b16 %v1020
    %v1095 = vunpack.c.l.b16 %v1021
    %v1096 = vunpack.c.h.b16 %v1021
    %v1097 = vunpack.c.l.b16 %v1022
    %v1098 = vunpack.c.h.b16 %v1022
    %v1099 = vunpack.c.l.b16 %v1023
    %v1100 = vunpack.c.h.b16 %v1023
    %v1101 = vunpack.c.l.b16 %v1024
    %v1102 = vunpack.c.h.b16 %v1024
    %v1103 = vunpack.c.l.b16 %v1025
    %v1104 = vunpack.c.h.b16 %v1025
    %v1105 = vunpack.c.l.b16 %v1026
    %v1106 = vunpack.c.h.b16 %v1026
    %v1107 = vunpack.c.l.b16 %v1027
    %v1108 = vunpack.c.h.b16 %v1027
    %v1109 = vunpack.c.l.b16 %v1028
    %v1110 = vunpack.c.h.b16 %v1028
    %v1111 = vunpack.c.l.b16 %v1029
    %v1112 = vunpack.c.h.b16 %v1029
    %v1113 = vunpack.c.l.b16 %v1030
    %v1114 = vunpack.c.h.b16 %v1030
    %v1115 = vunpack.c.l.b16 %v1031
    %v1116 = vunpack.c.h.b16 %v1031
    %v1117 = vunpack.c.l.b16 %v1032
    %v1118 = vunpack.c.h.b16 %v1032
    %v1119 = vunpack.c.l.b16 %v1033
    %v1120 = vunpack.c.h.b16 %v1033
    %v1121 = vunpack.c.l.b16 %v1034
    %v1122 = vunpack.c.h.b16 %v1034
    %v1123 = vunpack.c.l.b16 %v1035
    %v1124 = vunpack.c.h.b16 %v1035
    %v1125 = vunpack.c.l.b16 %v1036
    %v1126 = vunpack.c.h.b16 %v1036
    %v1127 = vunpack.c.l.b16 %v1037
    %v1128 = vunpack.c.h.b16 %v1037
    %v1129 = vunpack.c.l.b16 %v1038
    %v1130 = vunpack.c.h.b16 %v1038
    %v1131 = vunpack.c.l.b16 %v1039
    %v1132 = vunpack.c.h.b16 %v1039
    %v1133 = vunpack.c.l.b16 %v1040
    %v1134 = vunpack.c.h.b16 %v1040
    %v1135 = vunpack.c.l.b16 %v1041
    %v1136 = vunpack.c.h.b16 %v1041
    %v1137 = vunpack.c.l.b16 %v1042
    %v1138 = vunpack.c.h.b16 %v1042
    %v1139 = vpack.c.b16 %v1079, %v1075
    %v1140 = vpack.c.b16 %v1080, %v1076
    %v1141 = vpack.c.b16 %v1081, %v1077
    %v1142 = vpack.c.b16 %v1082, %v1078
    %v1143 = vpack.c.b16 %v1087, %v1083
    %v1144 = vpack.c.b16 %v1088, %v1084
    %v1145 = vpack.c.b16 %v1089, %v1085
    %v1146 = vpack.c.b16 %v1090, %v1086
    %v1147 = vpack.c.b16 %v1095, %v1091
    %v1148 = vpack.c.b16 %v1096, %v1092
    %v1149 = vpack.c.b16 %v1097, %v1093
    %v1150 = vpack.c.b16 %v1098, %v1094
    %v1151 = vpack.c.b16 %v1103, %v1099
    %v1152 = vpack.c.b16 %v1104, %v1100
    %v1153 = vpack.c.b16 %v1105, %v1101
    %v1154 = vpack.c.b16 %v1106, %v1102
    %v1155 = vpack.c.b16 %v1111, %v1107
    %v1156 = vpack.c.b16 %v1112, %v1108
    %v1157 = vpack.c.b16 %v1113, %v1109
    %v1158 = vpack.c.b16 %v1114, %v1110
    %v1159 = vpack.c.b16 %v1119, %v1115
    %v1160 = vpack.c.b16 %v1120, %v1116
    %v1161 = vpack.c.b16 %v1121, %v1117
    %v1162 = vpack.c.b16 %v1122, %v1118
    %v1163 = vpack.c.b16 %v1127, %v1123
    %v1164 = vpack.c.b16 %v1128, %v1124
    %v1165 = vpack.c.b16 %v1129, %v1125
    %v1166 = vpack.c.b16 %v1130, %v1126
    %v1167 = vpack.c.b16 %v1135, %v1131
    %v1168 = vpack.c.b16 %v1136, %v1132
    %v1169 = vpack.c.b16 %v1137, %v1133
    %v1170 = vpack.c.b16 %v1138, %v1134
    %1203 = vmatprep.subr.bf16.mxu0 %v1168
    %1204 = vmatpush1.bf16.msra.mxu0 %v1167
    %1205 = vmatprep.subr.bf16.mxu0 %v1164
    %1206 = vmatpush1.bf16.msra.mxu0 %v1163
    %1207 = vmatprep.subr.bf16.mxu0 %v1160
    %1208 = vmatpush1.bf16.msra.mxu0 %v1159
    %1209 = vmatprep.subr.bf16.mxu0 %v1156
    %1210 = vmatpush1.bf16.msra.mxu0 %v1155
    %1211 = vmatprep.subr.bf16.mxu0 %v1152
    %1212 = vmatpush1.bf16.msra.mxu0 %v1151
    %1213 = vmatprep.subr.bf16.mxu0 %v1148
    %1214 = vmatpush1.bf16.msra.mxu0 %v1147
    %1215 = vmatprep.subr.bf16.mxu0 %v1144
    %1216 = vmatpush1.bf16.msra.mxu0 %v1143
    %1217 = vmatprep.subr.bf16.mxu0 %v1140
    %1218 = vmatpush1.bf16.msra.mxu0 %v1139
    %1219 = vmatprep.subr.bf16.mxu0 0
    %1220 = vmatpush2.bf16.msra.mxu0 0
    %1221 = vmatprep.subr.bf16.mxu0 0
    %1222 = vmatpush2.bf16.msra.mxu0 0
    %1223 = vmatprep.subr.bf16.mxu0 0
    %1224 = vmatpush2.bf16.msra.mxu0 0
    %1225 = vmatprep.subr.bf16.mxu0 0
    %1226 = vmatpush2.bf16.msra.mxu0 0
    %1227 = vmatprep.subr.bf16.mxu0 0
    %1228 = vmatpush2.bf16.msra.mxu0 0
    %1229 = vmatprep.subr.bf16.mxu0 0
    %1230 = vmatpush2.bf16.msra.mxu0 0
    %1231 = vmatprep.subr.bf16.mxu0 0
    %1232 = vmatpush2.bf16.msra.mxu0 0
    %1233 = vmatprep.subr.bf16.mxu0 0
    %1234 = vmatpush2.bf16.msra.mxu0 0
    %1235 = vmatprep.mubr.bf16.mxu0 0
    %1236 = vmatmul.mubr.bf16.gmra.mxu0 %v729
    %v1237 = vpop.f32.mrf.mxu0
    %v1238 = vadd.f32 0.0, %v1237
    %v1239 = vpop.f32.mrf.mxu0
    %v1240 = vadd.f32 0.0, %v1239
    %v1241 = vpop.f32.mrf.mxu0
    %v1242 = vpop.f32.mrf.mxu0
    %1243 = vdwg.mxu0
    %1244 = vmatprep.subr.bf16.mxu0 %v1170
    %1245 = vmatpush1.bf16.msra.mxu0 %v1169
    %1246 = vmatprep.subr.bf16.mxu0 %v1166
    %1247 = vmatpush1.bf16.msra.mxu0 %v1165
    %1248 = vmatprep.subr.bf16.mxu0 %v1162
    %1249 = vmatpush1.bf16.msra.mxu0 %v1161
    %1250 = vmatprep.subr.bf16.mxu0 %v1158
    %1251 = vmatpush1.bf16.msra.mxu0 %v1157
    %1252 = vmatprep.subr.bf16.mxu0 %v1154
    %1253 = vmatpush1.bf16.msra.mxu0 %v1153
    %1254 = vmatprep.subr.bf16.mxu0 %v1150
    %1255 = vmatpush1.bf16.msra.mxu0 %v1149
    %1256 = vmatprep.subr.bf16.mxu0 %v1146
    %1257 = vmatpush1.bf16.msra.mxu0 %v1145
    %1258 = vmatprep.subr.bf16.mxu0 %v1142
    %1259 = vmatpush1.bf16.msra.mxu0 %v1141
    %1260 = vmatprep.subr.bf16.mxu0 0
    %1261 = vmatpush2.bf16.msra.mxu0 0
    %1262 = vmatprep.subr.bf16.mxu0 0
    %1263 = vmatpush2.bf16.msra.mxu0 0
    %1264 = vmatprep.subr.bf16.mxu0 0
    %1265 = vmatpush2.bf16.msra.mxu0 0
    %1266 = vmatprep.subr.bf16.mxu0 0
    %1267 = vmatpush2.bf16.msra.mxu0 0
    %1268 = vmatprep.subr.bf16.mxu0 0
    %1269 = vmatpush2.bf16.msra.mxu0 0
    %1270 = vmatprep.subr.bf16.mxu0 0
    %1271 = vmatpush2.bf16.msra.mxu0 0
    %1272 = vmatprep.subr.bf16.mxu0 0
    %1273 = vmatpush2.bf16.msra.mxu0 0
    %1274 = vmatprep.subr.bf16.mxu0 0
    %1275 = vmatpush2.bf16.msra.mxu0 0
    %1276 = vmatprep.mubr.bf16.mxu0 0
    %1277 = vmatmul.mubr.bf16.gmra.mxu0 %v729
    %v1278 = vpop.f32.mrf.mxu0
    %v1279 = vadd.f32 0.0, %v1278
    %v1280 = vpop.f32.mrf.mxu0
    %v1281 = vadd.f32 0.0, %v1280
    %v1282 = vpop.f32.mrf.mxu0
    %v1283 = vpop.f32.mrf.mxu0
    %1284 = vdwg.mxu0
    %v1285 = vadd.f32 %v1007, %v1238
    %v1286 = vadd.f32 %v1008, %v1240
    %v1287 = vadd.f32 %v1009, %v1279
    %v1288 = vadd.f32 %v1010, %v1281
    %v1289 = vxor.u32 %v1285, 2147483648
    %v1290 = vxor.u32 %v1286, 2147483648
    %v1291 = vxor.u32 %v1287, 2147483648
    %v1292 = vxor.u32 %v1288, 2147483648
    %v1293 = vmul.f32 %v1289, 1.442695
    %v1294 = vpow.pop %v1293
    %v1295 = vmul.f32 %v1290, 1.442695
    %v1296 = vpow.pop %v1295
    %v1297 = vmul.f32 %v1291, 1.442695
    %v1298 = vpow.pop %v1297
    %v1299 = vmul.f32 %v1292, 1.442695
    %v1300 = vpow.pop %v1299
    %v1301 = vadd.f32 %v1294, 1.0
    %v1302 = vadd.f32 %v1296, 1.0
    %v1303 = vadd.f32 %v1298, 1.0
    %v1304 = vadd.f32 %v1300, 1.0
    %v1305 = vrcp.pop %v1301
    %v1306 = vmul.f32 1.0, %v1305
    %v1307 = vrcp.pop %v1302
    %v1308 = vmul.f32 1.0, %v1307
    %v1309 = vrcp.pop %v1303
    %v1310 = vmul.f32 1.0, %v1309
    %v1311 = vrcp.pop %v1304
    %v1312 = vmul.f32 1.0, %v1311
    %v1313 = vmul.f32 %v1310, 2.0
    %v1314 = vsub.f32 %v1313, 1.0
    %v1315 = vmul.f32 %v1308, %v726
    %v1316 = vmul.f32 %v1306, %v1314
    %v1317 = vadd.f32 %v1315, %v1316
    %v1318 = vtanh.pop %v1317
    %v1319 = vmul.f32 %v1312, %v1318
    %v1320 = vpack.c.bf16 %v1319, %v1319
    %s1321 = scalar_lea.vmem [#allocation11], 4
    %1322 = vst [vmem:[%s1321] sm:$0xf] %v1320
    %s1323 = scalar_lea.vmem [#allocation8], 8
    %v1324 = vld [vmem:[%s1323] sm:$0xf]
    %v1325 = vld [vmem:[#allocation2] sm:$0xff]
    %v1326 = vld [vmem:[#allocation2 + $0x8] sm:$0xff]
    %v1327 = vld [vmem:[#allocation2 + $0x10] sm:$0xff]
    %v1328 = vld [vmem:[#allocation2 + $0x18] sm:$0xff]
    %v1329 = vld [vmem:[#allocation2 + $0x20] sm:$0xff]
    %v1330 = vld [vmem:[#allocation2 + $0x28] sm:$0xff]
    %v1331 = vld [vmem:[#allocation2 + $0x30] sm:$0xff]
    %v1332 = vld [vmem:[#allocation2 + $0x38] sm:$0xff]
    %v1333 = vld [vmem:[#allocation2 + $0x40] sm:$0xff]
    %v1334 = vld [vmem:[#allocation2 + $0x48] sm:$0xff]
    %v1335 = vld [vmem:[#allocation2 + $0x50] sm:$0xff]
    %v1336 = vld [vmem:[#allocation2 + $0x58] sm:$0xff]
    %v1337 = vld [vmem:[#allocation2 + $0x60] sm:$0xff]
    %v1338 = vld [vmem:[#allocation2 + $0x68] sm:$0xff]
    %v1339 = vld [vmem:[#allocation2 + $0x70] sm:$0xff]
    %v1340 = vld [vmem:[#allocation2 + $0x78] sm:$0xff]
    %v1341 = vld [vmem:[#allocation2 + $0x80] sm:$0xff]
    %v1342 = vld [vmem:[#allocation2 + $0x88] sm:$0xff]
    %v1343 = vld [vmem:[#allocation2 + $0x90] sm:$0xff]
    %v1344 = vld [vmem:[#allocation2 + $0x98] sm:$0xff]
    %v1345 = vld [vmem:[#allocation2 + $0xa0] sm:$0xff]
    %v1346 = vld [vmem:[#allocation2 + $0xa8] sm:$0xff]
    %v1347 = vld [vmem:[#allocation2 + $0xb0] sm:$0xff]
    %v1348 = vld [vmem:[#allocation2 + $0xb8] sm:$0xff]
    %v1349 = vld [vmem:[#allocation2 + $0xc0] sm:$0xff]
    %v1350 = vld [vmem:[#allocation2 + $0xc8] sm:$0xff]
    %v1351 = vld [vmem:[#allocation2 + $0xd0] sm:$0xff]
    %v1352 = vld [vmem:[#allocation2 + $0xd8] sm:$0xff]
    %v1353 = vld [vmem:[#allocation2 + $0xe0] sm:$0xff]
    %v1354 = vld [vmem:[#allocation2 + $0xe8] sm:$0xff]
    %v1355 = vld [vmem:[#allocation2 + $0xf0] sm:$0xff]
    %v1356 = vld [vmem:[#allocation2 + $0xf8] sm:$0xff]
    %v1389 = vunpack.c.l.b16 %v1325
    %v1390 = vunpack.c.h.b16 %v1325
    %v1391 = vunpack.c.l.b16 %v1326
    %v1392 = vunpack.c.h.b16 %v1326
    %v1393 = vunpack.c.l.b16 %v1327
    %v1394 = vunpack.c.h.b16 %v1327
    %v1395 = vunpack.c.l.b16 %v1328
    %v1396 = vunpack.c.h.b16 %v1328
    %v1397 = vunpack.c.l.b16 %v1329
    %v1398 = vunpack.c.h.b16 %v1329
    %v1399 = vunpack.c.l.b16 %v1330
    %v1400 = vunpack.c.h.b16 %v1330
    %v1401 = vunpack.c.l.b16 %v1331
    %v1402 = vunpack.c.h.b16 %v1331
    %v1403 = vunpack.c.l.b16 %v1332
    %v1404 = vunpack.c.h.b16 %v1332
    %v1405 = vunpack.c.l.b16 %v1333
    %v1406 = vunpack.c.h.b16 %v1333
    %v1407 = vunpack.c.l.b16 %v1334
    %v1408 = vunpack.c.h.b16 %v1334
    %v1409 = vunpack.c.l.b16 %v1335
    %v1410 = vunpack.c.h.b16 %v1335
    %v1411 = vunpack.c.l.b16 %v1336
    %v1412 = vunpack.c.h.b16 %v1336
    %v1413 = vunpack.c.l.b16 %v1337
    %v1414 = vunpack.c.h.b16 %v1337
    %v1415 = vunpack.c.l.b16 %v1338
    %v1416 = vunpack.c.h.b16 %v1338
    %v1417 = vunpack.c.l.b16 %v1339
    %v1418 = vunpack.c.h.b16 %v1339
    %v1419 = vunpack.c.l.b16 %v1340
    %v1420 = vunpack.c.h.b16 %v1340
    %v1421 = vunpack.c.l.b16 %v1341
    %v1422 = vunpack.c.h.b16 %v1341
    %v1423 = vunpack.c.l.b16 %v1342
    %v1424 = vunpack.c.h.b16 %v1342
    %v1425 = vunpack.c.l.b16 %v1343
    %v1426 = vunpack.c.h.b16 %v1343
    %v1427 = vunpack.c.l.b16 %v1344
    %v1428 = vunpack.c.h.b16 %v1344
    %v1429 = vunpack.c.l.b16 %v1345
    %v1430 = vunpack.c.h.b16 %v1345
    %v1431 = vunpack.c.l.b16 %v1346
    %v1432 = vunpack.c.h.b16 %v1346
    %v1433 = vunpack.c.l.b16 %v1347
    %v1434 = vunpack.c.h.b16 %v1347
    %v1435 = vunpack.c.l.b16 %v1348
    %v1436 = vunpack.c.h.b16 %v1348
    %v1437 = vunpack.c.l.b16 %v1349
    %v1438 = vunpack.c.h.b16 %v1349
    %v1439 = vunpack.c.l.b16 %v1350
    %v1440 = vunpack.c.h.b16 %v1350
    %v1441 = vunpack.c.l.b16 %v1351
    %v1442 = vunpack.c.h.b16 %v1351
    %v1443 = vunpack.c.l.b16 %v1352
    %v1444 = vunpack.c.h.b16 %v1352
    %v1445 = vunpack.c.l.b16 %v1353
    %v1446 = vunpack.c.h.b16 %v1353
    %v1447 = vunpack.c.l.b16 %v1354
    %v1448 = vunpack.c.h.b16 %v1354
    %v1449 = vunpack.c.l.b16 %v1355
    %v1450 = vunpack.c.h.b16 %v1355
    %v1451 = vunpack.c.l.b16 %v1356
    %v1452 = vunpack.c.h.b16 %v1356
    %v1453 = vpack.c.b16 %v1393, %v1389
    %v1454 = vpack.c.b16 %v1394, %v1390
    %v1455 = vpack.c.b16 %v1395, %v1391
    %v1456 = vpack.c.b16 %v1396, %v1392
    %v1457 = vpack.c.b16 %v1401, %v1397
    %v1458 = vpack.c.b16 %v1402, %v1398
    %v1459 = vpack.c.b16 %v1403, %v1399
    %v1460 = vpack.c.b16 %v1404, %v1400
    %v1461 = vpack.c.b16 %v1409, %v1405
    %v1462 = vpack.c.b16 %v1410, %v1406
    %v1463 = vpack.c.b16 %v1411, %v1407
    %v1464 = vpack.c.b16 %v1412, %v1408
    %v1465 = vpack.c.b16 %v1417, %v1413
    %v1466 = vpack.c.b16 %v1418, %v1414
    %v1467 = vpack.c.b16 %v1419, %v1415
    %v1468 = vpack.c.b16 %v1420, %v1416
    %v1469 = vpack.c.b16 %v1425, %v1421
    %v1470 = vpack.c.b16 %v1426, %v1422
    %v1471 = vpack.c.b16 %v1427, %v1423
    %v1472 = vpack.c.b16 %v1428, %v1424
    %v1473 = vpack.c.b16 %v1433, %v1429
    %v1474 = vpack.c.b16 %v1434, %v1430
    %v1475 = vpack.c.b16 %v1435, %v1431
    %v1476 = vpack.c.b16 %v1436, %v1432
    %v1477 = vpack.c.b16 %v1441, %v1437
    %v1478 = vpack.c.b16 %v1442, %v1438
    %v1479 = vpack.c.b16 %v1443, %v1439
    %v1480 = vpack.c.b16 %v1444, %v1440
    %v1481 = vpack.c.b16 %v1449, %v1445
    %v1482 = vpack.c.b16 %v1450, %v1446
    %v1483 = vpack.c.b16 %v1451, %v1447
    %v1484 = vpack.c.b16 %v1452, %v1448
    %1517 = vmatprep.subr.bf16.mxu0 %v1482
    %1518 = vmatpush1.bf16.msra.mxu0 %v1481
    %1519 = vmatprep.subr.bf16.mxu0 %v1478
    %1520 = vmatpush1.bf16.msra.mxu0 %v1477
    %1521 = vmatprep.subr.bf16.mxu0 %v1474
    %1522 = vmatpush1.bf16.msra.mxu0 %v1473
    %1523 = vmatprep.subr.bf16.mxu0 %v1470
    %1524 = vmatpush1.bf16.msra.mxu0 %v1469
    %1525 = vmatprep.subr.bf16.mxu0 %v1466
    %1526 = vmatpush1.bf16.msra.mxu0 %v1465
    %1527 = vmatprep.subr.bf16.mxu0 %v1462
    %1528 = vmatpush1.bf16.msra.mxu0 %v1461
    %1529 = vmatprep.subr.bf16.mxu0 %v1458
    %1530 = vmatpush1.bf16.msra.mxu0 %v1457
    %1531 = vmatprep.subr.bf16.mxu0 %v1454
    %1532 = vmatpush1.bf16.msra.mxu0 %v1453
    %1533 = vmatprep.subr.bf16.mxu0 0
    %1534 = vmatpush2.bf16.msra.mxu0 0
    %1535 = vmatprep.subr.bf16.mxu0 0
    %1536 = vmatpush2.bf16.msra.mxu0 0
    %1537 = vmatprep.subr.bf16.mxu0 0
    %1538 = vmatpush2.bf16.msra.mxu0 0
    %1539 = vmatprep.subr.bf16.mxu0 0
    %1540 = vmatpush2.bf16.msra.mxu0 0
    %1541 = vmatprep.subr.bf16.mxu0 0
    %1542 = vmatpush2.bf16.msra.mxu0 0
    %1543 = vmatprep.subr.bf16.mxu0 0
    %1544 = vmatpush2.bf16.msra.mxu0 0
    %1545 = vmatprep.subr.bf16.mxu0 0
    %1546 = vmatpush2.bf16.msra.mxu0 0
    %1547 = vmatprep.subr.bf16.mxu0 0
    %1548 = vmatpush2.bf16.msra.mxu0 0
    %1549 = vmatprep.mubr.bf16.mxu0 0
    %1550 = vmatmul.mubr.bf16.gmra.mxu0 %v1324
    %v1551 = vpop.f32.mrf.mxu0
    %v1552 = vadd.f32 0.0, %v1551
    %v1553 = vpop.f32.mrf.mxu0
    %v1554 = vadd.f32 0.0, %v1553
    %v1555 = vpop.f32.mrf.mxu0
    %v1556 = vpop.f32.mrf.mxu0
    %1557 = vdwg.mxu0
    %1558 = vmatprep.subr.bf16.mxu0 %v1484
    %1559 = vmatpush1.bf16.msra.mxu0 %v1483
    %1560 = vmatprep.subr.bf16.mxu0 %v1480
    %1561 = vmatpush1.bf16.msra.mxu0 %v1479
    %1562 = vmatprep.subr.bf16.mxu0 %v1476
    %1563 = vmatpush1.bf16.msra.mxu0 %v1475
    %1564 = vmatprep.subr.bf16.mxu0 %v1472
    %1565 = vmatpush1.bf16.msra.mxu0 %v1471
    %1566 = vmatprep.subr.bf16.mxu0 %v1468
    %1567 = vmatpush1.bf16.msra.mxu0 %v1467
    %1568 = vmatprep.subr.bf16.mxu0 %v1464
    %1569 = vmatpush1.bf16.msra.mxu0 %v1463
    %1570 = vmatprep.subr.bf16.mxu0 %v1460
    %1571 = vmatpush1.bf16.msra.mxu0 %v1459
    %1572 = vmatprep.subr.bf16.mxu0 %v1456
    %1573 = vmatpush1.bf16.msra.mxu0 %v1455
    %1574 = vmatprep.subr.bf16.mxu0 0
    %1575 = vmatpush2.bf16.msra.mxu0 0
    %1576 = vmatprep.subr.bf16.mxu0 0
    %1577 = vmatpush2.bf16.msra.mxu0 0
    %1578 = vmatprep.subr.bf16.mxu0 0
    %1579 = vmatpush2.bf16.msra.mxu0 0
    %1580 = vmatprep.subr.bf16.mxu0 0
    %1581 = vmatpush2.bf16.msra.mxu0 0
    %1582 = vmatprep.subr.bf16.mxu0 0
    %1583 = vmatpush2.bf16.msra.mxu0 0
    %1584 = vmatprep.subr.bf16.mxu0 0
    %1585 = vmatpush2.bf16.msra.mxu0 0
    %1586 = vmatprep.subr.bf16.mxu0 0
    %1587 = vmatpush2.bf16.msra.mxu0 0
    %1588 = vmatprep.subr.bf16.mxu0 0
    %1589 = vmatpush2.bf16.msra.mxu0 0
    %1590 = vmatprep.mubr.bf16.mxu0 0
    %1591 = vmatmul.mubr.bf16.gmra.mxu0 %v1324
    %v1592 = vpop.f32.mrf.mxu0
    %v1593 = vadd.f32 0.0, %v1592
    %v1594 = vpop.f32.mrf.mxu0
    %v1595 = vadd.f32 0.0, %v1594
    %v1596 = vpop.f32.mrf.mxu0
    %v1597 = vpop.f32.mrf.mxu0
    %1598 = vdwg.mxu0
    %v1599 = vadd.f32 %v121, %v1552
    %v1600 = vadd.f32 %v125, %v1554
    %v1601 = vadd.f32 %v129, %v1593
    %v1602 = vadd.f32 %v133, %v1595
    %v1603 = vld [vmem:[#allocation3] sm:$0xff]
    %v1604 = vld [vmem:[#allocation3 + $0x8] sm:$0xff]
    %v1605 = vld [vmem:[#allocation3 + $0x10] sm:$0xff]
    %v1606 = vld [vmem:[#allocation3 + $0x18] sm:$0xff]
    %v1607 = vld [vmem:[#allocation3 + $0x20] sm:$0xff]
    %v1608 = vld [vmem:[#allocation3 + $0x28] sm:$0xff]
    %v1609 = vld [vmem:[#allocation3 + $0x30] sm:$0xff]
    %v1610 = vld [vmem:[#allocation3 + $0x38] sm:$0xff]
    %v1611 = vld [vmem:[#allocation3 + $0x40] sm:$0xff]
    %v1612 = vld [vmem:[#allocation3 + $0x48] sm:$0xff]
    %v1613 = vld [vmem:[#allocation3 + $0x50] sm:$0xff]
    %v1614 = vld [vmem:[#allocation3 + $0x58] sm:$0xff]
    %v1615 = vld [vmem:[#allocation3 + $0x60] sm:$0xff]
    %v1616 = vld [vmem:[#allocation3 + $0x68] sm:$0xff]
    %v1617 = vld [vmem:[#allocation3 + $0x70] sm:$0xff]
    %v1618 = vld [vmem:[#allocation3 + $0x78] sm:$0xff]
    %v1619 = vld [vmem:[#allocation3 + $0x80] sm:$0xff]
    %v1620 = vld [vmem:[#allocation3 + $0x88] sm:$0xff]
    %v1621 = vld [vmem:[#allocation3 + $0x90] sm:$0xff]
    %v1622 = vld [vmem:[#allocation3 + $0x98] sm:$0xff]
    %v1623 = vld [vmem:[#allocation3 + $0xa0] sm:$0xff]
    %v1624 = vld [vmem:[#allocation3 + $0xa8] sm:$0xff]
    %v1625 = vld [vmem:[#allocation3 + $0xb0] sm:$0xff]
    %v1626 = vld [vmem:[#allocation3 + $0xb8] sm:$0xff]
    %v1627 = vld [vmem:[#allocation3 + $0xc0] sm:$0xff]
    %v1628 = vld [vmem:[#allocation3 + $0xc8] sm:$0xff]
    %v1629 = vld [vmem:[#allocation3 + $0xd0] sm:$0xff]
    %v1630 = vld [vmem:[#allocation3 + $0xd8] sm:$0xff]
    %v1631 = vld [vmem:[#allocation3 + $0xe0] sm:$0xff]
    %v1632 = vld [vmem:[#allocation3 + $0xe8] sm:$0xff]
    %v1633 = vld [vmem:[#allocation3 + $0xf0] sm:$0xff]
    %v1634 = vld [vmem:[#allocation3 + $0xf8] sm:$0xff]
    %v1667 = vunpack.c.l.b16 %v1603
    %v1668 = vunpack.c.h.b16 %v1603
    %v1669 = vunpack.c.l.b16 %v1604
    %v1670 = vunpack.c.h.b16 %v1604
    %v1671 = vunpack.c.l.b16 %v1605
    %v1672 = vunpack.c.h.b16 %v1605
    %v1673 = vunpack.c.l.b16 %v1606
    %v1674 = vunpack.c.h.b16 %v1606
    %v1675 = vunpack.c.l.b16 %v1607
    %v1676 = vunpack.c.h.b16 %v1607
    %v1677 = vunpack.c.l.b16 %v1608
    %v1678 = vunpack.c.h.b16 %v1608
    %v1679 = vunpack.c.l.b16 %v1609
    %v1680 = vunpack.c.h.b16 %v1609
    %v1681 = vunpack.c.l.b16 %v1610
    %v1682 = vunpack.c.h.b16 %v1610
    %v1683 = vunpack.c.l.b16 %v1611
    %v1684 = vunpack.c.h.b16 %v1611
    %v1685 = vunpack.c.l.b16 %v1612
    %v1686 = vunpack.c.h.b16 %v1612
    %v1687 = vunpack.c.l.b16 %v1613
    %v1688 = vunpack.c.h.b16 %v1613
    %v1689 = vunpack.c.l.b16 %v1614
    %v1690 = vunpack.c.h.b16 %v1614
    %v1691 = vunpack.c.l.b16 %v1615
    %v1692 = vunpack.c.h.b16 %v1615
    %v1693 = vunpack.c.l.b16 %v1616
    %v1694 = vunpack.c.h.b16 %v1616
    %v1695 = vunpack.c.l.b16 %v1617
    %v1696 = vunpack.c.h.b16 %v1617
    %v1697 = vunpack.c.l.b16 %v1618
    %v1698 = vunpack.c.h.b16 %v1618
    %v1699 = vunpack.c.l.b16 %v1619
    %v1700 = vunpack.c.h.b16 %v1619
    %v1701 = vunpack.c.l.b16 %v1620
    %v1702 = vunpack.c.h.b16 %v1620
    %v1703 = vunpack.c.l.b16 %v1621
    %v1704 = vunpack.c.h.b16 %v1621
    %v1705 = vunpack.c.l.b16 %v1622
    %v1706 = vunpack.c.h.b16 %v1622
    %v1707 = vunpack.c.l.b16 %v1623
    %v1708 = vunpack.c.h.b16 %v1623
    %v1709 = vunpack.c.l.b16 %v1624
    %v1710 = vunpack.c.h.b16 %v1624
    %v1711 = vunpack.c.l.b16 %v1625
    %v1712 = vunpack.c.h.b16 %v1625
    %v1713 = vunpack.c.l.b16 %v1626
    %v1714 = vunpack.c.h.b16 %v1626
    %v1715 = vunpack.c.l.b16 %v1627
    %v1716 = vunpack.c.h.b16 %v1627
    %v1717 = vunpack.c.l.b16 %v1628
    %v1718 = vunpack.c.h.b16 %v1628
    %v1719 = vunpack.c.l.b16 %v1629
    %v1720 = vunpack.c.h.b16 %v1629
    %v1721 = vunpack.c.l.b16 %v1630
    %v1722 = vunpack.c.h.b16 %v1630
    %v1723 = vunpack.c.l.b16 %v1631
    %v1724 = vunpack.c.h.b16 %v1631
    %v1725 = vunpack.c.l.b16 %v1632
    %v1726 = vunpack.c.h.b16 %v1632
    %v1727 = vunpack.c.l.b16 %v1633
    %v1728 = vunpack.c.h.b16 %v1633
    %v1729 = vunpack.c.l.b16 %v1634
    %v1730 = vunpack.c.h.b16 %v1634
    %v1731 = vpack.c.b16 %v1671, %v1667
    %v1732 = vpack.c.b16 %v1672, %v1668
    %v1733 = vpack.c.b16 %v1673, %v1669
    %v1734 = vpack.c.b16 %v1674, %v1670
    %v1735 = vpack.c.b16 %v1679, %v1675
    %v1736 = vpack.c.b16 %v1680, %v1676
    %v1737 = vpack.c.b16 %v1681, %v1677
    %v1738 = vpack.c.b16 %v1682, %v1678
    %v1739 = vpack.c.b16 %v1687, %v1683
    %v1740 = vpack.c.b16 %v1688, %v1684
    %v1741 = vpack.c.b16 %v1689, %v1685
    %v1742 = vpack.c.b16 %v1690, %v1686
    %v1743 = vpack.c.b16 %v1695, %v1691
    %v1744 = vpack.c.b16 %v1696, %v1692
    %v1745 = vpack.c.b16 %v1697, %v1693
    %v1746 = vpack.c.b16 %v1698, %v1694
    %v1747 = vpack.c.b16 %v1703, %v1699
    %v1748 = vpack.c.b16 %v1704, %v1700
    %v1749 = vpack.c.b16 %v1705, %v1701
    %v1750 = vpack.c.b16 %v1706, %v1702
    %v1751 = vpack.c.b16 %v1711, %v1707
    %v1752 = vpack.c.b16 %v1712, %v1708
    %v1753 = vpack.c.b16 %v1713, %v1709
    %v1754 = vpack.c.b16 %v1714, %v1710
    %v1755 = vpack.c.b16 %v1719, %v1715
    %v1756 = vpack.c.b16 %v1720, %v1716
    %v1757 = vpack.c.b16 %v1721, %v1717
    %v1758 = vpack.c.b16 %v1722, %v1718
    %v1759 = vpack.c.b16 %v1727, %v1723
    %v1760 = vpack.c.b16 %v1728, %v1724
    %v1761 = vpack.c.b16 %v1729, %v1725
    %v1762 = vpack.c.b16 %v1730, %v1726
    %1795 = vmatprep.subr.bf16.mxu0 %v1760
    %1796 = vmatpush1.bf16.msra.mxu0 %v1759
    %1797 = vmatprep.subr.bf16.mxu0 %v1756
    %1798 = vmatpush1.bf16.msra.mxu0 %v1755
    %1799 = vmatprep.subr.bf16.mxu0 %v1752
    %1800 = vmatpush1.bf16.msra.mxu0 %v1751
    %1801 = vmatprep.subr.bf16.mxu0 %v1748
    %1802 = vmatpush1.bf16.msra.mxu0 %v1747
    %1803 = vmatprep.subr.bf16.mxu0 %v1744
    %1804 = vmatpush1.bf16.msra.mxu0 %v1743
    %1805 = vmatprep.subr.bf16.mxu0 %v1740
    %1806 = vmatpush1.bf16.msra.mxu0 %v1739
    %1807 = vmatprep.subr.bf16.mxu0 %v1736
    %1808 = vmatpush1.bf16.msra.mxu0 %v1735
    %1809 = vmatprep.subr.bf16.mxu0 %v1732
    %1810 = vmatpush1.bf16.msra.mxu0 %v1731
    %1811 = vmatprep.subr.bf16.mxu0 0
    %1812 = vmatpush2.bf16.msra.mxu0 0
    %1813 = vmatprep.subr.bf16.mxu0 0
    %1814 = vmatpush2.bf16.msra.mxu0 0
    %1815 = vmatprep.subr.bf16.mxu0 0
    %1816 = vmatpush2.bf16.msra.mxu0 0
    %1817 = vmatprep.subr.bf16.mxu0 0
    %1818 = vmatpush2.bf16.msra.mxu0 0
    %1819 = vmatprep.subr.bf16.mxu0 0
    %1820 = vmatpush2.bf16.msra.mxu0 0
    %1821 = vmatprep.subr.bf16.mxu0 0
    %1822 = vmatpush2.bf16.msra.mxu0 0
    %1823 = vmatprep.subr.bf16.mxu0 0
    %1824 = vmatpush2.bf16.msra.mxu0 0
    %1825 = vmatprep.subr.bf16.mxu0 0
    %1826 = vmatpush2.bf16.msra.mxu0 0
    %1827 = vmatprep.mubr.bf16.mxu0 0
    %1828 = vmatmul.mubr.bf16.gmra.mxu0 %v1320
    %v1829 = vpop.f32.mrf.mxu0
    %v1830 = vadd.f32 0.0, %v1829
    %v1831 = vpop.f32.mrf.mxu0
    %v1832 = vadd.f32 0.0, %v1831
    %v1833 = vpop.f32.mrf.mxu0
    %v1834 = vpop.f32.mrf.mxu0
    %1835 = vdwg.mxu0
    %1836 = vmatprep.subr.bf16.mxu0 %v1762
    %1837 = vmatpush1.bf16.msra.mxu0 %v1761
    %1838 = vmatprep.subr.bf16.mxu0 %v1758
    %1839 = vmatpush1.bf16.msra.mxu0 %v1757
    %1840 = vmatprep.subr.bf16.mxu0 %v1754
    %1841 = vmatpush1.bf16.msra.mxu0 %v1753
    %1842 = vmatprep.subr.bf16.mxu0 %v1750
    %1843 = vmatpush1.bf16.msra.mxu0 %v1749
    %1844 = vmatprep.subr.bf16.mxu0 %v1746
    %1845 = vmatpush1.bf16.msra.mxu0 %v1745
    %1846 = vmatprep.subr.bf16.mxu0 %v1742
    %1847 = vmatpush1.bf16.msra.mxu0 %v1741
    %1848 = vmatprep.subr.bf16.mxu0 %v1738
    %1849 = vmatpush1.bf16.msra.mxu0 %v1737
    %1850 = vmatprep.subr.bf16.mxu0 %v1734
    %1851 = vmatpush1.bf16.msra.mxu0 %v1733
    %1852 = vmatprep.subr.bf16.mxu0 0
    %1853 = vmatpush2.bf16.msra.mxu0 0
    %1854 = vmatprep.subr.bf16.mxu0 0
    %1855 = vmatpush2.bf16.msra.mxu0 0
    %1856 = vmatprep.subr.bf16.mxu0 0
    %1857 = vmatpush2.bf16.msra.mxu0 0
    %1858 = vmatprep.subr.bf16.mxu0 0
    %1859 = vmatpush2.bf16.msra.mxu0 0
    %1860 = vmatprep.subr.bf16.mxu0 0
    %1861 = vmatpush2.bf16.msra.mxu0 0
    %1862 = vmatprep.subr.bf16.mxu0 0
    %1863 = vmatpush2.bf16.msra.mxu0 0
    %1864 = vmatprep.subr.bf16.mxu0 0
    %1865 = vmatpush2.bf16.msra.mxu0 0
    %1866 = vmatprep.subr.bf16.mxu0 0
    %1867 = vmatpush2.bf16.msra.mxu0 0
    %1868 = vmatprep.mubr.bf16.mxu0 0
    %1869 = vmatmul.mubr.bf16.gmra.mxu0 %v1320
    %v1870 = vpop.f32.mrf.mxu0
    %v1871 = vadd.f32 0.0, %v1870
    %v1872 = vpop.f32.mrf.mxu0
    %v1873 = vadd.f32 0.0, %v1872
    %v1874 = vpop.f32.mrf.mxu0
    %v1875 = vpop.f32.mrf.mxu0
    %1876 = vdwg.mxu0
    %v1877 = vadd.f32 %v1599, %v1830
    %v1878 = vadd.f32 %v1600, %v1832
    %v1879 = vadd.f32 %v1601, %v1871
    %v1880 = vadd.f32 %v1602, %v1873
    %v1881 = vxor.u32 %v1877, 2147483648
    %v1882 = vxor.u32 %v1878, 2147483648
    %v1883 = vxor.u32 %v1879, 2147483648
    %v1884 = vxor.u32 %v1880, 2147483648
    %v1885 = vmul.f32 %v1881, 1.442695
    %v1886 = vpow.pop %v1885
    %v1887 = vmul.f32 %v1882, 1.442695
    %v1888 = vpow.pop %v1887
    %v1889 = vmul.f32 %v1883, 1.442695
    %v1890 = vpow.pop %v1889
    %v1891 = vmul.f32 %v1884, 1.442695
    %v1892 = vpow.pop %v1891
    %v1893 = vadd.f32 %v1886, 1.0
    %v1894 = vadd.f32 %v1888, 1.0
    %v1895 = vadd.f32 %v1890, 1.0
    %v1896 = vadd.f32 %v1892, 1.0
    %v1897 = vrcp.pop %v1893
    %v1898 = vmul.f32 1.0, %v1897
    %v1899 = vrcp.pop %v1894
    %v1900 = vmul.f32 1.0, %v1899
    %v1901 = vrcp.pop %v1895
    %v1902 = vmul.f32 1.0, %v1901
    %v1903 = vrcp.pop %v1896
    %v1904 = vmul.f32 1.0, %v1903
    %v1905 = vmul.f32 %v1902, 2.0
    %v1906 = vsub.f32 %v1905, 1.0
    %v1907 = vmul.f32 %v1900, %v1317
    %v1908 = vmul.f32 %v1898, %v1906
    %v1909 = vadd.f32 %v1907, %v1908
    %v1910 = vtanh.pop %v1909
    %v1911 = vmul.f32 %v1904, %v1910
    %v1912 = vpack.c.bf16 %v1911, %v1911
    %s1913 = scalar_lea.vmem [#allocation11], 8
    %1914 = vst [vmem:[%s1913] sm:$0xf] %v1912
    %s1915 = scalar_lea.vmem [#allocation8], 12
    %v1916 = vld [vmem:[%s1915] sm:$0xf]
    %v1917 = vld [vmem:[#allocation2] sm:$0xff]
    %v1918 = vld [vmem:[#allocation2 + $0x8] sm:$0xff]
    %v1919 = vld [vmem:[#allocation2 + $0x10] sm:$0xff]
    %v1920 = vld [vmem:[#allocation2 + $0x18] sm:$0xff]
    %v1921 = vld [vmem:[#allocation2 + $0x20] sm:$0xff]
    %v1922 = vld [vmem:[#allocation2 + $0x28] sm:$0xff]
    %v1923 = vld [vmem:[#allocation2 + $0x30] sm:$0xff]
    %v1924 = vld [vmem:[#allocation2 + $0x38] sm:$0xff]
    %v1925 = vld [vmem:[#allocation2 + $0x40] sm:$0xff]
    %v1926 = vld [vmem:[#allocation2 + $0x48] sm:$0xff]
    %v1927 = vld [vmem:[#allocation2 + $0x50] sm:$0xff]
    %v1928 = vld [vmem:[#allocation2 + $0x58] sm:$0xff]
    %v1929 = vld [vmem:[#allocation2 + $0x60] sm:$0xff]
    %v1930 = vld [vmem:[#allocation2 + $0x68] sm:$0xff]
    %v1931 = vld [vmem:[#allocation2 + $0x70] sm:$0xff]
    %v1932 = vld [vmem:[#allocation2 + $0x78] sm:$0xff]
    %v1933 = vld [vmem:[#allocation2 + $0x80] sm:$0xff]
    %v1934 = vld [vmem:[#allocation2 + $0x88] sm:$0xff]
    %v1935 = vld [vmem:[#allocation2 + $0x90] sm:$0xff]
    %v1936 = vld [vmem:[#allocation2 + $0x98] sm:$0xff]
    %v1937 = vld [vmem:[#allocation2 + $0xa0] sm:$0xff]
    %v1938 = vld [vmem:[#allocation2 + $0xa8] sm:$0xff]
    %v1939 = vld [vmem:[#allocation2 + $0xb0] sm:$0xff]
    %v1940 = vld [vmem:[#allocation2 + $0xb8] sm:$0xff]
    %v1941 = vld [vmem:[#allocation2 + $0xc0] sm:$0xff]
    %v1942 = vld [vmem:[#allocation2 + $0xc8] sm:$0xff]
    %v1943 = vld [vmem:[#allocation2 + $0xd0] sm:$0xff]
    %v1944 = vld [vmem:[#allocation2 + $0xd8] sm:$0xff]
    %v1945 = vld [vmem:[#allocation2 + $0xe0] sm:$0xff]
    %v1946 = vld [vmem:[#allocation2 + $0xe8] sm:$0xff]
    %v1947 = vld [vmem:[#allocation2 + $0xf0] sm:$0xff]
    %v1948 = vld [vmem:[#allocation2 + $0xf8] sm:$0xff]
    %v1981 = vunpack.c.l.b16 %v1917
    %v1982 = vunpack.c.h.b16 %v1917
    %v1983 = vunpack.c.l.b16 %v1918
    %v1984 = vunpack.c.h.b16 %v1918
    %v1985 = vunpack.c.l.b16 %v1919
    %v1986 = vunpack.c.h.b16 %v1919
    %v1987 = vunpack.c.l.b16 %v1920
    %v1988 = vunpack.c.h.b16 %v1920
    %v1989 = vunpack.c.l.b16 %v1921
    %v1990 = vunpack.c.h.b16 %v1921
    %v1991 = vunpack.c.l.b16 %v1922
    %v1992 = vunpack.c.h.b16 %v1922
    %v1993 = vunpack.c.l.b16 %v1923
    %v1994 = vunpack.c.h.b16 %v1923
    %v1995 = vunpack.c.l.b16 %v1924
    %v1996 = vunpack.c.h.b16 %v1924
    %v1997 = vunpack.c.l.b16 %v1925
    %v1998 = vunpack.c.h.b16 %v1925
    %v1999 = vunpack.c.l.b16 %v1926
    %v2000 = vunpack.c.h.b16 %v1926
    %v2001 = vunpack.c.l.b16 %v1927
    %v2002 = vunpack.c.h.b16 %v1927
    %v2003 = vunpack.c.l.b16 %v1928
    %v2004 = vunpack.c.h.b16 %v1928
    %v2005 = vunpack.c.l.b16 %v1929
    %v2006 = vunpack.c.h.b16 %v1929
    %v2007 = vunpack.c.l.b16 %v1930
    %v2008 = vunpack.c.h.b16 %v1930
    %v2009 = vunpack.c.l.b16 %v1931
    %v2010 = vunpack.c.h.b16 %v1931
    %v2011 = vunpack.c.l.b16 %v1932
    %v2012 = vunpack.c.h.b16 %v1932
    %v2013 = vunpack.c.l.b16 %v1933
    %v2014 = vunpack.c.h.b16 %v1933
    %v2015 = vunpack.c.l.b16 %v1934
    %v2016 = vunpack.c.h.b16 %v1934
    %v2017 = vunpack.c.l.b16 %v1935
    %v2018 = vunpack.c.h.b16 %v1935
    %v2019 = vunpack.c.l.b16 %v1936
    %v2020 = vunpack.c.h.b16 %v1936
    %v2021 = vunpack.c.l.b16 %v1937
    %v2022 = vunpack.c.h.b16 %v1937
    %v2023 = vunpack.c.l.b16 %v1938
    %v2024 = vunpack.c.h.b16 %v1938
    %v2025 = vunpack.c.l.b16 %v1939
    %v2026 = vunpack.c.h.b16 %v1939
    %v2027 = vunpack.c.l.b16 %v1940
    %v2028 = vunpack.c.h.b16 %v1940
    %v2029 = vunpack.c.l.b16 %v1941
    %v2030 = vunpack.c.h.b16 %v1941
    %v2031 = vunpack.c.l.b16 %v1942
    %v2032 = vunpack.c.h.b16 %v1942
    %v2033 = vunpack.c.l.b16 %v1943
    %v2034 = vunpack.c.h.b16 %v1943
    %v2035 = vunpack.c.l.b16 %v1944
    %v2036 = vunpack.c.h.b16 %v1944
    %v2037 = vunpack.c.l.b16 %v1945
    %v2038 = vunpack.c.h.b16 %v1945
    %v2039 = vunpack.c.l.b16 %v1946
    %v2040 = vunpack.c.h.b16 %v1946
    %v2041 = vunpack.c.l.b16 %v1947
    %v2042 = vunpack.c.h.b16 %v1947
    %v2043 = vunpack.c.l.b16 %v1948
    %v2044 = vunpack.c.h.b16 %v1948
    %v2045 = vpack.c.b16 %v1985, %v1981
    %v2046 = vpack.c.b16 %v1986, %v1982
    %v2047 = vpack.c.b16 %v1987, %v1983
    %v2048 = vpack.c.b16 %v1988, %v1984
    %v2049 = vpack.c.b16 %v1993, %v1989
    %v2050 = vpack.c.b16 %v1994, %v1990
    %v2051 = vpack.c.b16 %v1995, %v1991
    %v2052 = vpack.c.b16 %v1996, %v1992
    %v2053 = vpack.c.b16 %v2001, %v1997
    %v2054 = vpack.c.b16 %v2002, %v1998
    %v2055 = vpack.c.b16 %v2003, %v1999
    %v2056 = vpack.c.b16 %v2004, %v2000
    %v2057 = vpack.c.b16 %v2009, %v2005
    %v2058 = vpack.c.b16 %v2010, %v2006
    %v2059 = vpack.c.b16 %v2011, %v2007
    %v2060 = vpack.c.b16 %v2012, %v2008
    %v2061 = vpack.c.b16 %v2017, %v2013
    %v2062 = vpack.c.b16 %v2018, %v2014
    %v2063 = vpack.c.b16 %v2019, %v2015
    %v2064 = vpack.c.b16 %v2020, %v2016
    %v2065 = vpack.c.b16 %v2025, %v2021
    %v2066 = vpack.c.b16 %v2026, %v2022
    %v2067 = vpack.c.b16 %v2027, %v2023
    %v2068 = vpack.c.b16 %v2028, %v2024
    %v2069 = vpack.c.b16 %v2033, %v2029
    %v2070 = vpack.c.b16 %v2034, %v2030
    %v2071 = vpack.c.b16 %v2035, %v2031
    %v2072 = vpack.c.b16 %v2036, %v2032
    %v2073 = vpack.c.b16 %v2041, %v2037
    %v2074 = vpack.c.b16 %v2042, %v2038
    %v2075 = vpack.c.b16 %v2043, %v2039
    %v2076 = vpack.c.b16 %v2044, %v2040
    %2109 = vmatprep.subr.bf16.mxu0 %v2074
    %2110 = vmatpush1.bf16.msra.mxu0 %v2073
    %2111 = vmatprep.subr.bf16.mxu0 %v2070
    %2112 = vmatpush1.bf16.msra.mxu0 %v2069
    %2113 = vmatprep.subr.bf16.mxu0 %v2066
    %2114 = vmatpush1.bf16.msra.mxu0 %v2065
    %2115 = vmatprep.subr.bf16.mxu0 %v2062
    %2116 = vmatpush1.bf16.msra.mxu0 %v2061
    %2117 = vmatprep.subr.bf16.mxu0 %v2058
    %2118 = vmatpush1.bf16.msra.mxu0 %v2057
    %2119 = vmatprep.subr.bf16.mxu0 %v2054
    %2120 = vmatpush1.bf16.msra.mxu0 %v2053
    %2121 = vmatprep.subr.bf16.mxu0 %v2050
    %2122 = vmatpush1.bf16.msra.mxu0 %v2049
    %2123 = vmatprep.subr.bf16.mxu0 %v2046
    %2124 = vmatpush1.bf16.msra.mxu0 %v2045
    %2125 = vmatprep.subr.bf16.mxu0 0
    %2126 = vmatpush2.bf16.msra.mxu0 0
    %2127 = vmatprep.subr.bf16.mxu0 0
    %2128 = vmatpush2.bf16.msra.mxu0 0
    %2129 = vmatprep.subr.bf16.mxu0 0
    %2130 = vmatpush2.bf16.msra.mxu0 0
    %2131 = vmatprep.subr.bf16.mxu0 0
    %2132 = vmatpush2.bf16.msra.mxu0 0
    %2133 = vmatprep.subr.bf16.mxu0 0
    %2134 = vmatpush2.bf16.msra.mxu0 0
    %2135 = vmatprep.subr.bf16.mxu0 0
    %2136 = vmatpush2.bf16.msra.mxu0 0
    %2137 = vmatprep.subr.bf16.mxu0 0
    %2138 = vmatpush2.bf16.msra.mxu0 0
    %2139 = vmatprep.subr.bf16.mxu0 0
    %2140 = vmatpush2.bf16.msra.mxu0 0
    %2141 = vmatprep.mubr.bf16.mxu0 0
    %2142 = vmatmul.mubr.bf16.gmra.mxu0 %v1916
    %v2143 = vpop.f32.mrf.mxu0
    %v2144 = vadd.f32 0.0, %v2143
    %v2145 = vpop.f32.mrf.mxu0
    %v2146 = vadd.f32 0.0, %v2145
    %v2147 = vpop.f32.mrf.mxu0
    %v2148 = vpop.f32.mrf.mxu0
    %2149 = vdwg.mxu0
    %2150 = vmatprep.subr.bf16.mxu0 %v2076
    %2151 = vmatpush1.bf16.msra.mxu0 %v2075
    %2152 = vmatprep.subr.bf16.mxu0 %v2072
    %2153 = vmatpush1.bf16.msra.mxu0 %v2071
    %2154 = vmatprep.subr.bf16.mxu0 %v2068
    %2155 = vmatpush1.bf16.msra.mxu0 %v2067
    %2156 = vmatprep.subr.bf16.mxu0 %v2064
    %2157 = vmatpush1.bf16.msra.mxu0 %v2063
    %2158 = vmatprep.subr.bf16.mxu0 %v2060
    %2159 = vmatpush1.bf16.msra.mxu0 %v2059
    %2160 = vmatprep.subr.bf16.mxu0 %v2056
    %2161 = vmatpush1.bf16.msra.mxu0 %v2055
    %2162 = vmatprep.subr.bf16.mxu0 %v2052
    %2163 = vmatpush1.bf16.msra.mxu0 %v2051
    %2164 = vmatprep.subr.bf16.mxu0 %v2048
    %2165 = vmatpush1.bf16.msra.mxu0 %v2047
    %2166 = vmatprep.subr.bf16.mxu0 0
    %2167 = vmatpush2.bf16.msra.mxu0 0
    %2168 = vmatprep.subr.bf16.mxu0 0
    %2169 = vmatpush2.bf16.msra.mxu0 0
    %2170 = vmatprep.subr.bf16.mxu0 0
    %2171 = vmatpush2.bf16.msra.mxu0 0
    %2172 = vmatprep.subr.bf16.mxu0 0
    %2173 = vmatpush2.bf16.msra.mxu0 0
    %2174 = vmatprep.subr.bf16.mxu0 0
    %2175 = vmatpush2.bf16.msra.mxu0 0
    %2176 = vmatprep.subr.bf16.mxu0 0
    %2177 = vmatpush2.bf16.msra.mxu0 0
    %2178 = vmatprep.subr.bf16.mxu0 0
    %2179 = vmatpush2.bf16.msra.mxu0 0
    %2180 = vmatprep.subr.bf16.mxu0 0
    %2181 = vmatpush2.bf16.msra.mxu0 0
    %2182 = vmatprep.mubr.bf16.mxu0 0
    %2183 = vmatmul.mubr.bf16.gmra.mxu0 %v1916
    %v2184 = vpop.f32.mrf.mxu0
    %v2185 = vadd.f32 0.0, %v2184
    %v2186 = vpop.f32.mrf.mxu0
    %v2187 = vadd.f32 0.0, %v2186
    %v2188 = vpop.f32.mrf.mxu0
    %v2189 = vpop.f32.mrf.mxu0
    %2190 = vdwg.mxu0
    %v2191 = vadd.f32 %v121, %v2144
    %v2192 = vadd.f32 %v125, %v2146
    %v2193 = vadd.f32 %v129, %v2185
    %v2194 = vadd.f32 %v133, %v2187
    %v2195 = vld [vmem:[#allocation3] sm:$0xff]
    %v2196 = vld [vmem:[#allocation3 + $0x8] sm:$0xff]
    %v2197 = vld [vmem:[#allocation3 + $0x10] sm:$0xff]
    %v2198 = vld [vmem:[#allocation3 + $0x18] sm:$0xff]
    %v2199 = vld [vmem:[#allocation3 + $0x20] sm:$0xff]
    %v2200 = vld [vmem:[#allocation3 + $0x28] sm:$0xff]
    %v2201 = vld [vmem:[#allocation3 + $0x30] sm:$0xff]
    %v2202 = vld [vmem:[#allocation3 + $0x38] sm:$0xff]
    %v2203 = vld [vmem:[#allocation3 + $0x40] sm:$0xff]
    %v2204 = vld [vmem:[#allocation3 + $0x48] sm:$0xff]
    %v2205 = vld [vmem:[#allocation3 + $0x50] sm:$0xff]
    %v2206 = vld [vmem:[#allocation3 + $0x58] sm:$0xff]
    %v2207 = vld [vmem:[#allocation3 + $0x60] sm:$0xff]
    %v2208 = vld [vmem:[#allocation3 + $0x68] sm:$0xff]
    %v2209 = vld [vmem:[#allocation3 + $0x70] sm:$0xff]
    %v2210 = vld [vmem:[#allocation3 + $0x78] sm:$0xff]
    %v2211 = vld [vmem:[#allocation3 + $0x80] sm:$0xff]
    %v2212 = vld [vmem:[#allocation3 + $0x88] sm:$0xff]
    %v2213 = vld [vmem:[#allocation3 + $0x90] sm:$0xff]
    %v2214 = vld [vmem:[#allocation3 + $0x98] sm:$0xff]
    %v2215 = vld [vmem:[#allocation3 + $0xa0] sm:$0xff]
    %v2216 = vld [vmem:[#allocation3 + $0xa8] sm:$0xff]
    %v2217 = vld [vmem:[#allocation3 + $0xb0] sm:$0xff]
    %v2218 = vld [vmem:[#allocation3 + $0xb8] sm:$0xff]
    %v2219 = vld [vmem:[#allocation3 + $0xc0] sm:$0xff]
    %v2220 = vld [vmem:[#allocation3 + $0xc8] sm:$0xff]
    %v2221 = vld [vmem:[#allocation3 + $0xd0] sm:$0xff]
    %v2222 = vld [vmem:[#allocation3 + $0xd8] sm:$0xff]
    %v2223 = vld [vmem:[#allocation3 + $0xe0] sm:$0xff]
    %v2224 = vld [vmem:[#allocation3 + $0xe8] sm:$0xff]
    %v2225 = vld [vmem:[#allocation3 + $0xf0] sm:$0xff]
    %v2226 = vld [vmem:[#allocation3 + $0xf8] sm:$0xff]
    %v2259 = vunpack.c.l.b16 %v2195
    %v2260 = vunpack.c.h.b16 %v2195
    %v2261 = vunpack.c.l.b16 %v2196
    %v2262 = vunpack.c.h.b16 %v2196
    %v2263 = vunpack.c.l.b16 %v2197
    %v2264 = vunpack.c.h.b16 %v2197
    %v2265 = vunpack.c.l.b16 %v2198
    %v2266 = vunpack.c.h.b16 %v2198
    %v2267 = vunpack.c.l.b16 %v2199
    %v2268 = vunpack.c.h.b16 %v2199
    %v2269 = vunpack.c.l.b16 %v2200
    %v2270 = vunpack.c.h.b16 %v2200
    %v2271 = vunpack.c.l.b16 %v2201
    %v2272 = vunpack.c.h.b16 %v2201
    %v2273 = vunpack.c.l.b16 %v2202
    %v2274 = vunpack.c.h.b16 %v2202
    %v2275 = vunpack.c.l.b16 %v2203
    %v2276 = vunpack.c.h.b16 %v2203
    %v2277 = vunpack.c.l.b16 %v2204
    %v2278 = vunpack.c.h.b16 %v2204
    %v2279 = vunpack.c.l.b16 %v2205
    %v2280 = vunpack.c.h.b16 %v2205
    %v2281 = vunpack.c.l.b16 %v2206
    %v2282 = vunpack.c.h.b16 %v2206
    %v2283 = vunpack.c.l.b16 %v2207
    %v2284 = vunpack.c.h.b16 %v2207
    %v2285 = vunpack.c.l.b16 %v2208
    %v2286 = vunpack.c.h.b16 %v2208
    %v2287 = vunpack.c.l.b16 %v2209
    %v2288 = vunpack.c.h.b16 %v2209
    %v2289 = vunpack.c.l.b16 %v2210
    %v2290 = vunpack.c.h.b16 %v2210
    %v2291 = vunpack.c.l.b16 %v2211
    %v2292 = vunpack.c.h.b16 %v2211
    %v2293 = vunpack.c.l.b16 %v2212
    %v2294 = vunpack.c.h.b16 %v2212
    %v2295 = vunpack.c.l.b16 %v2213
    %v2296 = vunpack.c.h.b16 %v2213
    %v2297 = vunpack.c.l.b16 %v2214
    %v2298 = vunpack.c.h.b16 %v2214
    %v2299 = vunpack.c.l.b16 %v2215
    %v2300 = vunpack.c.h.b16 %v2215
    %v2301 = vunpack.c.l.b16 %v2216
    %v2302 = vunpack.c.h.b16 %v2216
    %v2303 = vunpack.c.l.b16 %v2217
    %v2304 = vunpack.c.h.b16 %v2217
    %v2305 = vunpack.c.l.b16 %v2218
    %v2306 = vunpack.c.h.b16 %v2218
    %v2307 = vunpack.c.l.b16 %v2219
    %v2308 = vunpack.c.h.b16 %v2219
    %v2309 = vunpack.c.l.b16 %v2220
    %v2310 = vunpack.c.h.b16 %v2220
    %v2311 = vunpack.c.l.b16 %v2221
    %v2312 = vunpack.c.h.b16 %v2221
    %v2313 = vunpack.c.l.b16 %v2222
    %v2314 = vunpack.c.h.b16 %v2222
    %v2315 = vunpack.c.l.b16 %v2223
    %v2316 = vunpack.c.h.b16 %v2223
    %v2317 = vunpack.c.l.b16 %v2224
    %v2318 = vunpack.c.h.b16 %v2224
    %v2319 = vunpack.c.l.b16 %v2225
    %v2320 = vunpack.c.h.b16 %v2225
    %v2321 = vunpack.c.l.b16 %v2226
    %v2322 = vunpack.c.h.b16 %v2226
    %v2323 = vpack.c.b16 %v2263, %v2259
    %v2324 = vpack.c.b16 %v2264, %v2260
    %v2325 = vpack.c.b16 %v2265, %v2261
    %v2326 = vpack.c.b16 %v2266, %v2262
    %v2327 = vpack.c.b16 %v2271, %v2267
    %v2328 = vpack.c.b16 %v2272, %v2268
    %v2329 = vpack.c.b16 %v2273, %v2269
    %v2330 = vpack.c.b16 %v2274, %v2270
    %v2331 = vpack.c.b16 %v2279, %v2275
    %v2332 = vpack.c.b16 %v2280, %v2276
    %v2333 = vpack.c.b16 %v2281, %v2277
    %v2334 = vpack.c.b16 %v2282, %v2278
    %v2335 = vpack.c.b16 %v2287, %v2283
    %v2336 = vpack.c.b16 %v2288, %v2284
    %v2337 = vpack.c.b16 %v2289, %v2285
    %v2338 = vpack.c.b16 %v2290, %v2286
    %v2339 = vpack.c.b16 %v2295, %v2291
    %v2340 = vpack.c.b16 %v2296, %v2292
    %v2341 = vpack.c.b16 %v2297, %v2293
    %v2342 = vpack.c.b16 %v2298, %v2294
    %v2343 = vpack.c.b16 %v2303, %v2299
    %v2344 = vpack.c.b16 %v2304, %v2300
    %v2345 = vpack.c.b16 %v2305, %v2301
    %v2346 = vpack.c.b16 %v2306, %v2302
    %v2347 = vpack.c.b16 %v2311, %v2307
    %v2348 = vpack.c.b16 %v2312, %v2308
    %v2349 = vpack.c.b16 %v2313, %v2309
    %v2350 = vpack.c.b16 %v2314, %v2310
    %v2351 = vpack.c.b16 %v2319, %v2315
    %v2352 = vpack.c.b16 %v2320, %v2316
    %v2353 = vpack.c.b16 %v2321, %v2317
    %v2354 = vpack.c.b16 %v2322, %v2318
    %2387 = vmatprep.subr.bf16.mxu0 %v2352
    %2388 = vmatpush1.bf16.msra.mxu0 %v2351
    %2389 = vmatprep.subr.bf16.mxu0 %v2348
    %2390 = vmatpush1.bf16.msra.mxu0 %v2347
    %2391 = vmatprep.subr.bf16.mxu0 %v2344
    %2392 = vmatpush1.bf16.msra.mxu0 %v2343
    %2393 = vmatprep.subr.bf16.mxu0 %v2340
    %2394 = vmatpush1.bf16.msra.mxu0 %v2339
    %2395 = vmatprep.subr.bf16.mxu0 %v2336
    %2396 = vmatpush1.bf16.msra.mxu0 %v2335
    %2397 = vmatprep.subr.bf16.mxu0 %v2332
    %2398 = vmatpush1.bf16.msra.mxu0 %v2331
    %2399 = vmatprep.subr.bf16.mxu0 %v2328
    %2400 = vmatpush1.bf16.msra.mxu0 %v2327
    %2401 = vmatprep.subr.bf16.mxu0 %v2324
    %2402 = vmatpush1.bf16.msra.mxu0 %v2323
    %2403 = vmatprep.subr.bf16.mxu0 0
    %2404 = vmatpush2.bf16.msra.mxu0 0
    %2405 = vmatprep.subr.bf16.mxu0 0
    %2406 = vmatpush2.bf16.msra.mxu0 0
    %2407 = vmatprep.subr.bf16.mxu0 0
    %2408 = vmatpush2.bf16.msra.mxu0 0
    %2409 = vmatprep.subr.bf16.mxu0 0
    %2410 = vmatpush2.bf16.msra.mxu0 0
    %2411 = vmatprep.subr.bf16.mxu0 0
    %2412 = vmatpush2.bf16.msra.mxu0 0
    %2413 = vmatprep.subr.bf16.mxu0 0
    %2414 = vmatpush2.bf16.msra.mxu0 0
    %2415 = vmatprep.subr.bf16.mxu0 0
    %2416 = vmatpush2.bf16.msra.mxu0 0
    %2417 = vmatprep.subr.bf16.mxu0 0
    %2418 = vmatpush2.bf16.msra.mxu0 0
    %2419 = vmatprep.mubr.bf16.mxu0 0
    %2420 = vmatmul.mubr.bf16.gmra.mxu0 %v1912
    %v2421 = vpop.f32.mrf.mxu0
    %v2422 = vadd.f32 0.0, %v2421
    %v2423 = vpop.f32.mrf.mxu0
    %v2424 = vadd.f32 0.0, %v2423
    %v2425 = vpop.f32.mrf.mxu0
    %v2426 = vpop.f32.mrf.mxu0
    %2427 = vdwg.mxu0
    %2428 = vmatprep.subr.bf16.mxu0 %v2354
    %2429 = vmatpush1.bf16.msra.mxu0 %v2353
    %2430 = vmatprep.subr.bf16.mxu0 %v2350
    %2431 = vmatpush1.bf16.msra.mxu0 %v2349
    %2432 = vmatprep.subr.bf16.mxu0 %v2346
    %2433 = vmatpush1.bf16.msra.mxu0 %v2345
    %2434 = vmatprep.subr.bf16.mxu0 %v2342
    %2435 = vmatpush1.bf16.msra.mxu0 %v2341
    %2436 = vmatprep.subr.bf16.mxu0 %v2338
    %2437 = vmatpush1.bf16.msra.mxu0 %v2337
    %2438 = vmatprep.subr.bf16.mxu0 %v2334
    %2439 = vmatpush1.bf16.msra.mxu0 %v2333
    %2440 = vmatprep.subr.bf16.mxu0 %v2330
    %2441 = vmatpush1.bf16.msra.mxu0 %v2329
    %2442 = vmatprep.subr.bf16.mxu0 %v2326
    %2443 = vmatpush1.bf16.msra.mxu0 %v2325
    %2444 = vmatprep.subr.bf16.mxu0 0
    %2445 = vmatpush2.bf16.msra.mxu0 0
    %2446 = vmatprep.subr.bf16.mxu0 0
    %2447 = vmatpush2.bf16.msra.mxu0 0
    %2448 = vmatprep.subr.bf16.mxu0 0
    %2449 = vmatpush2.bf16.msra.mxu0 0
    %2450 = vmatprep.subr.bf16.mxu0 0
    %2451 = vmatpush2.bf16.msra.mxu0 0
    %2452 = vmatprep.subr.bf16.mxu0 0
    %2453 = vmatpush2.bf16.msra.mxu0 0
    %2454 = vmatprep.subr.bf16.mxu0 0
    %2455 = vmatpush2.bf16.msra.mxu0 0
    %2456 = vmatprep.subr.bf16.mxu0 0
    %2457 = vmatpush2.bf16.msra.mxu0 0
    %2458 = vmatprep.subr.bf16.mxu0 0
    %2459 = vmatpush2.bf16.msra.mxu0 0
    %2460 = vmatprep.mubr.bf16.mxu0 0
    %2461 = vmatmul.mubr.bf16.gmra.mxu0 %v1912
    %v2462 = vpop.f32.mrf.mxu0
    %v2463 = vadd.f32 0.0, %v2462
    %v2464 = vpop.f32.mrf.mxu0
    %v2465 = vadd.f32 0.0, %v2464
    %v2466 = vpop.f32.mrf.mxu0
    %v2467 = vpop.f32.mrf.mxu0
    %2468 = vdwg.mxu0
    %v2469 = vadd.f32 %v2191, %v2422
    %v2470 = vadd.f32 %v2192, %v2424
    %v2471 = vadd.f32 %v2193, %v2463
    %v2472 = vadd.f32 %v2194, %v2465
    %v2473 = vxor.u32 %v2469, 2147483648
    %v2474 = vxor.u32 %v2470, 2147483648
    %v2475 = vxor.u32 %v2471, 2147483648
    %v2476 = vxor.u32 %v2472, 2147483648
    %v2477 = vmul.f32 %v2473, 1.442695
    %v2478 = vpow.pop %v2477
    %v2479 = vmul.f32 %v2474, 1.442695
    %v2480 = vpow.pop %v2479
    %v2481 = vmul.f32 %v2475, 1.442695
    %v2482 = vpow.pop %v2481
    %v2483 = vmul.f32 %v2476, 1.442695
    %v2484 = vpow.pop %v2483
    %v2485 = vadd.f32 %v2478, 1.0
    %v2486 = vadd.f32 %v2480, 1.0
    %v2487 = vadd.f32 %v2482, 1.0
    %v2488 = vadd.f32 %v2484, 1.0
    %v2489 = vrcp.pop %v2485
    %v2490 = vmul.f32 1.0, %v2489
    %v2491 = vrcp.pop %v2486
    %v2492 = vmul.f32 1.0, %v2491
    %v2493 = vrcp.pop %v2487
    %v2494 = vmul.f32 1.0, %v2493
    %v2495 = vrcp.pop %v2488
    %v2496 = vmul.f32 1.0, %v2495
    %v2497 = vmul.f32 %v2494, 2.0
    %v2498 = vsub.f32 %v2497, 1.0
    %v2499 = vmul.f32 %v2492, %v1909
    %v2500 = vmul.f32 %v2490, %v2498
    %v2501 = vadd.f32 %v2499, %v2500
    %v2502 = vtanh.pop %v2501
    %v2503 = vmul.f32 %v2496, %v2502
    %v2504 = vpack.c.bf16 %v2503, %v2503
    %s2505 = scalar_lea.vmem [#allocation11], 12
    %2506 = vst [vmem:[%s2505] sm:$0xf] %v2504
    %s2507 = scalar_lea.vmem [#allocation8], 16
    %v2508 = vld [vmem:[%s2507] sm:$0xf]
    %v2509 = vld [vmem:[#allocation2] sm:$0xff]
    %v2510 = vld [vmem:[#allocation2 + $0x8] sm:$0xff]
    %v2511 = vld [vmem:[#allocation2 + $0x10] sm:$0xff]
    %v2512 = vld [vmem:[#allocation2 + $0x18] sm:$0xff]
    %v2513 = vld [vmem:[#allocation2 + $0x20] sm:$0xff]
    %v2514 = vld [vmem:[#allocation2 + $0x28] sm:$0xff]
    %v2515 = vld [vmem:[#allocation2 + $0x30] sm:$0xff]
    %v2516 = vld [vmem:[#allocation2 + $0x38] sm:$0xff]
    %v2517 = vld [vmem:[#allocation2 + $0x40] sm:$0xff]
    %v2518 = vld [vmem:[#allocation2 + $0x48] sm:$0xff]
    %v2519 = vld [vmem:[#allocation2 + $0x50] sm:$0xff]
    %v2520 = vld [vmem:[#allocation2 + $0x58] sm:$0xff]
    %v2521 = vld [vmem:[#allocation2 + $0x60] sm:$0xff]
    %v2522 = vld [vmem:[#allocation2 + $0x68] sm:$0xff]
    %v2523 = vld [vmem:[#allocation2 + $0x70] sm:$0xff]
    %v2524 = vld [vmem:[#allocation2 + $0x78] sm:$0xff]
    %v2525 = vld [vmem:[#allocation2 + $0x80] sm:$0xff]
    %v2526 = vld [vmem:[#allocation2 + $0x88] sm:$0xff]
    %v2527 = vld [vmem:[#allocation2 + $0x90] sm:$0xff]
    %v2528 = vld [vmem:[#allocation2 + $0x98] sm:$0xff]
    %v2529 = vld [vmem:[#allocation2 + $0xa0] sm:$0xff]
    %v2530 = vld [vmem:[#allocation2 + $0xa8] sm:$0xff]
    %v2531 = vld [vmem:[#allocation2 + $0xb0] sm:$0xff]
    %v2532 = vld [vmem:[#allocation2 + $0xb8] sm:$0xff]
    %v2533 = vld [vmem:[#allocation2 + $0xc0] sm:$0xff]
    %v2534 = vld [vmem:[#allocation2 + $0xc8] sm:$0xff]
    %v2535 = vld [vmem:[#allocation2 + $0xd0] sm:$0xff]
    %v2536 = vld [vmem:[#allocation2 + $0xd8] sm:$0xff]
    %v2537 = vld [vmem:[#allocation2 + $0xe0] sm:$0xff]
    %v2538 = vld [vmem:[#allocation2 + $0xe8] sm:$0xff]
    %v2539 = vld [vmem:[#allocation2 + $0xf0] sm:$0xff]
    %v2540 = vld [vmem:[#allocation2 + $0xf8] sm:$0xff]
    %v2573 = vunpack.c.l.b16 %v2509
    %v2574 = vunpack.c.h.b16 %v2509
    %v2575 = vunpack.c.l.b16 %v2510
    %v2576 = vunpack.c.h.b16 %v2510
    %v2577 = vunpack.c.l.b16 %v2511
    %v2578 = vunpack.c.h.b16 %v2511
    %v2579 = vunpack.c.l.b16 %v2512
    %v2580 = vunpack.c.h.b16 %v2512
    %v2581 = vunpack.c.l.b16 %v2513
    %v2582 = vunpack.c.h.b16 %v2513
    %v2583 = vunpack.c.l.b16 %v2514
    %v2584 = vunpack.c.h.b16 %v2514
    %v2585 = vunpack.c.l.b16 %v2515
    %v2586 = vunpack.c.h.b16 %v2515
    %v2587 = vunpack.c.l.b16 %v2516
    %v2588 = vunpack.c.h.b16 %v2516
    %v2589 = vunpack.c.l.b16 %v2517
    %v2590 = vunpack.c.h.b16 %v2517
    %v2591 = vunpack.c.l.b16 %v2518
    %v2592 = vunpack.c.h.b16 %v2518
    %v2593 = vunpack.c.l.b16 %v2519
    %v2594 = vunpack.c.h.b16 %v2519
    %v2595 = vunpack.c.l.b16 %v2520
    %v2596 = vunpack.c.h.b16 %v2520
    %v2597 = vunpack.c.l.b16 %v2521
    %v2598 = vunpack.c.h.b16 %v2521
    %v2599 = vunpack.c.l.b16 %v2522
    %v2600 = vunpack.c.h.b16 %v2522
    %v2601 = vunpack.c.l.b16 %v2523
    %v2602 = vunpack.c.h.b16 %v2523
    %v2603 = vunpack.c.l.b16 %v2524
    %v2604 = vunpack.c.h.b16 %v2524
    %v2605 = vunpack.c.l.b16 %v2525
    %v2606 = vunpack.c.h.b16 %v2525
    %v2607 = vunpack.c.l.b16 %v2526
    %v2608 = vunpack.c.h.b16 %v2526
    %v2609 = vunpack.c.l.b16 %v2527
    %v2610 = vunpack.c.h.b16 %v2527
    %v2611 = vunpack.c.l.b16 %v2528
    %v2612 = vunpack.c.h.b16 %v2528
    %v2613 = vunpack.c.l.b16 %v2529
    %v2614 = vunpack.c.h.b16 %v2529
    %v2615 = vunpack.c.l.b16 %v2530
    %v2616 = vunpack.c.h.b16 %v2530
    %v2617 = vunpack.c.l.b16 %v2531
    %v2618 = vunpack.c.h.b16 %v2531
    %v2619 = vunpack.c.l.b16 %v2532
    %v2620 = vunpack.c.h.b16 %v2532
    %v2621 = vunpack.c.l.b16 %v2533
    %v2622 = vunpack.c.h.b16 %v2533
    %v2623 = vunpack.c.l.b16 %v2534
    %v2624 = vunpack.c.h.b16 %v2534
    %v2625 = vunpack.c.l.b16 %v2535
    %v2626 = vunpack.c.h.b16 %v2535
    %v2627 = vunpack.c.l.b16 %v2536
    %v2628 = vunpack.c.h.b16 %v2536
    %v2629 = vunpack.c.l.b16 %v2537
    %v2630 = vunpack.c.h.b16 %v2537
    %v2631 = vunpack.c.l.b16 %v2538
    %v2632 = vunpack.c.h.b16 %v2538
    %v2633 = vunpack.c.l.b16 %v2539
    %v2634 = vunpack.c.h.b16 %v2539
    %v2635 = vunpack.c.l.b16 %v2540
    %v2636 = vunpack.c.h.b16 %v2540
    %v2637 = vpack.c.b16 %v2577, %v2573
    %v2638 = vpack.c.b16 %v2578, %v2574
    %v2639 = vpack.c.b16 %v2579, %v2575
    %v2640 = vpack.c.b16 %v2580, %v2576
    %v2641 = vpack.c.b16 %v2585, %v2581
    %v2642 = vpack.c.b16 %v2586, %v2582
    %v2643 = vpack.c.b16 %v2587, %v2583
    %v2644 = vpack.c.b16 %v2588, %v2584
    %v2645 = vpack.c.b16 %v2593, %v2589
    %v2646 = vpack.c.b16 %v2594, %v2590
    %v2647 = vpack.c.b16 %v2595, %v2591
    %v2648 = vpack.c.b16 %v2596, %v2592
    %v2649 = vpack.c.b16 %v2601, %v2597
    %v2650 = vpack.c.b16 %v2602, %v2598
    %v2651 = vpack.c.b16 %v2603, %v2599
    %v2652 = vpack.c.b16 %v2604, %v2600
    %v2653 = vpack.c.b16 %v2609, %v2605
    %v2654 = vpack.c.b16 %v2610, %v2606
    %v2655 = vpack.c.b16 %v2611, %v2607
    %v2656 = vpack.c.b16 %v2612, %v2608
    %v2657 = vpack.c.b16 %v2617, %v2613
    %v2658 = vpack.c.b16 %v2618, %v2614
    %v2659 = vpack.c.b16 %v2619, %v2615
    %v2660 = vpack.c.b16 %v2620, %v2616
    %v2661 = vpack.c.b16 %v2625, %v2621
    %v2662 = vpack.c.b16 %v2626, %v2622
    %v2663 = vpack.c.b16 %v2627, %v2623
    %v2664 = vpack.c.b16 %v2628, %v2624
    %v2665 = vpack.c.b16 %v2633, %v2629
    %v2666 = vpack.c.b16 %v2634, %v2630
    %v2667 = vpack.c.b16 %v2635, %v2631
    %v2668 = vpack.c.b16 %v2636, %v2632
    %2701 = vmatprep.subr.bf16.mxu0 %v2666
    %2702 = vmatpush1.bf16.msra.mxu0 %v2665
    %2703 = vmatprep.subr.bf16.mxu0 %v2662
    %2704 = vmatpush1.bf16.msra.mxu0 %v2661
    %2705 = vmatprep.subr.bf16.mxu0 %v2658
    %2706 = vmatpush1.bf16.msra.mxu0 %v2657
    %2707 = vmatprep.subr.bf16.mxu0 %v2654
    %2708 = vmatpush1.bf16.msra.mxu0 %v2653
    %2709 = vmatprep.subr.bf16.mxu0 %v2650
    %2710 = vmatpush1.bf16.msra.mxu0 %v2649
    %2711 = vmatprep.subr.bf16.mxu0 %v2646
    %2712 = vmatpush1.bf16.msra.mxu0 %v2645
    %2713 = vmatprep.subr.bf16.mxu0 %v2642
    %2714 = vmatpush1.bf16.msra.mxu0 %v2641
    %2715 = vmatprep.subr.bf16.mxu0 %v2638
    %2716 = vmatpush1.bf16.msra.mxu0 %v2637
    %2717 = vmatprep.subr.bf16.mxu0 0
    %2718 = vmatpush2.bf16.msra.mxu0 0
    %2719 = vmatprep.subr.bf16.mxu0 0
    %2720 = vmatpush2.bf16.msra.mxu0 0
    %2721 = vmatprep.subr.bf16.mxu0 0
    %2722 = vmatpush2.bf16.msra.mxu0 0
    %2723 = vmatprep.subr.bf16.mxu0 0
    %2724 = vmatpush2.bf16.msra.mxu0 0
    %2725 = vmatprep.subr.bf16.mxu0 0
    %2726 = vmatpush2.bf16.msra.mxu0 0
    %2727 = vmatprep.subr.bf16.mxu0 0
    %2728 = vmatpush2.bf16.msra.mxu0 0
    %2729 = vmatprep.subr.bf16.mxu0 0
    %2730 = vmatpush2.bf16.msra.mxu0 0
    %2731 = vmatprep.subr.bf16.mxu0 0
    %2732 = vmatpush2.bf16.msra.mxu0 0
    %2733 = vmatprep.mubr.bf16.mxu0 0
    %2734 = vmatmul.mubr.bf16.gmra.mxu0 %v2508
    %v2735 = vpop.f32.mrf.mxu0
    %v2736 = vadd.f32 0.0, %v2735
    %v2737 = vpop.f32.mrf.mxu0
    %v2738 = vadd.f32 0.0, %v2737
    %v2739 = vpop.f32.mrf.mxu0
    %v2740 = vpop.f32.mrf.mxu0
    %2741 = vdwg.mxu0
    %2742 = vmatprep.subr.bf16.mxu0 %v2668
    %2743 = vmatpush1.bf16.msra.mxu0 %v2667
    %2744 = vmatprep.subr.bf16.mxu0 %v2664
    %2745 = vmatpush1.bf16.msra.mxu0 %v2663
    %2746 = vmatprep.subr.bf16.mxu0 %v2660
    %2747 = vmatpush1.bf16.msra.mxu0 %v2659
    %2748 = vmatprep.subr.bf16.mxu0 %v2656
    %2749 = vmatpush1.bf16.msra.mxu0 %v2655
    %2750 = vmatprep.subr.bf16.mxu0 %v2652
    %2751 = vmatpush1.bf16.msra.mxu0 %v2651
    %2752 = vmatprep.subr.bf16.mxu0 %v2648
    %2753 = vmatpush1.bf16.msra.mxu0 %v2647
    %2754 = vmatprep.subr.bf16.mxu0 %v2644
    %2755 = vmatpush1.bf16.msra.mxu0 %v2643
    %2756 = vmatprep.subr.bf16.mxu0 %v2640
    %2757 = vmatpush1.bf16.msra.mxu0 %v2639
    %2758 = vmatprep.subr.bf16.mxu0 0
    %2759 = vmatpush2.bf16.msra.mxu0 0
    %2760 = vmatprep.subr.bf16.mxu0 0
    %2761 = vmatpush2.bf16.msra.mxu0 0
    %2762 = vmatprep.subr.bf16.mxu0 0
    %2763 = vmatpush2.bf16.msra.mxu0 0
    %2764 = vmatprep.subr.bf16.mxu0 0
    %2765 = vmatpush2.bf16.msra.mxu0 0
    %2766 = vmatprep.subr.bf16.mxu0 0
    %2767 = vmatpush2.bf16.msra.mxu0 0
    %2768 = vmatprep.subr.bf16.mxu0 0
    %2769 = vmatpush2.bf16.msra.mxu0 0
    %2770 = vmatprep.subr.bf16.mxu0 0
    %2771 = vmatpush2.bf16.msra.mxu0 0
    %2772 = vmatprep.subr.bf16.mxu0 0
    %2773 = vmatpush2.bf16.msra.mxu0 0
    %2774 = vmatprep.mubr.bf16.mxu0 0
    %2775 = vmatmul.mubr.bf16.gmra.mxu0 %v2508
    %v2776 = vpop.f32.mrf.mxu0
    %v2777 = vadd.f32 0.0, %v2776
    %v2778 = vpop.f32.mrf.mxu0
    %v2779 = vadd.f32 0.0, %v2778
    %v2780 = vpop.f32.mrf.mxu0
    %v2781 = vpop.f32.mrf.mxu0
    %2782 = vdwg.mxu0
    %v2783 = vadd.f32 %v121, %v2736
    %v2784 = vadd.f32 %v125, %v2738
    %v2785 = vadd.f32 %v129, %v2777
    %v2786 = vadd.f32 %v133, %v2779
    %v2787 = vld [vmem:[#allocation3] sm:$0xff]
    %v2788 = vld [vmem:[#allocation3 + $0x8] sm:$0xff]
    %v2789 = vld [vmem:[#allocation3 + $0x10] sm:$0xff]
    %v2790 = vld [vmem:[#allocation3 + $0x18] sm:$0xff]
    %v2791 = vld [vmem:[#allocation3 + $0x20] sm:$0xff]
    %v2792 = vld [vmem:[#allocation3 + $0x28] sm:$0xff]
    %v2793 = vld [vmem:[#allocation3 + $0x30] sm:$0xff]
    %v2794 = vld [vmem:[#allocation3 + $0x38] sm:$0xff]
    %v2795 = vld [vmem:[#allocation3 + $0x40] sm:$0xff]
    %v2796 = vld [vmem:[#allocation3 + $0x48] sm:$0xff]
    %v2797 = vld [vmem:[#allocation3 + $0x50] sm:$0xff]
    %v2798 = vld [vmem:[#allocation3 + $0x58] sm:$0xff]
    %v2799 = vld [vmem:[#allocation3 + $0x60] sm:$0xff]
    %v2800 = vld [vmem:[#allocation3 + $0x68] sm:$0xff]
    %v2801 = vld [vmem:[#allocation3 + $0x70] sm:$0xff]
    %v2802 = vld [vmem:[#allocation3 + $0x78] sm:$0xff]
    %v2803 = vld [vmem:[#allocation3 + $0x80] sm:$0xff]
    %v2804 = vld [vmem:[#allocation3 + $0x88] sm:$0xff]
    %v2805 = vld [vmem:[#allocation3 + $0x90] sm:$0xff]
    %v2806 = vld [vmem:[#allocation3 + $0x98] sm:$0xff]
    %v2807 = vld [vmem:[#allocation3 + $0xa0] sm:$0xff]
    %v2808 = vld [vmem:[#allocation3 + $0xa8] sm:$0xff]
    %v2809 = vld [vmem:[#allocation3 + $0xb0] sm:$0xff]
    %v2810 = vld [vmem:[#allocation3 + $0xb8] sm:$0xff]
    %v2811 = vld [vmem:[#allocation3 + $0xc0] sm:$0xff]
    %v2812 = vld [vmem:[#allocation3 + $0xc8] sm:$0xff]
    %v2813 = vld [vmem:[#allocation3 + $0xd0] sm:$0xff]
    %v2814 = vld [vmem:[#allocation3 + $0xd8] sm:$0xff]
    %v2815 = vld [vmem:[#allocation3 + $0xe0] sm:$0xff]
    %v2816 = vld [vmem:[#allocation3 + $0xe8] sm:$0xff]
    %v2817 = vld [vmem:[#allocation3 + $0xf0] sm:$0xff]
    %v2818 = vld [vmem:[#allocation3 + $0xf8] sm:$0xff]
    %v2851 = vunpack.c.l.b16 %v2787
    %v2852 = vunpack.c.h.b16 %v2787
    %v2853 = vunpack.c.l.b16 %v2788
    %v2854 = vunpack.c.h.b16 %v2788
    %v2855 = vunpack.c.l.b16 %v2789
    %v2856 = vunpack.c.h.b16 %v2789
    %v2857 = vunpack.c.l.b16 %v2790
    %v2858 = vunpack.c.h.b16 %v2790
    %v2859 = vunpack.c.l.b16 %v2791
    %v2860 = vunpack.c.h.b16 %v2791
    %v2861 = vunpack.c.l.b16 %v2792
    %v2862 = vunpack.c.h.b16 %v2792
    %v2863 = vunpack.c.l.b16 %v2793
    %v2864 = vunpack.c.h.b16 %v2793
    %v2865 = vunpack.c.l.b16 %v2794
    %v2866 = vunpack.c.h.b16 %v2794
    %v2867 = vunpack.c.l.b16 %v2795
    %v2868 = vunpack.c.h.b16 %v2795
    %v2869 = vunpack.c.l.b16 %v2796
    %v2870 = vunpack.c.h.b16 %v2796
    %v2871 = vunpack.c.l.b16 %v2797
    %v2872 = vunpack.c.h.b16 %v2797
    %v2873 = vunpack.c.l.b16 %v2798
    %v2874 = vunpack.c.h.b16 %v2798
    %v2875 = vunpack.c.l.b16 %v2799
    %v2876 = vunpack.c.h.b16 %v2799
    %v2877 = vunpack.c.l.b16 %v2800
    %v2878 = vunpack.c.h.b16 %v2800
    %v2879 = vunpack.c.l.b16 %v2801
    %v2880 = vunpack.c.h.b16 %v2801
    %v2881 = vunpack.c.l.b16 %v2802
    %v2882 = vunpack.c.h.b16 %v2802
    %v2883 = vunpack.c.l.b16 %v2803
    %v2884 = vunpack.c.h.b16 %v2803
    %v2885 = vunpack.c.l.b16 %v2804
    %v2886 = vunpack.c.h.b16 %v2804
    %v2887 = vunpack.c.l.b16 %v2805
    %v2888 = vunpack.c.h.b16 %v2805
    %v2889 = vunpack.c.l.b16 %v2806
    %v2890 = vunpack.c.h.b16 %v2806
    %v2891 = vunpack.c.l.b16 %v2807
    %v2892 = vunpack.c.h.b16 %v2807
    %v2893 = vunpack.c.l.b16 %v2808
    %v2894 = vunpack.c.h.b16 %v2808
    %v2895 = vunpack.c.l.b16 %v2809
    %v2896 = vunpack.c.h.b16 %v2809
    %v2897 = vunpack.c.l.b16 %v2810
    %v2898 = vunpack.c.h.b16 %v2810
    %v2899 = vunpack.c.l.b16 %v2811
    %v2900 = vunpack.c.h.b16 %v2811
    %v2901 = vunpack.c.l.b16 %v2812
    %v2902 = vunpack.c.h.b16 %v2812
    %v2903 = vunpack.c.l.b16 %v2813
    %v2904 = vunpack.c.h.b16 %v2813
    %v2905 = vunpack.c.l.b16 %v2814
    %v2906 = vunpack.c.h.b16 %v2814
    %v2907 = vunpack.c.l.b16 %v2815
    %v2908 = vunpack.c.h.b16 %v2815
    %v2909 = vunpack.c.l.b16 %v2816
    %v2910 = vunpack.c.h.b16 %v2816
    %v2911 = vunpack.c.l.b16 %v2817
    %v2912 = vunpack.c.h.b16 %v2817
    %v2913 = vunpack.c.l.b16 %v2818
    %v2914 = vunpack.c.h.b16 %v2818
    %v2915 = vpack.c.b16 %v2855, %v2851
    %v2916 = vpack.c.b16 %v2856, %v2852
    %v2917 = vpack.c.b16 %v2857, %v2853
    %v2918 = vpack.c.b16 %v2858, %v2854
    %v2919 = vpack.c.b16 %v2863, %v2859
    %v2920 = vpack.c.b16 %v2864, %v2860
    %v2921 = vpack.c.b16 %v2865, %v2861
    %v2922 = vpack.c.b16 %v2866, %v2862
    %v2923 = vpack.c.b16 %v2871, %v2867
    %v2924 = vpack.c.b16 %v2872, %v2868
    %v2925 = vpack.c.b16 %v2873, %v2869
    %v2926 = vpack.c.b16 %v2874, %v2870
    %v2927 = vpack.c.b16 %v2879, %v2875
    %v2928 = vpack.c.b16 %v2880, %v2876
    %v2929 = vpack.c.b16 %v2881, %v2877
    %v2930 = vpack.c.b16 %v2882, %v2878
    %v2931 = vpack.c.b16 %v2887, %v2883
    %v2932 = vpack.c.b16 %v2888, %v2884
    %v2933 = vpack.c.b16 %v2889, %v2885
    %v2934 = vpack.c.b16 %v2890, %v2886
    %v2935 = vpack.c.b16 %v2895, %v2891
    %v2936 = vpack.c.b16 %v2896, %v2892
    %v2937 = vpack.c.b16 %v2897, %v2893
    %v2938 = vpack.c.b16 %v2898, %v2894
    %v2939 = vpack.c.b16 %v2903, %v2899
    %v2940 = vpack.c.b16 %v2904, %v2900
    %v2941 = vpack.c.b16 %v2905, %v2901
    %v2942 = vpack.c.b16 %v2906, %v2902
    %v2943 = vpack.c.b16 %v2911, %v2907
    %v2944 = vpack.c.b16 %v2912, %v2908
    %v2945 = vpack.c.b16 %v2913, %v2909
    %v2946 = vpack.c.b16 %v2914, %v2910
    %2979 = vmatprep.subr.bf16.mxu0 %v2944
    %2980 = vmatpush1.bf16.msra.mxu0 %v2943
    %2981 = vmatprep.subr.bf16.mxu0 %v2940
    %2982 = vmatpush1.bf16.msra.mxu0 %v2939
    %2983 = vmatprep.subr.bf16.mxu0 %v2936
    %2984 = vmatpush1.bf16.msra.mxu0 %v2935
    %2985 = vmatprep.subr.bf16.mxu0 %v2932
    %2986 = vmatpush1.bf16.msra.mxu0 %v2931
    %2987 = vmatprep.subr.bf16.mxu0 %v2928
    %2988 = vmatpush1.bf16.msra.mxu0 %v2927
    %2989 = vmatprep.subr.bf16.mxu0 %v2924
    %2990 = vmatpush1.bf16.msra.mxu0 %v2923
    %2991 = vmatprep.subr.bf16.mxu0 %v2920
    %2992 = vmatpush1.bf16.msra.mxu0 %v2919
    %2993 = vmatprep.subr.bf16.mxu0 %v2916
    %2994 = vmatpush1.bf16.msra.mxu0 %v2915
    %2995 = vmatprep.subr.bf16.mxu0 0
    %2996 = vmatpush2.bf16.msra.mxu0 0
    %2997 = vmatprep.subr.bf16.mxu0 0
    %2998 = vmatpush2.bf16.msra.mxu0 0
    %2999 = vmatprep.subr.bf16.mxu0 0
    %3000 = vmatpush2.bf16.msra.mxu0 0
    %3001 = vmatprep.subr.bf16.mxu0 0
    %3002 = vmatpush2.bf16.msra.mxu0 0
    %3003 = vmatprep.subr.bf16.mxu0 0
    %3004 = vmatpush2.bf16.msra.mxu0 0
    %3005 = vmatprep.subr.bf16.mxu0 0
    %3006 = vmatpush2.bf16.msra.mxu0 0
    %3007 = vmatprep.subr.bf16.mxu0 0
    %3008 = vmatpush2.bf16.msra.mxu0 0
    %3009 = vmatprep.subr.bf16.mxu0 0
    %3010 = vmatpush2.bf16.msra.mxu0 0
    %3011 = vmatprep.mubr.bf16.mxu0 0
    %3012 = vmatmul.mubr.bf16.gmra.mxu0 %v2504
    %v3013 = vpop.f32.mrf.mxu0
    %v3014 = vadd.f32 0.0, %v3013
    %v3015 = vpop.f32.mrf.mxu0
    %v3016 = vadd.f32 0.0, %v3015
    %v3017 = vpop.f32.mrf.mxu0
    %v3018 = vpop.f32.mrf.mxu0
    %3019 = vdwg.mxu0
    %3020 = vmatprep.subr.bf16.mxu0 %v2946
    %3021 = vmatpush1.bf16.msra.mxu0 %v2945
    %3022 = vmatprep.subr.bf16.mxu0 %v2942
    %3023 = vmatpush1.bf16.msra.mxu0 %v2941
    %3024 = vmatprep.subr.bf16.mxu0 %v2938
    %3025 = vmatpush1.bf16.msra.mxu0 %v2937
    %3026 = vmatprep.subr.bf16.mxu0 %v2934
    %3027 = vmatpush1.bf16.msra.mxu0 %v2933
    %3028 = vmatprep.subr.bf16.mxu0 %v2930
    %3029 = vmatpush1.bf16.msra.mxu0 %v2929
    %3030 = vmatprep.subr.bf16.mxu0 %v2926
    %3031 = vmatpush1.bf16.msra.mxu0 %v2925
    %3032 = vmatprep.subr.bf16.mxu0 %v2922
    %3033 = vmatpush1.bf16.msra.mxu0 %v2921
    %3034 = vmatprep.subr.bf16.mxu0 %v2918
    %3035 = vmatpush1.bf16.msra.mxu0 %v2917
    %3036 = vmatprep.subr.bf16.mxu0 0
    %3037 = vmatpush2.bf16.msra.mxu0 0
    %3038 = vmatprep.subr.bf16.mxu0 0
    %3039 = vmatpush2.bf16.msra.mxu0 0
    %3040 = vmatprep.subr.bf16.mxu0 0
    %3041 = vmatpush2.bf16.msra.mxu0 0
    %3042 = vmatprep.subr.bf16.mxu0 0
    %3043 = vmatpush2.bf16.msra.mxu0 0
    %3044 = vmatprep.subr.bf16.mxu0 0
    %3045 = vmatpush2.bf16.msra.mxu0 0
    %3046 = vmatprep.subr.bf16.mxu0 0
    %3047 = vmatpush2.bf16.msra.mxu0 0
    %3048 = vmatprep.subr.bf16.mxu0 0
    %3049 = vmatpush2.bf16.msra.mxu0 0
    %3050 = vmatprep.subr.bf16.mxu0 0
    %3051 = vmatpush2.bf16.msra.mxu0 0
    %3052 = vmatprep.mubr.bf16.mxu0 0
    %3053 = vmatmul.mubr.bf16.gmra.mxu0 %v2504
    %v3054 = vpop.f32.mrf.mxu0
    %v3055 = vadd.f32 0.0, %v3054
    %v3056 = vpop.f32.mrf.mxu0
    %v3057 = vadd.f32 0.0, %v3056
    %v3058 = vpop.f32.mrf.mxu0
    %v3059 = vpop.f32.mrf.mxu0
    %3060 = vdwg.mxu0
    %v3061 = vadd.f32 %v2783, %v3014
    %v3062 = vadd.f32 %v2784, %v3016
    %v3063 = vadd.f32 %v2785, %v3055
    %v3064 = vadd.f32 %v2786, %v3057
    %v3065 = vxor.u32 %v3061, 2147483648
    %v3066 = vxor.u32 %v3062, 2147483648
    %v3067 = vxor.u32 %v3063, 2147483648
    %v3068 = vxor.u32 %v3064, 2147483648
    %v3069 = vmul.f32 %v3065, 1.442695
    %v3070 = vpow.pop %v3069
    %v3071 = vmul.f32 %v3066, 1.442695
    %v3072 = vpow.pop %v3071
    %v3073 = vmul.f32 %v3067, 1.442695
    %v3074 = vpow.pop %v3073
    %v3075 = vmul.f32 %v3068, 1.442695
    %v3076 = vpow.pop %v3075
    %v3077 = vadd.f32 %v3070, 1.0
    %v3078 = vadd.f32 %v3072, 1.0
    %v3079 = vadd.f32 %v3074, 1.0
    %v3080 = vadd.f32 %v3076, 1.0
    %v3081 = vrcp.pop %v3077
    %v3082 = vmul.f32 1.0, %v3081
    %v3083 = vrcp.pop %v3078
    %v3084 = vmul.f32 1.0, %v3083
    %v3085 = vrcp.pop %v3079
    %v3086 = vmul.f32 1.0, %v3085
    %v3087 = vrcp.pop %v3080
    %v3088 = vmul.f32 1.0, %v3087
    %v3089 = vmul.f32 %v3086, 2.0
    %v3090 = vsub.f32 %v3089, 1.0
    %v3091 = vmul.f32 %v3084, %v2501
    %v3092 = vmul.f32 %v3082, %v3090
    %v3093 = vadd.f32 %v3091, %v3092
    %v3094 = vtanh.pop %v3093
    %v3095 = vmul.f32 %v3088, %v3094
    %v3096 = vpack.c.bf16 %v3095, %v3095
    %s3097 = scalar_lea.vmem [#allocation11], 16
    %3098 = vst [vmem:[%s3097] sm:$0xf] %v3096
    %s3099 = scalar_lea.vmem [#allocation8], 20
    %v3100 = vld [vmem:[%s3099] sm:$0xf]
    %v3101 = vld [vmem:[#allocation2] sm:$0xff]
    %v3102 = vld [vmem:[#allocation2 + $0x8] sm:$0xff]
    %v3103 = vld [vmem:[#allocation2 + $0x10] sm:$0xff]
    %v3104 = vld [vmem:[#allocation2 + $0x18] sm:$0xff]
    %v3105 = vld [vmem:[#allocation2 + $0x20] sm:$0xff]
    %v3106 = vld [vmem:[#allocation2 + $0x28] sm:$0xff]
    %v3107 = vld [vmem:[#allocation2 + $0x30] sm:$0xff]
    %v3108 = vld [vmem:[#allocation2 + $0x38] sm:$0xff]
    %v3109 = vld [vmem:[#allocation2 + $0x40] sm:$0xff]
    %v3110 = vld [vmem:[#allocation2 + $0x48] sm:$0xff]
    %v3111 = vld [vmem:[#allocation2 + $0x50] sm:$0xff]
    %v3112 = vld [vmem:[#allocation2 + $0x58] sm:$0xff]
    %v3113 = vld [vmem:[#allocation2 + $0x60] sm:$0xff]
    %v3114 = vld [vmem:[#allocation2 + $0x68] sm:$0xff]
    %v3115 = vld [vmem:[#allocation2 + $0x70] sm:$0xff]
    %v3116 = vld [vmem:[#allocation2 + $0x78] sm:$0xff]
    %v3117 = vld [vmem:[#allocation2 + $0x80] sm:$0xff]
    %v3118 = vld [vmem:[#allocation2 + $0x88] sm:$0xff]
    %v3119 = vld [vmem:[#allocation2 + $0x90] sm:$0xff]
    %v3120 = vld [vmem:[#allocation2 + $0x98] sm:$0xff]
    %v3121 = vld [vmem:[#allocation2 + $0xa0] sm:$0xff]
    %v3122 = vld [vmem:[#allocation2 + $0xa8] sm:$0xff]
    %v3123 = vld [vmem:[#allocation2 + $0xb0] sm:$0xff]
    %v3124 = vld [vmem:[#allocation2 + $0xb8] sm:$0xff]
    %v3125 = vld [vmem:[#allocation2 + $0xc0] sm:$0xff]
    %v3126 = vld [vmem:[#allocation2 + $0xc8] sm:$0xff]
    %v3127 = vld [vmem:[#allocation2 + $0xd0] sm:$0xff]
    %v3128 = vld [vmem:[#allocation2 + $0xd8] sm:$0xff]
    %v3129 = vld [vmem:[#allocation2 + $0xe0] sm:$0xff]
    %v3130 = vld [vmem:[#allocation2 + $0xe8] sm:$0xff]
    %v3131 = vld [vmem:[#allocation2 + $0xf0] sm:$0xff]
    %v3132 = vld [vmem:[#allocation2 + $0xf8] sm:$0xff]
    %v3165 = vunpack.c.l.b16 %v3101
    %v3166 = vunpack.c.h.b16 %v3101
    %v3167 = vunpack.c.l.b16 %v3102
    %v3168 = vunpack.c.h.b16 %v3102
    %v3169 = vunpack.c.l.b16 %v3103
    %v3170 = vunpack.c.h.b16 %v3103
    %v3171 = vunpack.c.l.b16 %v3104
    %v3172 = vunpack.c.h.b16 %v3104
    %v3173 = vunpack.c.l.b16 %v3105
    %v3174 = vunpack.c.h.b16 %v3105
    %v3175 = vunpack.c.l.b16 %v3106
    %v3176 = vunpack.c.h.b16 %v3106
    %v3177 = vunpack.c.l.b16 %v3107
    %v3178 = vunpack.c.h.b16 %v3107
    %v3179 = vunpack.c.l.b16 %v3108
    %v3180 = vunpack.c.h.b16 %v3108
    %v3181 = vunpack.c.l.b16 %v3109
    %v3182 = vunpack.c.h.b16 %v3109
    %v3183 = vunpack.c.l.b16 %v3110
    %v3184 = vunpack.c.h.b16 %v3110
    %v3185 = vunpack.c.l.b16 %v3111
    %v3186 = vunpack.c.h.b16 %v3111
    %v3187 = vunpack.c.l.b16 %v3112
    %v3188 = vunpack.c.h.b16 %v3112
    %v3189 = vunpack.c.l.b16 %v3113
    %v3190 = vunpack.c.h.b16 %v3113
    %v3191 = vunpack.c.l.b16 %v3114
    %v3192 = vunpack.c.h.b16 %v3114
    %v3193 = vunpack.c.l.b16 %v3115
    %v3194 = vunpack.c.h.b16 %v3115
    %v3195 = vunpack.c.l.b16 %v3116
    %v3196 = vunpack.c.h.b16 %v3116
    %v3197 = vunpack.c.l.b16 %v3117
    %v3198 = vunpack.c.h.b16 %v3117
    %v3199 = vunpack.c.l.b16 %v3118
    %v3200 = vunpack.c.h.b16 %v3118
    %v3201 = vunpack.c.l.b16 %v3119
    %v3202 = vunpack.c.h.b16 %v3119
    %v3203 = vunpack.c.l.b16 %v3120
    %v3204 = vunpack.c.h.b16 %v3120
    %v3205 = vunpack.c.l.b16 %v3121
    %v3206 = vunpack.c.h.b16 %v3121
    %v3207 = vunpack.c.l.b16 %v3122
    %v3208 = vunpack.c.h.b16 %v3122
    %v3209 = vunpack.c.l.b16 %v3123
    %v3210 = vunpack.c.h.b16 %v3123
    %v3211 = vunpack.c.l.b16 %v3124
    %v3212 = vunpack.c.h.b16 %v3124
    %v3213 = vunpack.c.l.b16 %v3125
    %v3214 = vunpack.c.h.b16 %v3125
    %v3215 = vunpack.c.l.b16 %v3126
    %v3216 = vunpack.c.h.b16 %v3126
    %v3217 = vunpack.c.l.b16 %v3127
    %v3218 = vunpack.c.h.b16 %v3127
    %v3219 = vunpack.c.l.b16 %v3128
    %v3220 = vunpack.c.h.b16 %v3128
    %v3221 = vunpack.c.l.b16 %v3129
    %v3222 = vunpack.c.h.b16 %v3129
    %v3223 = vunpack.c.l.b16 %v3130
    %v3224 = vunpack.c.h.b16 %v3130
    %v3225 = vunpack.c.l.b16 %v3131
    %v3226 = vunpack.c.h.b16 %v3131
    %v3227 = vunpack.c.l.b16 %v3132
    %v3228 = vunpack.c.h.b16 %v3132
    %v3229 = vpack.c.b16 %v3169, %v3165
    %v3230 = vpack.c.b16 %v3170, %v3166
    %v3231 = vpack.c.b16 %v3171, %v3167
    %v3232 = vpack.c.b16 %v3172, %v3168
    %v3233 = vpack.c.b16 %v3177, %v3173
    %v3234 = vpack.c.b16 %v3178, %v3174
    %v3235 = vpack.c.b16 %v3179, %v3175
    %v3236 = vpack.c.b16 %v3180, %v3176
    %v3237 = vpack.c.b16 %v3185, %v3181
    %v3238 = vpack.c.b16 %v3186, %v3182
    %v3239 = vpack.c.b16 %v3187, %v3183
    %v3240 = vpack.c.b16 %v3188, %v3184
    %v3241 = vpack.c.b16 %v3193, %v3189
    %v3242 = vpack.c.b16 %v3194, %v3190
    %v3243 = vpack.c.b16 %v3195, %v3191
    %v3244 = vpack.c.b16 %v3196, %v3192
    %v3245 = vpack.c.b16 %v3201, %v3197
    %v3246 = vpack.c.b16 %v3202, %v3198
    %v3247 = vpack.c.b16 %v3203, %v3199
    %v3248 = vpack.c.b16 %v3204, %v3200
    %v3249 = vpack.c.b16 %v3209, %v3205
    %v3250 = vpack.c.b16 %v3210, %v3206
    %v3251 = vpack.c.b16 %v3211, %v3207
    %v3252 = vpack.c.b16 %v3212, %v3208
    %v3253 = vpack.c.b16 %v3217, %v3213
    %v3254 = vpack.c.b16 %v3218, %v3214
    %v3255 = vpack.c.b16 %v3219, %v3215
    %v3256 = vpack.c.b16 %v3220, %v3216
    %v3257 = vpack.c.b16 %v3225, %v3221
    %v3258 = vpack.c.b16 %v3226, %v3222
    %v3259 = vpack.c.b16 %v3227, %v3223
    %v3260 = vpack.c.b16 %v3228, %v3224
    %3293 = vmatprep.subr.bf16.mxu0 %v3258
    %3294 = vmatpush1.bf16.msra.mxu0 %v3257
    %3295 = vmatprep.subr.bf16.mxu0 %v3254
    %3296 = vmatpush1.bf16.msra.mxu0 %v3253
    %3297 = vmatprep.subr.bf16.mxu0 %v3250
    %3298 = vmatpush1.bf16.msra.mxu0 %v3249
    %3299 = vmatprep.subr.bf16.mxu0 %v3246
    %3300 = vmatpush1.bf16.msra.mxu0 %v3245
    %3301 = vmatprep.subr.bf16.mxu0 %v3242
    %3302 = vmatpush1.bf16.msra.mxu0 %v3241
    %3303 = vmatprep.subr.bf16.mxu0 %v3238
    %3304 = vmatpush1.bf16.msra.mxu0 %v3237
    %3305 = vmatprep.subr.bf16.mxu0 %v3234
    %3306 = vmatpush1.bf16.msra.mxu0 %v3233
    %3307 = vmatprep.subr.bf16.mxu0 %v3230
    %3308 = vmatpush1.bf16.msra.mxu0 %v3229
    %3309 = vmatprep.subr.bf16.mxu0 0
    %3310 = vmatpush2.bf16.msra.mxu0 0
    %3311 = vmatprep.subr.bf16.mxu0 0
    %3312 = vmatpush2.bf16.msra.mxu0 0
    %3313 = vmatprep.subr.bf16.mxu0 0
    %3314 = vmatpush2.bf16.msra.mxu0 0
    %3315 = vmatprep.subr.bf16.mxu0 0
    %3316 = vmatpush2.bf16.msra.mxu0 0
    %3317 = vmatprep.subr.bf16.mxu0 0
    %3318 = vmatpush2.bf16.msra.mxu0 0
    %3319 = vmatprep.subr.bf16.mxu0 0
    %3320 = vmatpush2.bf16.msra.mxu0 0
    %3321 = vmatprep.subr.bf16.mxu0 0
    %3322 = vmatpush2.bf16.msra.mxu0 0
    %3323 = vmatprep.subr.bf16.mxu0 0
    %3324 = vmatpush2.bf16.msra.mxu0 0
    %3325 = vmatprep.mubr.bf16.mxu0 0
    %3326 = vmatmul.mubr.bf16.gmra.mxu0 %v3100
    %v3327 = vpop.f32.mrf.mxu0
    %v3328 = vadd.f32 0.0, %v3327
    %v3329 = vpop.f32.mrf.mxu0
    %v3330 = vadd.f32 0.0, %v3329
    %v3331 = vpop.f32.mrf.mxu0
    %v3332 = vpop.f32.mrf.mxu0
    %3333 = vdwg.mxu0
    %3334 = vmatprep.subr.bf16.mxu0 %v3260
    %3335 = vmatpush1.bf16.msra.mxu0 %v3259
    %3336 = vmatprep.subr.bf16.mxu0 %v3256
    %3337 = vmatpush1.bf16.msra.mxu0 %v3255
    %3338 = vmatprep.subr.bf16.mxu0 %v3252
    %3339 = vmatpush1.bf16.msra.mxu0 %v3251
    %3340 = vmatprep.subr.bf16.mxu0 %v3248
    %3341 = vmatpush1.bf16.msra.mxu0 %v3247
    %3342 = vmatprep.subr.bf16.mxu0 %v3244
    %3343 = vmatpush1.bf16.msra.mxu0 %v3243
    %3344 = vmatprep.subr.bf16.mxu0 %v3240
    %3345 = vmatpush1.bf16.msra.mxu0 %v3239
    %3346 = vmatprep.subr.bf16.mxu0 %v3236
    %3347 = vmatpush1.bf16.msra.mxu0 %v3235
    %3348 = vmatprep.subr.bf16.mxu0 %v3232
    %3349 = vmatpush1.bf16.msra.mxu0 %v3231
    %3350 = vmatprep.subr.bf16.mxu0 0
    %3351 = vmatpush2.bf16.msra.mxu0 0
    %3352 = vmatprep.subr.bf16.mxu0 0
    %3353 = vmatpush2.bf16.msra.mxu0 0
    %3354 = vmatprep.subr.bf16.mxu0 0
    %3355 = vmatpush2.bf16.msra.mxu0 0
    %3356 = vmatprep.subr.bf16.mxu0 0
    %3357 = vmatpush2.bf16.msra.mxu0 0
    %3358 = vmatprep.subr.bf16.mxu0 0
    %3359 = vmatpush2.bf16.msra.mxu0 0
    %3360 = vmatprep.subr.bf16.mxu0 0
    %3361 = vmatpush2.bf16.msra.mxu0 0
    %3362 = vmatprep.subr.bf16.mxu0 0
    %3363 = vmatpush2.bf16.msra.mxu0 0
    %3364 = vmatprep.subr.bf16.mxu0 0
    %3365 = vmatpush2.bf16.msra.mxu0 0
    %3366 = vmatprep.mubr.bf16.mxu0 0
    %3367 = vmatmul.mubr.bf16.gmra.mxu0 %v3100
    %v3368 = vpop.f32.mrf.mxu0
    %v3369 = vadd.f32 0.0, %v3368
    %v3370 = vpop.f32.mrf.mxu0
    %v3371 = vadd.f32 0.0, %v3370
    %v3372 = vpop.f32.mrf.mxu0
    %v3373 = vpop.f32.mrf.mxu0
    %3374 = vdwg.mxu0
    %v3375 = vadd.f32 %v121, %v3328
    %v3376 = vadd.f32 %v125, %v3330
    %v3377 = vadd.f32 %v129, %v3369
    %v3378 = vadd.f32 %v133, %v3371
    %v3379 = vld [vmem:[#allocation3] sm:$0xff]
    %v3380 = vld [vmem:[#allocation3 + $0x8] sm:$0xff]
    %v3381 = vld [vmem:[#allocation3 + $0x10] sm:$0xff]
    %v3382 = vld [vmem:[#allocation3 + $0x18] sm:$0xff]
    %v3383 = vld [vmem:[#allocation3 + $0x20] sm:$0xff]
    %v3384 = vld [vmem:[#allocation3 + $0x28] sm:$0xff]
    %v3385 = vld [vmem:[#allocation3 + $0x30] sm:$0xff]
    %v3386 = vld [vmem:[#allocation3 + $0x38] sm:$0xff]
    %v3387 = vld [vmem:[#allocation3 + $0x40] sm:$0xff]
    %v3388 = vld [vmem:[#allocation3 + $0x48] sm:$0xff]
    %v3389 = vld [vmem:[#allocation3 + $0x50] sm:$0xff]
    %v3390 = vld [vmem:[#allocation3 + $0x58] sm:$0xff]
    %v3391 = vld [vmem:[#allocation3 + $0x60] sm:$0xff]
    %v3392 = vld [vmem:[#allocation3 + $0x68] sm:$0xff]
    %v3393 = vld [vmem:[#allocation3 + $0x70] sm:$0xff]
    %v3394 = vld [vmem:[#allocation3 + $0x78] sm:$0xff]
    %v3395 = vld [vmem:[#allocation3 + $0x80] sm:$0xff]
    %v3396 = vld [vmem:[#allocation3 + $0x88] sm:$0xff]
    %v3397 = vld [vmem:[#allocation3 + $0x90] sm:$0xff]
    %v3398 = vld [vmem:[#allocation3 + $0x98] sm:$0xff]
    %v3399 = vld [vmem:[#allocation3 + $0xa0] sm:$0xff]
    %v3400 = vld [vmem:[#allocation3 + $0xa8] sm:$0xff]
    %v3401 = vld [vmem:[#allocation3 + $0xb0] sm:$0xff]
    %v3402 = vld [vmem:[#allocation3 + $0xb8] sm:$0xff]
    %v3403 = vld [vmem:[#allocation3 + $0xc0] sm:$0xff]
    %v3404 = vld [vmem:[#allocation3 + $0xc8] sm:$0xff]
    %v3405 = vld [vmem:[#allocation3 + $0xd0] sm:$0xff]
    %v3406 = vld [vmem:[#allocation3 + $0xd8] sm:$0xff]
    %v3407 = vld [vmem:[#allocation3 + $0xe0] sm:$0xff]
    %v3408 = vld [vmem:[#allocation3 + $0xe8] sm:$0xff]
    %v3409 = vld [vmem:[#allocation3 + $0xf0] sm:$0xff]
    %v3410 = vld [vmem:[#allocation3 + $0xf8] sm:$0xff]
    %v3443 = vunpack.c.l.b16 %v3379
    %v3444 = vunpack.c.h.b16 %v3379
    %v3445 = vunpack.c.l.b16 %v3380
    %v3446 = vunpack.c.h.b16 %v3380
    %v3447 = vunpack.c.l.b16 %v3381
    %v3448 = vunpack.c.h.b16 %v3381
    %v3449 = vunpack.c.l.b16 %v3382
    %v3450 = vunpack.c.h.b16 %v3382
    %v3451 = vunpack.c.l.b16 %v3383
    %v3452 = vunpack.c.h.b16 %v3383
    %v3453 = vunpack.c.l.b16 %v3384
    %v3454 = vunpack.c.h.b16 %v3384
    %v3455 = vunpack.c.l.b16 %v3385
    %v3456 = vunpack.c.h.b16 %v3385
    %v3457 = vunpack.c.l.b16 %v3386
    %v3458 = vunpack.c.h.b16 %v3386
    %v3459 = vunpack.c.l.b16 %v3387
    %v3460 = vunpack.c.h.b16 %v3387
    %v3461 = vunpack.c.l.b16 %v3388
    %v3462 = vunpack.c.h.b16 %v3388
    %v3463 = vunpack.c.l.b16 %v3389
    %v3464 = vunpack.c.h.b16 %v3389
    %v3465 = vunpack.c.l.b16 %v3390
    %v3466 = vunpack.c.h.b16 %v3390
    %v3467 = vunpack.c.l.b16 %v3391
    %v3468 = vunpack.c.h.b16 %v3391
    %v3469 = vunpack.c.l.b16 %v3392
    %v3470 = vunpack.c.h.b16 %v3392
    %v3471 = vunpack.c.l.b16 %v3393
    %v3472 = vunpack.c.h.b16 %v3393
    %v3473 = vunpack.c.l.b16 %v3394
    %v3474 = vunpack.c.h.b16 %v3394
    %v3475 = vunpack.c.l.b16 %v3395
    %v3476 = vunpack.c.h.b16 %v3395
    %v3477 = vunpack.c.l.b16 %v3396
    %v3478 = vunpack.c.h.b16 %v3396
    %v3479 = vunpack.c.l.b16 %v3397
    %v3480 = vunpack.c.h.b16 %v3397
    %v3481 = vunpack.c.l.b16 %v3398
    %v3482 = vunpack.c.h.b16 %v3398
    %v3483 = vunpack.c.l.b16 %v3399
    %v3484 = vunpack.c.h.b16 %v3399
    %v3485 = vunpack.c.l.b16 %v3400
    %v3486 = vunpack.c.h.b16 %v3400
    %v3487 = vunpack.c.l.b16 %v3401
    %v3488 = vunpack.c.h.b16 %v3401
    %v3489 = vunpack.c.l.b16 %v3402
    %v3490 = vunpack.c.h.b16 %v3402
    %v3491 = vunpack.c.l.b16 %v3403
    %v3492 = vunpack.c.h.b16 %v3403
    %v3493 = vunpack.c.l.b16 %v3404
    %v3494 = vunpack.c.h.b16 %v3404
    %v3495 = vunpack.c.l.b16 %v3405
    %v3496 = vunpack.c.h.b16 %v3405
    %v3497 = vunpack.c.l.b16 %v3406
    %v3498 = vunpack.c.h.b16 %v3406
    %v3499 = vunpack.c.l.b16 %v3407
    %v3500 = vunpack.c.h.b16 %v3407
    %v3501 = vunpack.c.l.b16 %v3408
    %v3502 = vunpack.c.h.b16 %v3408
    %v3503 = vunpack.c.l.b16 %v3409
    %v3504 = vunpack.c.h.b16 %v3409
    %v3505 = vunpack.c.l.b16 %v3410
    %v3506 = vunpack.c.h.b16 %v3410
    %v3507 = vpack.c.b16 %v3447, %v3443
    %v3508 = vpack.c.b16 %v3448, %v3444
    %v3509 = vpack.c.b16 %v3449, %v3445
    %v3510 = vpack.c.b16 %v3450, %v3446
    %v3511 = vpack.c.b16 %v3455, %v3451
    %v3512 = vpack.c.b16 %v3456, %v3452
    %v3513 = vpack.c.b16 %v3457, %v3453
    %v3514 = vpack.c.b16 %v3458, %v3454
    %v3515 = vpack.c.b16 %v3463, %v3459
    %v3516 = vpack.c.b16 %v3464, %v3460
    %v3517 = vpack.c.b16 %v3465, %v3461
    %v3518 = vpack.c.b16 %v3466, %v3462
    %v3519 = vpack.c.b16 %v3471, %v3467
    %v3520 = vpack.c.b16 %v3472, %v3468
    %v3521 = vpack.c.b16 %v3473, %v3469
    %v3522 = vpack.c.b16 %v3474, %v3470
    %v3523 = vpack.c.b16 %v3479, %v3475
    %v3524 = vpack.c.b16 %v3480, %v3476
    %v3525 = vpack.c.b16 %v3481, %v3477
    %v3526 = vpack.c.b16 %v3482, %v3478
    %v3527 = vpack.c.b16 %v3487, %v3483
    %v3528 = vpack.c.b16 %v3488, %v3484
    %v3529 = vpack.c.b16 %v3489, %v3485
    %v3530 = vpack.c.b16 %v3490, %v3486
    %v3531 = vpack.c.b16 %v3495, %v3491
    %v3532 = vpack.c.b16 %v3496, %v3492
    %v3533 = vpack.c.b16 %v3497, %v3493
    %v3534 = vpack.c.b16 %v3498, %v3494
    %v3535 = vpack.c.b16 %v3503, %v3499
    %v3536 = vpack.c.b16 %v3504, %v3500
    %v3537 = vpack.c.b16 %v3505, %v3501
    %v3538 = vpack.c.b16 %v3506, %v3502
    %3571 = vmatprep.subr.bf16.mxu0 %v3536
    %3572 = vmatpush1.bf16.msra.mxu0 %v3535
    %3573 = vmatprep.subr.bf16.mxu0 %v3532
    %3574 = vmatpush1.bf16.msra.mxu0 %v3531
    %3575 = vmatprep.subr.bf16.mxu0 %v3528
    %3576 = vmatpush1.bf16.msra.mxu0 %v3527
    %3577 = vmatprep.subr.bf16.mxu0 %v3524
    %3578 = vmatpush1.bf16.msra.mxu0 %v3523
    %3579 = vmatprep.subr.bf16.mxu0 %v3520
    %3580 = vmatpush1.bf16.msra.mxu0 %v3519
    %3581 = vmatprep.subr.bf16.mxu0 %v3516
    %3582 = vmatpush1.bf16.msra.mxu0 %v3515
    %3583 = vmatprep.subr.bf16.mxu0 %v3512
    %3584 = vmatpush1.bf16.msra.mxu0 %v3511
    %3585 = vmatprep.subr.bf16.mxu0 %v3508
    %3586 = vmatpush1.bf16.msra.mxu0 %v3507
    %3587 = vmatprep.subr.bf16.mxu0 0
    %3588 = vmatpush2.bf16.msra.mxu0 0
    %3589 = vmatprep.subr.bf16.mxu0 0
    %3590 = vmatpush2.bf16.msra.mxu0 0
    %3591 = vmatprep.subr.bf16.mxu0 0
    %3592 = vmatpush2.bf16.msra.mxu0 0
    %3593 = vmatprep.subr.bf16.mxu0 0
    %3594 = vmatpush2.bf16.msra.mxu0 0
    %3595 = vmatprep.subr.bf16.mxu0 0
    %3596 = vmatpush2.bf16.msra.mxu0 0
    %3597 = vmatprep.subr.bf16.mxu0 0
    %3598 = vmatpush2.bf16.msra.mxu0 0
    %3599 = vmatprep.subr.bf16.mxu0 0
    %3600 = vmatpush2.bf16.msra.mxu0 0
    %3601 = vmatprep.subr.bf16.mxu0 0
    %3602 = vmatpush2.bf16.msra.mxu0 0
    %3603 = vmatprep.mubr.bf16.mxu0 0
    %3604 = vmatmul.mubr.bf16.gmra.mxu0 %v3096
    %v3605 = vpop.f32.mrf.mxu0
    %v3606 = vadd.f32 0.0, %v3605
    %v3607 = vpop.f32.mrf.mxu0
    %v3608 = vadd.f32 0.0, %v3607
    %v3609 = vpop.f32.mrf.mxu0
    %v3610 = vpop.f32.mrf.mxu0
    %3611 = vdwg.mxu0
    %3612 = vmatprep.subr.bf16.mxu0 %v3538
    %3613 = vmatpush1.bf16.msra.mxu0 %v3537
    %3614 = vmatprep.subr.bf16.mxu0 %v3534
    %3615 = vmatpush1.bf16.msra.mxu0 %v3533
    %3616 = vmatprep.subr.bf16.mxu0 %v3530
    %3617 = vmatpush1.bf16.msra.mxu0 %v3529
    %3618 = vmatprep.subr.bf16.mxu0 %v3526
    %3619 = vmatpush1.bf16.msra.mxu0 %v3525
    %3620 = vmatprep.subr.bf16.mxu0 %v3522
    %3621 = vmatpush1.bf16.msra.mxu0 %v3521
    %3622 = vmatprep.subr.bf16.mxu0 %v3518
    %3623 = vmatpush1.bf16.msra.mxu0 %v3517
    %3624 = vmatprep.subr.bf16.mxu0 %v3514
    %3625 = vmatpush1.bf16.msra.mxu0 %v3513
    %3626 = vmatprep.subr.bf16.mxu0 %v3510
    %3627 = vmatpush1.bf16.msra.mxu0 %v3509
    %3628 = vmatprep.subr.bf16.mxu0 0
    %3629 = vmatpush2.bf16.msra.mxu0 0
    %3630 = vmatprep.subr.bf16.mxu0 0
    %3631 = vmatpush2.bf16.msra.mxu0 0
    %3632 = vmatprep.subr.bf16.mxu0 0
    %3633 = vmatpush2.bf16.msra.mxu0 0
    %3634 = vmatprep.subr.bf16.mxu0 0
    %3635 = vmatpush2.bf16.msra.mxu0 0
    %3636 = vmatprep.subr.bf16.mxu0 0
    %3637 = vmatpush2.bf16.msra.mxu0 0
    %3638 = vmatprep.subr.bf16.mxu0 0
    %3639 = vmatpush2.bf16.msra.mxu0 0
    %3640 = vmatprep.subr.bf16.mxu0 0
    %3641 = vmatpush2.bf16.msra.mxu0 0
    %3642 = vmatprep.subr.bf16.mxu0 0
    %3643 = vmatpush2.bf16.msra.mxu0 0
    %3644 = vmatprep.mubr.bf16.mxu0 0
    %3645 = vmatmul.mubr.bf16.gmra.mxu0 %v3096
    %v3646 = vpop.f32.mrf.mxu0
    %v3647 = vadd.f32 0.0, %v3646
    %v3648 = vpop.f32.mrf.mxu0
    %v3649 = vadd.f32 0.0, %v3648
    %v3650 = vpop.f32.mrf.mxu0
    %v3651 = vpop.f32.mrf.mxu0
    %3652 = vdwg.mxu0
    %v3653 = vadd.f32 %v3375, %v3606
    %v3654 = vadd.f32 %v3376, %v3608
    %v3655 = vadd.f32 %v3377, %v3647
    %v3656 = vadd.f32 %v3378, %v3649
    %v3657 = vxor.u32 %v3653, 2147483648
    %v3658 = vxor.u32 %v3654, 2147483648
    %v3659 = vxor.u32 %v3655, 2147483648
    %v3660 = vxor.u32 %v3656, 2147483648
    %v3661 = vmul.f32 %v3657, 1.442695
    %v3662 = vpow.pop %v3661
    %v3663 = vmul.f32 %v3658, 1.442695
    %v3664 = vpow.pop %v3663
    %v3665 = vmul.f32 %v3659, 1.442695
    %v3666 = vpow.pop %v3665
    %v3667 = vmul.f32 %v3660, 1.442695
    %v3668 = vpow.pop %v3667
    %v3669 = vadd.f32 %v3662, 1.0
    %v3670 = vadd.f32 %v3664, 1.0
    %v3671 = vadd.f32 %v3666, 1.0
    %v3672 = vadd.f32 %v3668, 1.0
    %v3673 = vrcp.pop %v3669
    %v3674 = vmul.f32 1.0, %v3673
    %v3675 = vrcp.pop %v3670
    %v3676 = vmul.f32 1.0, %v3675
    %v3677 = vrcp.pop %v3671
    %v3678 = vmul.f32 1.0, %v3677
    %v3679 = vrcp.pop %v3672
    %v3680 = vmul.f32 1.0, %v3679
    %v3681 = vmul.f32 %v3678, 2.0
    %v3682 = vsub.f32 %v3681, 1.0
    %v3683 = vmul.f32 %v3676, %v3093
    %v3684 = vmul.f32 %v3674, %v3682
    %v3685 = vadd.f32 %v3683, %v3684
    %v3686 = vtanh.pop %v3685
    %v3687 = vmul.f32 %v3680, %v3686
    %v3688 = vpack.c.bf16 %v3687, %v3687
    %s3689 = scalar_lea.vmem [#allocation11], 20
    %3690 = vst [vmem:[%s3689] sm:$0xf] %v3688
    %s3691 = scalar_lea.vmem [#allocation8], 24
    %v3692 = vld [vmem:[%s3691] sm:$0xf]
    %v3693 = vld [vmem:[#allocation2] sm:$0xff]
    %v3694 = vld [vmem:[#allocation2 + $0x8] sm:$0xff]
    %v3695 = vld [vmem:[#allocation2 + $0x10] sm:$0xff]
    %v3696 = vld [vmem:[#allocation2 + $0x18] sm:$0xff]
    %v3697 = vld [vmem:[#allocation2 + $0x20] sm:$0xff]
    %v3698 = vld [vmem:[#allocation2 + $0x28] sm:$0xff]
    %v3699 = vld [vmem:[#allocation2 + $0x30] sm:$0xff]
    %v3700 = vld [vmem:[#allocation2 + $0x38] sm:$0xff]
    %v3701 = vld [vmem:[#allocation2 + $0x40] sm:$0xff]
    %v3702 = vld [vmem:[#allocation2 + $0x48] sm:$0xff]
    %v3703 = vld [vmem:[#allocation2 + $0x50] sm:$0xff]
    %v3704 = vld [vmem:[#allocation2 + $0x58] sm:$0xff]
    %v3705 = vld [vmem:[#allocation2 + $0x60] sm:$0xff]
    %v3706 = vld [vmem:[#allocation2 + $0x68] sm:$0xff]
    %v3707 = vld [vmem:[#allocation2 + $0x70] sm:$0xff]
    %v3708 = vld [vmem:[#allocation2 + $0x78] sm:$0xff]
    %v3709 = vld [vmem:[#allocation2 + $0x80] sm:$0xff]
    %v3710 = vld [vmem:[#allocation2 + $0x88] sm:$0xff]
    %v3711 = vld [vmem:[#allocation2 + $0x90] sm:$0xff]
    %v3712 = vld [vmem:[#allocation2 + $0x98] sm:$0xff]
    %v3713 = vld [vmem:[#allocation2 + $0xa0] sm:$0xff]
    %v3714 = vld [vmem:[#allocation2 + $0xa8] sm:$0xff]
    %v3715 = vld [vmem:[#allocation2 + $0xb0] sm:$0xff]
    %v3716 = vld [vmem:[#allocation2 + $0xb8] sm:$0xff]
    %v3717 = vld [vmem:[#allocation2 + $0xc0] sm:$0xff]
    %v3718 = vld [vmem:[#allocation2 + $0xc8] sm:$0xff]
    %v3719 = vld [vmem:[#allocation2 + $0xd0] sm:$0xff]
    %v3720 = vld [vmem:[#allocation2 + $0xd8] sm:$0xff]
    %v3721 = vld [vmem:[#allocation2 + $0xe0] sm:$0xff]
    %v3722 = vld [vmem:[#allocation2 + $0xe8] sm:$0xff]
    %v3723 = vld [vmem:[#allocation2 + $0xf0] sm:$0xff]
    %v3724 = vld [vmem:[#allocation2 + $0xf8] sm:$0xff]
    %v3757 = vunpack.c.l.b16 %v3693
    %v3758 = vunpack.c.h.b16 %v3693
    %v3759 = vunpack.c.l.b16 %v3694
    %v3760 = vunpack.c.h.b16 %v3694
    %v3761 = vunpack.c.l.b16 %v3695
    %v3762 = vunpack.c.h.b16 %v3695
    %v3763 = vunpack.c.l.b16 %v3696
    %v3764 = vunpack.c.h.b16 %v3696
    %v3765 = vunpack.c.l.b16 %v3697
    %v3766 = vunpack.c.h.b16 %v3697
    %v3767 = vunpack.c.l.b16 %v3698
    %v3768 = vunpack.c.h.b16 %v3698
    %v3769 = vunpack.c.l.b16 %v3699
    %v3770 = vunpack.c.h.b16 %v3699
    %v3771 = vunpack.c.l.b16 %v3700
    %v3772 = vunpack.c.h.b16 %v3700
    %v3773 = vunpack.c.l.b16 %v3701
    %v3774 = vunpack.c.h.b16 %v3701
    %v3775 = vunpack.c.l.b16 %v3702
    %v3776 = vunpack.c.h.b16 %v3702
    %v3777 = vunpack.c.l.b16 %v3703
    %v3778 = vunpack.c.h.b16 %v3703
    %v3779 = vunpack.c.l.b16 %v3704
    %v3780 = vunpack.c.h.b16 %v3704
    %v3781 = vunpack.c.l.b16 %v3705
    %v3782 = vunpack.c.h.b16 %v3705
    %v3783 = vunpack.c.l.b16 %v3706
    %v3784 = vunpack.c.h.b16 %v3706
    %v3785 = vunpack.c.l.b16 %v3707
    %v3786 = vunpack.c.h.b16 %v3707
    %v3787 = vunpack.c.l.b16 %v3708
    %v3788 = vunpack.c.h.b16 %v3708
    %v3789 = vunpack.c.l.b16 %v3709
    %v3790 = vunpack.c.h.b16 %v3709
    %v3791 = vunpack.c.l.b16 %v3710
    %v3792 = vunpack.c.h.b16 %v3710
    %v3793 = vunpack.c.l.b16 %v3711
    %v3794 = vunpack.c.h.b16 %v3711
    %v3795 = vunpack.c.l.b16 %v3712
    %v3796 = vunpack.c.h.b16 %v3712
    %v3797 = vunpack.c.l.b16 %v3713
    %v3798 = vunpack.c.h.b16 %v3713
    %v3799 = vunpack.c.l.b16 %v3714
    %v3800 = vunpack.c.h.b16 %v3714
    %v3801 = vunpack.c.l.b16 %v3715
    %v3802 = vunpack.c.h.b16 %v3715
    %v3803 = vunpack.c.l.b16 %v3716
    %v3804 = vunpack.c.h.b16 %v3716
    %v3805 = vunpack.c.l.b16 %v3717
    %v3806 = vunpack.c.h.b16 %v3717
    %v3807 = vunpack.c.l.b16 %v3718
    %v3808 = vunpack.c.h.b16 %v3718
    %v3809 = vunpack.c.l.b16 %v3719
    %v3810 = vunpack.c.h.b16 %v3719
    %v3811 = vunpack.c.l.b16 %v3720
    %v3812 = vunpack.c.h.b16 %v3720
    %v3813 = vunpack.c.l.b16 %v3721
    %v3814 = vunpack.c.h.b16 %v3721
    %v3815 = vunpack.c.l.b16 %v3722
    %v3816 = vunpack.c.h.b16 %v3722
    %v3817 = vunpack.c.l.b16 %v3723
    %v3818 = vunpack.c.h.b16 %v3723
    %v3819 = vunpack.c.l.b16 %v3724
    %v3820 = vunpack.c.h.b16 %v3724
    %v3821 = vpack.c.b16 %v3761, %v3757
    %v3822 = vpack.c.b16 %v3762, %v3758
    %v3823 = vpack.c.b16 %v3763, %v3759
    %v3824 = vpack.c.b16 %v3764, %v3760
    %v3825 = vpack.c.b16 %v3769, %v3765
    %v3826 = vpack.c.b16 %v3770, %v3766
    %v3827 = vpack.c.b16 %v3771, %v3767
    %v3828 = vpack.c.b16 %v3772, %v3768
    %v3829 = vpack.c.b16 %v3777, %v3773
    %v3830 = vpack.c.b16 %v3778, %v3774
    %v3831 = vpack.c.b16 %v3779, %v3775
    %v3832 = vpack.c.b16 %v3780, %v3776
    %v3833 = vpack.c.b16 %v3785, %v3781
    %v3834 = vpack.c.b16 %v3786, %v3782
    %v3835 = vpack.c.b16 %v3787, %v3783
    %v3836 = vpack.c.b16 %v3788, %v3784
    %v3837 = vpack.c.b16 %v3793, %v3789
    %v3838 = vpack.c.b16 %v3794, %v3790
    %v3839 = vpack.c.b16 %v3795, %v3791
    %v3840 = vpack.c.b16 %v3796, %v3792
    %v3841 = vpack.c.b16 %v3801, %v3797
    %v3842 = vpack.c.b16 %v3802, %v3798
    %v3843 = vpack.c.b16 %v3803, %v3799
    %v3844 = vpack.c.b16 %v3804, %v3800
    %v3845 = vpack.c.b16 %v3809, %v3805
    %v3846 = vpack.c.b16 %v3810, %v3806
    %v3847 = vpack.c.b16 %v3811, %v3807
    %v3848 = vpack.c.b16 %v3812, %v3808
    %v3849 = vpack.c.b16 %v3817, %v3813
    %v3850 = vpack.c.b16 %v3818, %v3814
    %v3851 = vpack.c.b16 %v3819, %v3815
    %v3852 = vpack.c.b16 %v3820, %v3816
    %3885 = vmatprep.subr.bf16.mxu0 %v3850
    %3886 = vmatpush1.bf16.msra.mxu0 %v3849
    %3887 = vmatprep.subr.bf16.mxu0 %v3846
    %3888 = vmatpush1.bf16.msra.mxu0 %v3845
    %3889 = vmatprep.subr.bf16.mxu0 %v3842
    %3890 = vmatpush1.bf16.msra.mxu0 %v3841
    %3891 = vmatprep.subr.bf16.mxu0 %v3838
    %3892 = vmatpush1.bf16.msra.mxu0 %v3837
    %3893 = vmatprep.subr.bf16.mxu0 %v3834
    %3894 = vmatpush1.bf16.msra.mxu0 %v3833
    %3895 = vmatprep.subr.bf16.mxu0 %v3830
    %3896 = vmatpush1.bf16.msra.mxu0 %v3829
    %3897 = vmatprep.subr.bf16.mxu0 %v3826
    %3898 = vmatpush1.bf16.msra.mxu0 %v3825
    %3899 = vmatprep.subr.bf16.mxu0 %v3822
    %3900 = vmatpush1.bf16.msra.mxu0 %v3821
    %3901 = vmatprep.subr.bf16.mxu0 0
    %3902 = vmatpush2.bf16.msra.mxu0 0
    %3903 = vmatprep.subr.bf16.mxu0 0
    %3904 = vmatpush2.bf16.msra.mxu0 0
    %3905 = vmatprep.subr.bf16.mxu0 0
    %3906 = vmatpush2.bf16.msra.mxu0 0
    %3907 = vmatprep.subr.bf16.mxu0 0
    %3908 = vmatpush2.bf16.msra.mxu0 0
    %3909 = vmatprep.subr.bf16.mxu0 0
    %3910 = vmatpush2.bf16.msra.mxu0 0
    %3911 = vmatprep.subr.bf16.mxu0 0
    %3912 = vmatpush2.bf16.msra.mxu0 0
    %3913 = vmatprep.subr.bf16.mxu0 0
    %3914 = vmatpush2.bf16.msra.mxu0 0
    %3915 = vmatprep.subr.bf16.mxu0 0
    %3916 = vmatpush2.bf16.msra.mxu0 0
    %3917 = vmatprep.mubr.bf16.mxu0 0
    %3918 = vmatmul.mubr.bf16.gmra.mxu0 %v3692
    %v3919 = vpop.f32.mrf.mxu0
    %v3920 = vadd.f32 0.0, %v3919
    %v3921 = vpop.f32.mrf.mxu0
    %v3922 = vadd.f32 0.0, %v3921
    %v3923 = vpop.f32.mrf.mxu0
    %v3924 = vpop.f32.mrf.mxu0
    %3925 = vdwg.mxu0
    %3926 = vmatprep.subr.bf16.mxu0 %v3852
    %3927 = vmatpush1.bf16.msra.mxu0 %v3851
    %3928 = vmatprep.subr.bf16.mxu0 %v3848
    %3929 = vmatpush1.bf16.msra.mxu0 %v3847
    %3930 = vmatprep.subr.bf16.mxu0 %v3844
    %3931 = vmatpush1.bf16.msra.mxu0 %v3843
    %3932 = vmatprep.subr.bf16.mxu0 %v3840
    %3933 = vmatpush1.bf16.msra.mxu0 %v3839
    %3934 = vmatprep.subr.bf16.mxu0 %v3836
    %3935 = vmatpush1.bf16.msra.mxu0 %v3835
    %3936 = vmatprep.subr.bf16.mxu0 %v3832
    %3937 = vmatpush1.bf16.msra.mxu0 %v3831
    %3938 = vmatprep.subr.bf16.mxu0 %v3828
    %3939 = vmatpush1.bf16.msra.mxu0 %v3827
    %3940 = vmatprep.subr.bf16.mxu0 %v3824
    %3941 = vmatpush1.bf16.msra.mxu0 %v3823
    %3942 = vmatprep.subr.bf16.mxu0 0
    %3943 = vmatpush2.bf16.msra.mxu0 0
    %3944 = vmatprep.subr.bf16.mxu0 0
    %3945 = vmatpush2.bf16.msra.mxu0 0
    %3946 = vmatprep.subr.bf16.mxu0 0
    %3947 = vmatpush2.bf16.msra.mxu0 0
    %3948 = vmatprep.subr.bf16.mxu0 0
    %3949 = vmatpush2.bf16.msra.mxu0 0
    %3950 = vmatprep.subr.bf16.mxu0 0
    %3951 = vmatpush2.bf16.msra.mxu0 0
    %3952 = vmatprep.subr.bf16.mxu0 0
    %3953 = vmatpush2.bf16.msra.mxu0 0
    %3954 = vmatprep.subr.bf16.mxu0 0
    %3955 = vmatpush2.bf16.msra.mxu0 0
    %3956 = vmatprep.subr.bf16.mxu0 0
    %3957 = vmatpush2.bf16.msra.mxu0 0
    %3958 = vmatprep.mubr.bf16.mxu0 0
    %3959 = vmatmul.mubr.bf16.gmra.mxu0 %v3692
    %v3960 = vpop.f32.mrf.mxu0
    %v3961 = vadd.f32 0.0, %v3960
    %v3962 = vpop.f32.mrf.mxu0
    %v3963 = vadd.f32 0.0, %v3962
    %v3964 = vpop.f32.mrf.mxu0
    %v3965 = vpop.f32.mrf.mxu0
    %3966 = vdwg.mxu0
    %v3967 = vadd.f32 %v121, %v3920
    %v3968 = vadd.f32 %v125, %v3922
    %v3969 = vadd.f32 %v129, %v3961
    %v3970 = vadd.f32 %v133, %v3963
    %v3971 = vld [vmem:[#allocation3] sm:$0xff]
    %v3972 = vld [vmem:[#allocation3 + $0x8] sm:$0xff]
    %v3973 = vld [vmem:[#allocation3 + $0x10] sm:$0xff]
    %v3974 = vld [vmem:[#allocation3 + $0x18] sm:$0xff]
    %v3975 = vld [vmem:[#allocation3 + $0x20] sm:$0xff]
    %v3976 = vld [vmem:[#allocation3 + $0x28] sm:$0xff]
    %v3977 = vld [vmem:[#allocation3 + $0x30] sm:$0xff]
    %v3978 = vld [vmem:[#allocation3 + $0x38] sm:$0xff]
    %v3979 = vld [vmem:[#allocation3 + $0x40] sm:$0xff]
    %v3980 = vld [vmem:[#allocation3 + $0x48] sm:$0xff]
    %v3981 = vld [vmem:[#allocation3 + $0x50] sm:$0xff]
    %v3982 = vld [vmem:[#allocation3 + $0x58] sm:$0xff]
    %v3983 = vld [vmem:[#allocation3 + $0x60] sm:$0xff]
    %v3984 = vld [vmem:[#allocation3 + $0x68] sm:$0xff]
    %v3985 = vld [vmem:[#allocation3 + $0x70] sm:$0xff]
    %v3986 = vld [vmem:[#allocation3 + $0x78] sm:$0xff]
    %v3987 = vld [vmem:[#allocation3 + $0x80] sm:$0xff]
    %v3988 = vld [vmem:[#allocation3 + $0x88] sm:$0xff]
    %v3989 = vld [vmem:[#allocation3 + $0x90] sm:$0xff]
    %v3990 = vld [vmem:[#allocation3 + $0x98] sm:$0xff]
    %v3991 = vld [vmem:[#allocation3 + $0xa0] sm:$0xff]
    %v3992 = vld [vmem:[#allocation3 + $0xa8] sm:$0xff]
    %v3993 = vld [vmem:[#allocation3 + $0xb0] sm:$0xff]
    %v3994 = vld [vmem:[#allocation3 + $0xb8] sm:$0xff]
    %v3995 = vld [vmem:[#allocation3 + $0xc0] sm:$0xff]
    %v3996 = vld [vmem:[#allocation3 + $0xc8] sm:$0xff]
    %v3997 = vld [vmem:[#allocation3 + $0xd0] sm:$0xff]
    %v3998 = vld [vmem:[#allocation3 + $0xd8] sm:$0xff]
    %v3999 = vld [vmem:[#allocation3 + $0xe0] sm:$0xff]
    %v4000 = vld [vmem:[#allocation3 + $0xe8] sm:$0xff]
    %v4001 = vld [vmem:[#allocation3 + $0xf0] sm:$0xff]
    %v4002 = vld [vmem:[#allocation3 + $0xf8] sm:$0xff]
    %v4035 = vunpack.c.l.b16 %v3971
    %v4036 = vunpack.c.h.b16 %v3971
    %v4037 = vunpack.c.l.b16 %v3972
    %v4038 = vunpack.c.h.b16 %v3972
    %v4039 = vunpack.c.l.b16 %v3973
    %v4040 = vunpack.c.h.b16 %v3973
    %v4041 = vunpack.c.l.b16 %v3974
    %v4042 = vunpack.c.h.b16 %v3974
    %v4043 = vunpack.c.l.b16 %v3975
    %v4044 = vunpack.c.h.b16 %v3975
    %v4045 = vunpack.c.l.b16 %v3976
    %v4046 = vunpack.c.h.b16 %v3976
    %v4047 = vunpack.c.l.b16 %v3977
    %v4048 = vunpack.c.h.b16 %v3977
    %v4049 = vunpack.c.l.b16 %v3978
    %v4050 = vunpack.c.h.b16 %v3978
    %v4051 = vunpack.c.l.b16 %v3979
    %v4052 = vunpack.c.h.b16 %v3979
    %v4053 = vunpack.c.l.b16 %v3980
    %v4054 = vunpack.c.h.b16 %v3980
    %v4055 = vunpack.c.l.b16 %v3981
    %v4056 = vunpack.c.h.b16 %v3981
    %v4057 = vunpack.c.l.b16 %v3982
    %v4058 = vunpack.c.h.b16 %v3982
    %v4059 = vunpack.c.l.b16 %v3983
    %v4060 = vunpack.c.h.b16 %v3983
    %v4061 = vunpack.c.l.b16 %v3984
    %v4062 = vunpack.c.h.b16 %v3984
    %v4063 = vunpack.c.l.b16 %v3985
    %v4064 = vunpack.c.h.b16 %v3985
    %v4065 = vunpack.c.l.b16 %v3986
    %v4066 = vunpack.c.h.b16 %v3986
    %v4067 = vunpack.c.l.b16 %v3987
    %v4068 = vunpack.c.h.b16 %v3987
    %v4069 = vunpack.c.l.b16 %v3988
    %v4070 = vunpack.c.h.b16 %v3988
    %v4071 = vunpack.c.l.b16 %v3989
    %v4072 = vunpack.c.h.b16 %v3989
    %v4073 = vunpack.c.l.b16 %v3990
    %v4074 = vunpack.c.h.b16 %v3990
    %v4075 = vunpack.c.l.b16 %v3991
    %v4076 = vunpack.c.h.b16 %v3991
    %v4077 = vunpack.c.l.b16 %v3992
    %v4078 = vunpack.c.h.b16 %v3992
    %v4079 = vunpack.c.l.b16 %v3993
    %v4080 = vunpack.c.h.b16 %v3993
    %v4081 = vunpack.c.l.b16 %v3994
    %v4082 = vunpack.c.h.b16 %v3994
    %v4083 = vunpack.c.l.b16 %v3995
    %v4084 = vunpack.c.h.b16 %v3995
    %v4085 = vunpack.c.l.b16 %v3996
    %v4086 = vunpack.c.h.b16 %v3996
    %v4087 = vunpack.c.l.b16 %v3997
    %v4088 = vunpack.c.h.b16 %v3997
    %v4089 = vunpack.c.l.b16 %v3998
    %v4090 = vunpack.c.h.b16 %v3998
    %v4091 = vunpack.c.l.b16 %v3999
    %v4092 = vunpack.c.h.b16 %v3999
    %v4093 = vunpack.c.l.b16 %v4000
    %v4094 = vunpack.c.h.b16 %v4000
    %v4095 = vunpack.c.l.b16 %v4001
    %v4096 = vunpack.c.h.b16 %v4001
    %v4097 = vunpack.c.l.b16 %v4002
    %v4098 = vunpack.c.h.b16 %v4002
    %v4099 = vpack.c.b16 %v4039, %v4035
    %v4100 = vpack.c.b16 %v4040, %v4036
    %v4101 = vpack.c.b16 %v4041, %v4037
    %v4102 = vpack.c.b16 %v4042, %v4038
    %v4103 = vpack.c.b16 %v4047, %v4043
    %v4104 = vpack.c.b16 %v4048, %v4044
    %v4105 = vpack.c.b16 %v4049, %v4045
    %v4106 = vpack.c.b16 %v4050, %v4046
    %v4107 = vpack.c.b16 %v4055, %v4051
    %v4108 = vpack.c.b16 %v4056, %v4052
    %v4109 = vpack.c.b16 %v4057, %v4053
    %v4110 = vpack.c.b16 %v4058, %v4054
    %v4111 = vpack.c.b16 %v4063, %v4059
    %v4112 = vpack.c.b16 %v4064, %v4060
    %v4113 = vpack.c.b16 %v4065, %v4061
    %v4114 = vpack.c.b16 %v4066, %v4062
    %v4115 = vpack.c.b16 %v4071, %v4067
    %v4116 = vpack.c.b16 %v4072, %v4068
    %v4117 = vpack.c.b16 %v4073, %v4069
    %v4118 = vpack.c.b16 %v4074, %v4070
    %v4119 = vpack.c.b16 %v4079, %v4075
    %v4120 = vpack.c.b16 %v4080, %v4076
    %v4121 = vpack.c.b16 %v4081, %v4077
    %v4122 = vpack.c.b16 %v4082, %v4078
    %v4123 = vpack.c.b16 %v4087, %v4083
    %v4124 = vpack.c.b16 %v4088, %v4084
    %v4125 = vpack.c.b16 %v4089, %v4085
    %v4126 = vpack.c.b16 %v4090, %v4086
    %v4127 = vpack.c.b16 %v4095, %v4091
    %v4128 = vpack.c.b16 %v4096, %v4092
    %v4129 = vpack.c.b16 %v4097, %v4093
    %v4130 = vpack.c.b16 %v4098, %v4094
    %4163 = vmatprep.subr.bf16.mxu0 %v4128
    %4164 = vmatpush1.bf16.msra.mxu0 %v4127
    %4165 = vmatprep.subr.bf16.mxu0 %v4124
    %4166 = vmatpush1.bf16.msra.mxu0 %v4123
    %4167 = vmatprep.subr.bf16.mxu0 %v4120
    %4168 = vmatpush1.bf16.msra.mxu0 %v4119
    %4169 = vmatprep.subr.bf16.mxu0 %v4116
    %4170 = vmatpush1.bf16.msra.mxu0 %v4115
    %4171 = vmatprep.subr.bf16.mxu0 %v4112
    %4172 = vmatpush1.bf16.msra.mxu0 %v4111
    %4173 = vmatprep.subr.bf16.mxu0 %v4108
    %4174 = vmatpush1.bf16.msra.mxu0 %v4107
    %4175 = vmatprep.subr.bf16.mxu0 %v4104
    %4176 = vmatpush1.bf16.msra.mxu0 %v4103
    %4177 = vmatprep.subr.bf16.mxu0 %v4100
    %4178 = vmatpush1.bf16.msra.mxu0 %v4099
    %4179 = vmatprep.subr.bf16.mxu0 0
    %4180 = vmatpush2.bf16.msra.mxu0 0
    %4181 = vmatprep.subr.bf16.mxu0 0
    %4182 = vmatpush2.bf16.msra.mxu0 0
    %4183 = vmatprep.subr.bf16.mxu0 0
    %4184 = vmatpush2.bf16.msra.mxu0 0
    %4185 = vmatprep.subr.bf16.mxu0 0
    %4186 = vmatpush2.bf16.msra.mxu0 0
    %4187 = vmatprep.subr.bf16.mxu0 0
    %4188 = vmatpush2.bf16.msra.mxu0 0
    %4189 = vmatprep.subr.bf16.mxu0 0
    %4190 = vmatpush2.bf16.msra.mxu0 0
    %4191 = vmatprep.subr.bf16.mxu0 0
    %4192 = vmatpush2.bf16.msra.mxu0 0
    %4193 = vmatprep.subr.bf16.mxu0 0
    %4194 = vmatpush2.bf16.msra.mxu0 0
    %4195 = vmatprep.mubr.bf16.mxu0 0
    %4196 = vmatmul.mubr.bf16.gmra.mxu0 %v3688
    %v4197 = vpop.f32.mrf.mxu0
    %v4198 = vadd.f32 0.0, %v4197
    %v4199 = vpop.f32.mrf.mxu0
    %v4200 = vadd.f32 0.0, %v4199
    %v4201 = vpop.f32.mrf.mxu0
    %v4202 = vpop.f32.mrf.mxu0
    %4203 = vdwg.mxu0
    %4204 = vmatprep.subr.bf16.mxu0 %v4130
    %4205 = vmatpush1.bf16.msra.mxu0 %v4129
    %4206 = vmatprep.subr.bf16.mxu0 %v4126
    %4207 = vmatpush1.bf16.msra.mxu0 %v4125
    %4208 = vmatprep.subr.bf16.mxu0 %v4122
    %4209 = vmatpush1.bf16.msra.mxu0 %v4121
    %4210 = vmatprep.subr.bf16.mxu0 %v4118
    %4211 = vmatpush1.bf16.msra.mxu0 %v4117
    %4212 = vmatprep.subr.bf16.mxu0 %v4114
    %4213 = vmatpush1.bf16.msra.mxu0 %v4113
    %4214 = vmatprep.subr.bf16.mxu0 %v4110
    %4215 = vmatpush1.bf16.msra.mxu0 %v4109
    %4216 = vmatprep.subr.bf16.mxu0 %v4106
    %4217 = vmatpush1.bf16.msra.mxu0 %v4105
    %4218 = vmatprep.subr.bf16.mxu0 %v4102
    %4219 = vmatpush1.bf16.msra.mxu0 %v4101
    %4220 = vmatprep.subr.bf16.mxu0 0
    %4221 = vmatpush2.bf16.msra.mxu0 0
    %4222 = vmatprep.subr.bf16.mxu0 0
    %4223 = vmatpush2.bf16.msra.mxu0 0
    %4224 = vmatprep.subr.bf16.mxu0 0
    %4225 = vmatpush2.bf16.msra.mxu0 0
    %4226 = vmatprep.subr.bf16.mxu0 0
    %4227 = vmatpush2.bf16.msra.mxu0 0
    %4228 = vmatprep.subr.bf16.mxu0 0
    %4229 = vmatpush2.bf16.msra.mxu0 0
    %4230 = vmatprep.subr.bf16.mxu0 0
    %4231 = vmatpush2.bf16.msra.mxu0 0
    %4232 = vmatprep.subr.bf16.mxu0 0
    %4233 = vmatpush2.bf16.msra.mxu0 0
    %4234 = vmatprep.subr.bf16.mxu0 0
    %4235 = vmatpush2.bf16.msra.mxu0 0
    %4236 = vmatprep.mubr.bf16.mxu0 0
    %4237 = vmatmul.mubr.bf16.gmra.mxu0 %v3688
    %v4238 = vpop.f32.mrf.mxu0
    %v4239 = vadd.f32 0.0, %v4238
    %v4240 = vpop.f32.mrf.mxu0
    %v4241 = vadd.f32 0.0, %v4240
    %v4242 = vpop.f32.mrf.mxu0
    %v4243 = vpop.f32.mrf.mxu0
    %4244 = vdwg.mxu0
    %v4245 = vadd.f32 %v3967, %v4198
    %v4246 = vadd.f32 %v3968, %v4200
    %v4247 = vadd.f32 %v3969, %v4239
    %v4248 = vadd.f32 %v3970, %v4241
    %v4249 = vxor.u32 %v4245, 2147483648
    %v4250 = vxor.u32 %v4246, 2147483648
    %v4251 = vxor.u32 %v4247, 2147483648
    %v4252 = vxor.u32 %v4248, 2147483648
    %v4253 = vmul.f32 %v4249, 1.442695
    %v4254 = vpow.pop %v4253
    %v4255 = vmul.f32 %v4250, 1.442695
    %v4256 = vpow.pop %v4255
    %v4257 = vmul.f32 %v4251, 1.442695
    %v4258 = vpow.pop %v4257
    %v4259 = vmul.f32 %v4252, 1.442695
    %v4260 = vpow.pop %v4259
    %v4261 = vadd.f32 %v4254, 1.0
    %v4262 = vadd.f32 %v4256, 1.0
    %v4263 = vadd.f32 %v4258, 1.0
    %v4264 = vadd.f32 %v4260, 1.0
    %v4265 = vrcp.pop %v4261
    %v4266 = vmul.f32 1.0, %v4265
    %v4267 = vrcp.pop %v4262
    %v4268 = vmul.f32 1.0, %v4267
    %v4269 = vrcp.pop %v4263
    %v4270 = vmul.f32 1.0, %v4269
    %v4271 = vrcp.pop %v4264
    %v4272 = vmul.f32 1.0, %v4271
    %v4273 = vmul.f32 %v4270, 2.0
    %v4274 = vsub.f32 %v4273, 1.0
    %v4275 = vmul.f32 %v4268, %v3685
    %v4276 = vmul.f32 %v4266, %v4274
    %v4277 = vadd.f32 %v4275, %v4276
    %v4278 = vtanh.pop %v4277
    %v4279 = vmul.f32 %v4272, %v4278
    %v4280 = vpack.c.bf16 %v4279, %v4279
    %s4281 = scalar_lea.vmem [#allocation11], 24
    %4282 = vst [vmem:[%s4281] sm:$0xf] %v4280
    %s4283 = scalar_lea.vmem [#allocation8], 28
    %v4284 = vld [vmem:[%s4283] sm:$0xf]
    %v4285 = vld [vmem:[#allocation2] sm:$0xff]
    %v4286 = vld [vmem:[#allocation2 + $0x8] sm:$0xff]
    %v4287 = vld [vmem:[#allocation2 + $0x10] sm:$0xff]
    %v4288 = vld [vmem:[#allocation2 + $0x18] sm:$0xff]
    %v4289 = vld [vmem:[#allocation2 + $0x20] sm:$0xff]
    %v4290 = vld [vmem:[#allocation2 + $0x28] sm:$0xff]
    %v4291 = vld [vmem:[#allocation2 + $0x30] sm:$0xff]
    %v4292 = vld [vmem:[#allocation2 + $0x38] sm:$0xff]
    %v4293 = vld [vmem:[#allocation2 + $0x40] sm:$0xff]
    %v4294 = vld [vmem:[#allocation2 + $0x48] sm:$0xff]
    %v4295 = vld [vmem:[#allocation2 + $0x50] sm:$0xff]
    %v4296 = vld [vmem:[#allocation2 + $0x58] sm:$0xff]
    %v4297 = vld [vmem:[#allocation2 + $0x60] sm:$0xff]
    %v4298 = vld [vmem:[#allocation2 + $0x68] sm:$0xff]
    %v4299 = vld [vmem:[#allocation2 + $0x70] sm:$0xff]
    %v4300 = vld [vmem:[#allocation2 + $0x78] sm:$0xff]
    %v4301 = vld [vmem:[#allocation2 + $0x80] sm:$0xff]
    %v4302 = vld [vmem:[#allocation2 + $0x88] sm:$0xff]
    %v4303 = vld [vmem:[#allocation2 + $0x90] sm:$0xff]
    %v4304 = vld [vmem:[#allocation2 + $0x98] sm:$0xff]
    %v4305 = vld [vmem:[#allocation2 + $0xa0] sm:$0xff]
    %v4306 = vld [vmem:[#allocation2 + $0xa8] sm:$0xff]
    %v4307 = vld [vmem:[#allocation2 + $0xb0] sm:$0xff]
    %v4308 = vld [vmem:[#allocation2 + $0xb8] sm:$0xff]
    %v4309 = vld [vmem:[#allocation2 + $0xc0] sm:$0xff]
    %v4310 = vld [vmem:[#allocation2 + $0xc8] sm:$0xff]
    %v4311 = vld [vmem:[#allocation2 + $0xd0] sm:$0xff]
    %v4312 = vld [vmem:[#allocation2 + $0xd8] sm:$0xff]
    %v4313 = vld [vmem:[#allocation2 + $0xe0] sm:$0xff]
    %v4314 = vld [vmem:[#allocation2 + $0xe8] sm:$0xff]
    %v4315 = vld [vmem:[#allocation2 + $0xf0] sm:$0xff]
    %v4316 = vld [vmem:[#allocation2 + $0xf8] sm:$0xff]
    %v4349 = vunpack.c.l.b16 %v4285
    %v4350 = vunpack.c.h.b16 %v4285
    %v4351 = vunpack.c.l.b16 %v4286
    %v4352 = vunpack.c.h.b16 %v4286
    %v4353 = vunpack.c.l.b16 %v4287
    %v4354 = vunpack.c.h.b16 %v4287
    %v4355 = vunpack.c.l.b16 %v4288
    %v4356 = vunpack.c.h.b16 %v4288
    %v4357 = vunpack.c.l.b16 %v4289
    %v4358 = vunpack.c.h.b16 %v4289
    %v4359 = vunpack.c.l.b16 %v4290
    %v4360 = vunpack.c.h.b16 %v4290
    %v4361 = vunpack.c.l.b16 %v4291
    %v4362 = vunpack.c.h.b16 %v4291
    %v4363 = vunpack.c.l.b16 %v4292
    %v4364 = vunpack.c.h.b16 %v4292
    %v4365 = vunpack.c.l.b16 %v4293
    %v4366 = vunpack.c.h.b16 %v4293
    %v4367 = vunpack.c.l.b16 %v4294
    %v4368 = vunpack.c.h.b16 %v4294
    %v4369 = vunpack.c.l.b16 %v4295
    %v4370 = vunpack.c.h.b16 %v4295
    %v4371 = vunpack.c.l.b16 %v4296
    %v4372 = vunpack.c.h.b16 %v4296
    %v4373 = vunpack.c.l.b16 %v4297
    %v4374 = vunpack.c.h.b16 %v4297
    %v4375 = vunpack.c.l.b16 %v4298
    %v4376 = vunpack.c.h.b16 %v4298
    %v4377 = vunpack.c.l.b16 %v4299
    %v4378 = vunpack.c.h.b16 %v4299
    %v4379 = vunpack.c.l.b16 %v4300
    %v4380 = vunpack.c.h.b16 %v4300
    %v4381 = vunpack.c.l.b16 %v4301
    %v4382 = vunpack.c.h.b16 %v4301
    %v4383 = vunpack.c.l.b16 %v4302
    %v4384 = vunpack.c.h.b16 %v4302
    %v4385 = vunpack.c.l.b16 %v4303
    %v4386 = vunpack.c.h.b16 %v4303
    %v4387 = vunpack.c.l.b16 %v4304
    %v4388 = vunpack.c.h.b16 %v4304
    %v4389 = vunpack.c.l.b16 %v4305
    %v4390 = vunpack.c.h.b16 %v4305
    %v4391 = vunpack.c.l.b16 %v4306
    %v4392 = vunpack.c.h.b16 %v4306
    %v4393 = vunpack.c.l.b16 %v4307
    %v4394 = vunpack.c.h.b16 %v4307
    %v4395 = vunpack.c.l.b16 %v4308
    %v4396 = vunpack.c.h.b16 %v4308
    %v4397 = vunpack.c.l.b16 %v4309
    %v4398 = vunpack.c.h.b16 %v4309
    %v4399 = vunpack.c.l.b16 %v4310
    %v4400 = vunpack.c.h.b16 %v4310
    %v4401 = vunpack.c.l.b16 %v4311
    %v4402 = vunpack.c.h.b16 %v4311
    %v4403 = vunpack.c.l.b16 %v4312
    %v4404 = vunpack.c.h.b16 %v4312
    %v4405 = vunpack.c.l.b16 %v4313
    %v4406 = vunpack.c.h.b16 %v4313
    %v4407 = vunpack.c.l.b16 %v4314
    %v4408 = vunpack.c.h.b16 %v4314
    %v4409 = vunpack.c.l.b16 %v4315
    %v4410 = vunpack.c.h.b16 %v4315
    %v4411 = vunpack.c.l.b16 %v4316
    %v4412 = vunpack.c.h.b16 %v4316
    %v4413 = vpack.c.b16 %v4353, %v4349
    %v4414 = vpack.c.b16 %v4354, %v4350
    %v4415 = vpack.c.b16 %v4355, %v4351
    %v4416 = vpack.c.b16 %v4356, %v4352
    %v4417 = vpack.c.b16 %v4361, %v4357
    %v4418 = vpack.c.b16 %v4362, %v4358
    %v4419 = vpack.c.b16 %v4363, %v4359
    %v4420 = vpack.c.b16 %v4364, %v4360
    %v4421 = vpack.c.b16 %v4369, %v4365
    %v4422 = vpack.c.b16 %v4370, %v4366
    %v4423 = vpack.c.b16 %v4371, %v4367
    %v4424 = vpack.c.b16 %v4372, %v4368
    %v4425 = vpack.c.b16 %v4377, %v4373
    %v4426 = vpack.c.b16 %v4378, %v4374
    %v4427 = vpack.c.b16 %v4379, %v4375
    %v4428 = vpack.c.b16 %v4380, %v4376
    %v4429 = vpack.c.b16 %v4385, %v4381
    %v4430 = vpack.c.b16 %v4386, %v4382
    %v4431 = vpack.c.b16 %v4387, %v4383
    %v4432 = vpack.c.b16 %v4388, %v4384
    %v4433 = vpack.c.b16 %v4393, %v4389
    %v4434 = vpack.c.b16 %v4394, %v4390
    %v4435 = vpack.c.b16 %v4395, %v4391
    %v4436 = vpack.c.b16 %v4396, %v4392
    %v4437 = vpack.c.b16 %v4401, %v4397
    %v4438 = vpack.c.b16 %v4402, %v4398
    %v4439 = vpack.c.b16 %v4403, %v4399
    %v4440 = vpack.c.b16 %v4404, %v4400
    %v4441 = vpack.c.b16 %v4409, %v4405
    %v4442 = vpack.c.b16 %v4410, %v4406
    %v4443 = vpack.c.b16 %v4411, %v4407
    %v4444 = vpack.c.b16 %v4412, %v4408
    %4477 = vmatprep.subr.bf16.mxu0 %v4442
    %4478 = vmatpush1.bf16.msra.mxu0 %v4441
    %4479 = vmatprep.subr.bf16.mxu0 %v4438
    %4480 = vmatpush1.bf16.msra.mxu0 %v4437
    %4481 = vmatprep.subr.bf16.mxu0 %v4434
    %4482 = vmatpush1.bf16.msra.mxu0 %v4433
    %4483 = vmatprep.subr.bf16.mxu0 %v4430
    %4484 = vmatpush1.bf16.msra.mxu0 %v4429
    %4485 = vmatprep.subr.bf16.mxu0 %v4426
    %4486 = vmatpush1.bf16.msra.mxu0 %v4425
    %4487 = vmatprep.subr.bf16.mxu0 %v4422
    %4488 = vmatpush1.bf16.msra.mxu0 %v4421
    %4489 = vmatprep.subr.bf16.mxu0 %v4418
    %4490 = vmatpush1.bf16.msra.mxu0 %v4417
    %4491 = vmatprep.subr.bf16.mxu0 %v4414
    %4492 = vmatpush1.bf16.msra.mxu0 %v4413
    %4493 = vmatprep.subr.bf16.mxu0 0
    %4494 = vmatpush2.bf16.msra.mxu0 0
    %4495 = vmatprep.subr.bf16.mxu0 0
    %4496 = vmatpush2.bf16.msra.mxu0 0
    %4497 = vmatprep.subr.bf16.mxu0 0
    %4498 = vmatpush2.bf16.msra.mxu0 0
    %4499 = vmatprep.subr.bf16.mxu0 0
    %4500 = vmatpush2.bf16.msra.mxu0 0
    %4501 = vmatprep.subr.bf16.mxu0 0
    %4502 = vmatpush2.bf16.msra.mxu0 0
    %4503 = vmatprep.subr.bf16.mxu0 0
    %4504 = vmatpush2.bf16.msra.mxu0 0
    %4505 = vmatprep.subr.bf16.mxu0 0
    %4506 = vmatpush2.bf16.msra.mxu0 0
    %4507 = vmatprep.subr.bf16.mxu0 0
    %4508 = vmatpush2.bf16.msra.mxu0 0
    %4509 = vmatprep.mubr.bf16.mxu0 0
    %4510 = vmatmul.mubr.bf16.gmra.mxu0 %v4284
    %v4511 = vpop.f32.mrf.mxu0
    %v4512 = vadd.f32 0.0, %v4511
    %v4513 = vpop.f32.mrf.mxu0
    %v4514 = vadd.f32 0.0, %v4513
    %v4515 = vpop.f32.mrf.mxu0
    %v4516 = vpop.f32.mrf.mxu0
    %4517 = vdwg.mxu0
    %4518 = vmatprep.subr.bf16.mxu0 %v4444
    %4519 = vmatpush1.bf16.msra.mxu0 %v4443
    %4520 = vmatprep.subr.bf16.mxu0 %v4440
    %4521 = vmatpush1.bf16.msra.mxu0 %v4439
    %4522 = vmatprep.subr.bf16.mxu0 %v4436
    %4523 = vmatpush1.bf16.msra.mxu0 %v4435
    %4524 = vmatprep.subr.bf16.mxu0 %v4432
    %4525 = vmatpush1.bf16.msra.mxu0 %v4431
    %4526 = vmatprep.subr.bf16.mxu0 %v4428
    %4527 = vmatpush1.bf16.msra.mxu0 %v4427
    %4528 = vmatprep.subr.bf16.mxu0 %v4424
    %4529 = vmatpush1.bf16.msra.mxu0 %v4423
    %4530 = vmatprep.subr.bf16.mxu0 %v4420
    %4531 = vmatpush1.bf16.msra.mxu0 %v4419
    %4532 = vmatprep.subr.bf16.mxu0 %v4416
    %4533 = vmatpush1.bf16.msra.mxu0 %v4415
    %4534 = vmatprep.subr.bf16.mxu0 0
    %4535 = vmatpush2.bf16.msra.mxu0 0
    %4536 = vmatprep.subr.bf16.mxu0 0
    %4537 = vmatpush2.bf16.msra.mxu0 0
    %4538 = vmatprep.subr.bf16.mxu0 0
    %4539 = vmatpush2.bf16.msra.mxu0 0
    %4540 = vmatprep.subr.bf16.mxu0 0
    %4541 = vmatpush2.bf16.msra.mxu0 0
    %4542 = vmatprep.subr.bf16.mxu0 0
    %4543 = vmatpush2.bf16.msra.mxu0 0
    %4544 = vmatprep.subr.bf16.mxu0 0
    %4545 = vmatpush2.bf16.msra.mxu0 0
    %4546 = vmatprep.subr.bf16.mxu0 0
    %4547 = vmatpush2.bf16.msra.mxu0 0
    %4548 = vmatprep.subr.bf16.mxu0 0
    %4549 = vmatpush2.bf16.msra.mxu0 0
    %4550 = vmatprep.mubr.bf16.mxu0 0
    %4551 = vmatmul.mubr.bf16.gmra.mxu0 %v4284
    %v4552 = vpop.f32.mrf.mxu0
    %v4553 = vadd.f32 0.0, %v4552
    %v4554 = vpop.f32.mrf.mxu0
    %v4555 = vadd.f32 0.0, %v4554
    %v4556 = vpop.f32.mrf.mxu0
    %v4557 = vpop.f32.mrf.mxu0
    %4558 = vdwg.mxu0
    %v4559 = vadd.f32 %v121, %v4512
    %v4560 = vadd.f32 %v125, %v4514
    %v4561 = vadd.f32 %v129, %v4553
    %v4562 = vadd.f32 %v133, %v4555
    %v4563 = vld [vmem:[#allocation3] sm:$0xff]
    %v4564 = vld [vmem:[#allocation3 + $0x8] sm:$0xff]
    %v4565 = vld [vmem:[#allocation3 + $0x10] sm:$0xff]
    %v4566 = vld [vmem:[#allocation3 + $0x18] sm:$0xff]
    %v4567 = vld [vmem:[#allocation3 + $0x20] sm:$0xff]
    %v4568 = vld [vmem:[#allocation3 + $0x28] sm:$0xff]
    %v4569 = vld [vmem:[#allocation3 + $0x30] sm:$0xff]
    %v4570 = vld [vmem:[#allocation3 + $0x38] sm:$0xff]
    %v4571 = vld [vmem:[#allocation3 + $0x40] sm:$0xff]
    %v4572 = vld [vmem:[#allocation3 + $0x48] sm:$0xff]
    %v4573 = vld [vmem:[#allocation3 + $0x50] sm:$0xff]
    %v4574 = vld [vmem:[#allocation3 + $0x58] sm:$0xff]
    %v4575 = vld [vmem:[#allocation3 + $0x60] sm:$0xff]
    %v4576 = vld [vmem:[#allocation3 + $0x68] sm:$0xff]
    %v4577 = vld [vmem:[#allocation3 + $0x70] sm:$0xff]
    %v4578 = vld [vmem:[#allocation3 + $0x78] sm:$0xff]
    %v4579 = vld [vmem:[#allocation3 + $0x80] sm:$0xff]
    %v4580 = vld [vmem:[#allocation3 + $0x88] sm:$0xff]
    %v4581 = vld [vmem:[#allocation3 + $0x90] sm:$0xff]
    %v4582 = vld [vmem:[#allocation3 + $0x98] sm:$0xff]
    %v4583 = vld [vmem:[#allocation3 + $0xa0] sm:$0xff]
    %v4584 = vld [vmem:[#allocation3 + $0xa8] sm:$0xff]
    %v4585 = vld [vmem:[#allocation3 + $0xb0] sm:$0xff]
    %v4586 = vld [vmem:[#allocation3 + $0xb8] sm:$0xff]
    %v4587 = vld [vmem:[#allocation3 + $0xc0] sm:$0xff]
    %v4588 = vld [vmem:[#allocation3 + $0xc8] sm:$0xff]
    %v4589 = vld [vmem:[#allocation3 + $0xd0] sm:$0xff]
    %v4590 = vld [vmem:[#allocation3 + $0xd8] sm:$0xff]
    %v4591 = vld [vmem:[#allocation3 + $0xe0] sm:$0xff]
    %v4592 = vld [vmem:[#allocation3 + $0xe8] sm:$0xff]
    %v4593 = vld [vmem:[#allocation3 + $0xf0] sm:$0xff]
    %v4594 = vld [vmem:[#allocation3 + $0xf8] sm:$0xff]
    %v4627 = vunpack.c.l.b16 %v4563
    %v4628 = vunpack.c.h.b16 %v4563
    %v4629 = vunpack.c.l.b16 %v4564
    %v4630 = vunpack.c.h.b16 %v4564
    %v4631 = vunpack.c.l.b16 %v4565
    %v4632 = vunpack.c.h.b16 %v4565
    %v4633 = vunpack.c.l.b16 %v4566
    %v4634 = vunpack.c.h.b16 %v4566
    %v4635 = vunpack.c.l.b16 %v4567
    %v4636 = vunpack.c.h.b16 %v4567
    %v4637 = vunpack.c.l.b16 %v4568
    %v4638 = vunpack.c.h.b16 %v4568
    %v4639 = vunpack.c.l.b16 %v4569
    %v4640 = vunpack.c.h.b16 %v4569
    %v4641 = vunpack.c.l.b16 %v4570
    %v4642 = vunpack.c.h.b16 %v4570
    %v4643 = vunpack.c.l.b16 %v4571
    %v4644 = vunpack.c.h.b16 %v4571
    %v4645 = vunpack.c.l.b16 %v4572
    %v4646 = vunpack.c.h.b16 %v4572
    %v4647 = vunpack.c.l.b16 %v4573
    %v4648 = vunpack.c.h.b16 %v4573
    %v4649 = vunpack.c.l.b16 %v4574
    %v4650 = vunpack.c.h.b16 %v4574
    %v4651 = vunpack.c.l.b16 %v4575
    %v4652 = vunpack.c.h.b16 %v4575
    %v4653 = vunpack.c.l.b16 %v4576
    %v4654 = vunpack.c.h.b16 %v4576
    %v4655 = vunpack.c.l.b16 %v4577
    %v4656 = vunpack.c.h.b16 %v4577
    %v4657 = vunpack.c.l.b16 %v4578
    %v4658 = vunpack.c.h.b16 %v4578
    %v4659 = vunpack.c.l.b16 %v4579
    %v4660 = vunpack.c.h.b16 %v4579
    %v4661 = vunpack.c.l.b16 %v4580
    %v4662 = vunpack.c.h.b16 %v4580
    %v4663 = vunpack.c.l.b16 %v4581
    %v4664 = vunpack.c.h.b16 %v4581
    %v4665 = vunpack.c.l.b16 %v4582
    %v4666 = vunpack.c.h.b16 %v4582
    %v4667 = vunpack.c.l.b16 %v4583
    %v4668 = vunpack.c.h.b16 %v4583
    %v4669 = vunpack.c.l.b16 %v4584
    %v4670 = vunpack.c.h.b16 %v4584
    %v4671 = vunpack.c.l.b16 %v4585
    %v4672 = vunpack.c.h.b16 %v4585
    %v4673 = vunpack.c.l.b16 %v4586
    %v4674 = vunpack.c.h.b16 %v4586
    %v4675 = vunpack.c.l.b16 %v4587
    %v4676 = vunpack.c.h.b16 %v4587
    %v4677 = vunpack.c.l.b16 %v4588
    %v4678 = vunpack.c.h.b16 %v4588
    %v4679 = vunpack.c.l.b16 %v4589
    %v4680 = vunpack.c.h.b16 %v4589
    %v4681 = vunpack.c.l.b16 %v4590
    %v4682 = vunpack.c.h.b16 %v4590
    %v4683 = vunpack.c.l.b16 %v4591
    %v4684 = vunpack.c.h.b16 %v4591
    %v4685 = vunpack.c.l.b16 %v4592
    %v4686 = vunpack.c.h.b16 %v4592
    %v4687 = vunpack.c.l.b16 %v4593
    %v4688 = vunpack.c.h.b16 %v4593
    %v4689 = vunpack.c.l.b16 %v4594
    %v4690 = vunpack.c.h.b16 %v4594
    %v4691 = vpack.c.b16 %v4631, %v4627
    %v4692 = vpack.c.b16 %v4632, %v4628
    %v4693 = vpack.c.b16 %v4633, %v4629
    %v4694 = vpack.c.b16 %v4634, %v4630
    %v4695 = vpack.c.b16 %v4639, %v4635
    %v4696 = vpack.c.b16 %v4640, %v4636
    %v4697 = vpack.c.b16 %v4641, %v4637
    %v4698 = vpack.c.b16 %v4642, %v4638
    %v4699 = vpack.c.b16 %v4647, %v4643
    %v4700 = vpack.c.b16 %v4648, %v4644
    %v4701 = vpack.c.b16 %v4649, %v4645
    %v4702 = vpack.c.b16 %v4650, %v4646
    %v4703 = vpack.c.b16 %v4655, %v4651
    %v4704 = vpack.c.b16 %v4656, %v4652
    %v4705 = vpack.c.b16 %v4657, %v4653
    %v4706 = vpack.c.b16 %v4658, %v4654
    %v4707 = vpack.c.b16 %v4663, %v4659
    %v4708 = vpack.c.b16 %v4664, %v4660
    %v4709 = vpack.c.b16 %v4665, %v4661
    %v4710 = vpack.c.b16 %v4666, %v4662
    %v4711 = vpack.c.b16 %v4671, %v4667
    %v4712 = vpack.c.b16 %v4672, %v4668
    %v4713 = vpack.c.b16 %v4673, %v4669
    %v4714 = vpack.c.b16 %v4674, %v4670
    %v4715 = vpack.c.b16 %v4679, %v4675
    %v4716 = vpack.c.b16 %v4680, %v4676
    %v4717 = vpack.c.b16 %v4681, %v4677
    %v4718 = vpack.c.b16 %v4682, %v4678
    %v4719 = vpack.c.b16 %v4687, %v4683
    %v4720 = vpack.c.b16 %v4688, %v4684
    %v4721 = vpack.c.b16 %v4689, %v4685
    %v4722 = vpack.c.b16 %v4690, %v4686
    %4755 = vmatprep.subr.bf16.mxu0 %v4720
    %4756 = vmatpush1.bf16.msra.mxu0 %v4719
    %4757 = vmatprep.subr.bf16.mxu0 %v4716
    %4758 = vmatpush1.bf16.msra.mxu0 %v4715
    %4759 = vmatprep.subr.bf16.mxu0 %v4712
    %4760 = vmatpush1.bf16.msra.mxu0 %v4711
    %4761 = vmatprep.subr.bf16.mxu0 %v4708
    %4762 = vmatpush1.bf16.msra.mxu0 %v4707
    %4763 = vmatprep.subr.bf16.mxu0 %v4704
    %4764 = vmatpush1.bf16.msra.mxu0 %v4703
    %4765 = vmatprep.subr.bf16.mxu0 %v4700
    %4766 = vmatpush1.bf16.msra.mxu0 %v4699
    %4767 = vmatprep.subr.bf16.mxu0 %v4696
    %4768 = vmatpush1.bf16.msra.mxu0 %v4695
    %4769 = vmatprep.subr.bf16.mxu0 %v4692
    %4770 = vmatpush1.bf16.msra.mxu0 %v4691
    %4771 = vmatprep.subr.bf16.mxu0 0
    %4772 = vmatpush2.bf16.msra.mxu0 0
    %4773 = vmatprep.subr.bf16.mxu0 0
    %4774 = vmatpush2.bf16.msra.mxu0 0
    %4775 = vmatprep.subr.bf16.mxu0 0
    %4776 = vmatpush2.bf16.msra.mxu0 0
    %4777 = vmatprep.subr.bf16.mxu0 0
    %4778 = vmatpush2.bf16.msra.mxu0 0
    %4779 = vmatprep.subr.bf16.mxu0 0
    %4780 = vmatpush2.bf16.msra.mxu0 0
    %4781 = vmatprep.subr.bf16.mxu0 0
    %4782 = vmatpush2.bf16.msra.mxu0 0
    %4783 = vmatprep.subr.bf16.mxu0 0
    %4784 = vmatpush2.bf16.msra.mxu0 0
    %4785 = vmatprep.subr.bf16.mxu0 0
    %4786 = vmatpush2.bf16.msra.mxu0 0
    %4787 = vmatprep.mubr.bf16.mxu0 0
    %4788 = vmatmul.mubr.bf16.gmra.mxu0 %v4280
    %v4789 = vpop.f32.mrf.mxu0
    %v4790 = vadd.f32 0.0, %v4789
    %v4791 = vpop.f32.mrf.mxu0
    %v4792 = vadd.f32 0.0, %v4791
    %v4793 = vpop.f32.mrf.mxu0
    %v4794 = vpop.f32.mrf.mxu0
    %4795 = vdwg.mxu0
    %4796 = vmatprep.subr.bf16.mxu0 %v4722
    %4797 = vmatpush1.bf16.msra.mxu0 %v4721
    %4798 = vmatprep.subr.bf16.mxu0 %v4718
    %4799 = vmatpush1.bf16.msra.mxu0 %v4717
    %4800 = vmatprep.subr.bf16.mxu0 %v4714
    %4801 = vmatpush1.bf16.msra.mxu0 %v4713
    %4802 = vmatprep.subr.bf16.mxu0 %v4710
    %4803 = vmatpush1.bf16.msra.mxu0 %v4709
    %4804 = vmatprep.subr.bf16.mxu0 %v4706
    %4805 = vmatpush1.bf16.msra.mxu0 %v4705
    %4806 = vmatprep.subr.bf16.mxu0 %v4702
    %4807 = vmatpush1.bf16.msra.mxu0 %v4701
    %4808 = vmatprep.subr.bf16.mxu0 %v4698
    %4809 = vmatpush1.bf16.msra.mxu0 %v4697
    %4810 = vmatprep.subr.bf16.mxu0 %v4694
    %4811 = vmatpush1.bf16.msra.mxu0 %v4693
    %4812 = vmatprep.subr.bf16.mxu0 0
    %4813 = vmatpush2.bf16.msra.mxu0 0
    %4814 = vmatprep.subr.bf16.mxu0 0
    %4815 = vmatpush2.bf16.msra.mxu0 0
    %4816 = vmatprep.subr.bf16.mxu0 0
    %4817 = vmatpush2.bf16.msra.mxu0 0
    %4818 = vmatprep.subr.bf16.mxu0 0
    %4819 = vmatpush2.bf16.msra.mxu0 0
    %4820 = vmatprep.subr.bf16.mxu0 0
    %4821 = vmatpush2.bf16.msra.mxu0 0
    %4822 = vmatprep.subr.bf16.mxu0 0
    %4823 = vmatpush2.bf16.msra.mxu0 0
    %4824 = vmatprep.subr.bf16.mxu0 0
    %4825 = vmatpush2.bf16.msra.mxu0 0
    %4826 = vmatprep.subr.bf16.mxu0 0
    %4827 = vmatpush2.bf16.msra.mxu0 0
    %4828 = vmatprep.mubr.bf16.mxu0 0
    %4829 = vmatmul.mubr.bf16.gmra.mxu0 %v4280
    %v4830 = vpop.f32.mrf.mxu0
    %v4831 = vadd.f32 0.0, %v4830
    %v4832 = vpop.f32.mrf.mxu0
    %v4833 = vadd.f32 0.0, %v4832
    %v4834 = vpop.f32.mrf.mxu0
    %v4835 = vpop.f32.mrf.mxu0
    %4836 = vdwg.mxu0
    %v4837 = vadd.f32 %v4559, %v4790
    %v4838 = vadd.f32 %v4560, %v4792
    %v4839 = vadd.f32 %v4561, %v4831
    %v4840 = vadd.f32 %v4562, %v4833
    %v4841 = vxor.u32 %v4837, 2147483648
    %v4842 = vxor.u32 %v4838, 2147483648
    %v4843 = vxor.u32 %v4839, 2147483648
    %v4844 = vxor.u32 %v4840, 2147483648
    %v4845 = vmul.f32 %v4841, 1.442695
    %v4846 = vpow.pop %v4845
    %v4847 = vmul.f32 %v4842, 1.442695
    %v4848 = vpow.pop %v4847
    %v4849 = vmul.f32 %v4843, 1.442695
    %v4850 = vpow.pop %v4849
    %v4851 = vmul.f32 %v4844, 1.442695
    %v4852 = vpow.pop %v4851
    %v4853 = vadd.f32 %v4846, 1.0
    %v4854 = vadd.f32 %v4848, 1.0
    %v4855 = vadd.f32 %v4850, 1.0
    %v4856 = vadd.f32 %v4852, 1.0
    %v4857 = vrcp.pop %v4853
    %v4858 = vmul.f32 1.0, %v4857
    %v4859 = vrcp.pop %v4854
    %v4860 = vmul.f32 1.0, %v4859
    %v4861 = vrcp.pop %v4855
    %v4862 = vmul.f32 1.0, %v4861
    %v4863 = vrcp.pop %v4856
    %v4864 = vmul.f32 1.0, %v4863
    %v4865 = vmul.f32 %v4862, 2.0
    %v4866 = vsub.f32 %v4865, 1.0
    %v4867 = vmul.f32 %v4860, %v4277
    %v4868 = vmul.f32 %v4858, %v4866
    %v4869 = vadd.f32 %v4867, %v4868
    %v4870 = vtanh.pop %v4869
    %v4871 = vmul.f32 %v4864, %v4870
    %v4872 = vpack.c.bf16 %v4871, %v4871
    %s4873 = scalar_lea.vmem [#allocation11], 28
    %4874 = vst [vmem:[%s4873] sm:$0xf] %v4872
    %4875 = vst [vmem:[#allocation5] sm:$0xff] %v4871
    %4876 = vst [vmem:[#allocation6] sm:$0xff] %v4869
    // Predicated region
    $region52: #{tpu_custom_call.1} parent=1 // pred_check
      %p4877 = pneg %p31
    $region53: #{tpu_custom_call.1} parent=1 // pred_check_branch
      %4879 = sbr.rel (%p4877) target = $region55
    $region54: #{tpu_custom_call.1} parent=1 // pred_region
      %4880 = vst [vmem:[#allocation12] sm:$0xff] %v4871
      %4881 = vst [vmem:[#allocation14] sm:$0xff] %v4869
    $region55: #{tpu_custom_call.1} parent=1 // pred_fallthru
      _
    // Predicated region
    $region56: #{tpu_custom_call.1} parent=1 // pred_check
      _
    $region57: #{tpu_custom_call.1} parent=1 // pred_check_branch
      %4883 = sbr.rel (0) target = $region59
    $region58: #{tpu_custom_call.1} parent=1 // pred_region
      %s4885 = ssub.s32 512, 512
      %4886 = vsyncadd [#allocation10], %s4885
      %s4887 = sshll.u32 [#allocation11], 4
      %s4888 = int_to_ptr.vmem [resolvable:$true] %s4887
      %4893 = dma.vmem_to_hbm [thread:$0]  %s4888, 512, %s4, [#allocation10], 64, 64, 4
    $region59: #{tpu_custom_call.1} parent=1 // pred_fallthru
      _
    // Predicated region
    $region60: #{tpu_custom_call.1} parent=1 // pred_check
      _
    $region61: #{tpu_custom_call.1} parent=1 // pred_check_branch
      %4895 = sbr.rel (0) target = $region63
    $region62: #{tpu_custom_call.1} parent=1 // pred_region
      %s4897 = ssub.s32 128, 128
      %4898 = vsyncadd [#allocation13], %s4897
      %s4900 = sshll.u32 [#allocation12], 4
      %s4901 = int_to_ptr.vmem [resolvable:$true] %s4900
      %4903 = dma.vmem_to_hbm [thread:$0]  %s4901, 128, %s5, [#allocation13]
    $region63: #{tpu_custom_call.1} parent=1 // pred_fallthru
      _
    // Predicated region
    $region64: #{tpu_custom_call.1} parent=1 // pred_check
      _
    $region65: #{tpu_custom_call.1} parent=1 // pred_check_branch
      %4905 = sbr.rel (0) target = $region67
    $region66: #{tpu_custom_call.1} parent=1 // pred_region
      %s4907 = ssub.s32 128, 128
      %4908 = vsyncadd [#allocation13], %s4907
      %s4910 = sshll.u32 [#allocation14], 4
      %s4911 = int_to_ptr.vmem [resolvable:$true] %s4910
      %4913 = dma.vmem_to_hbm [thread:$0]  %s4911, 128, %s6, [#allocation13]
    $region67: #{tpu_custom_call.1} parent=1 // pred_fallthru
      _
    // Predicated region
    $region68: #{tpu_custom_call.1} parent=1 // pred_check
      _
    $region69: #{tpu_custom_call.1} parent=1 // pred_check_branch
      %4915 = sbr.rel (0) target = $region71
    $region70: #{tpu_custom_call.1} parent=1 // pred_region
      %4916 = dma.done [#allocation10], 512
    $region71: #{tpu_custom_call.1} parent=1 // pred_fallthru
      _
    // Predicated region
    $region72: #{tpu_custom_call.1} parent=1 // pred_check
      _
    $region73: #{tpu_custom_call.1} parent=1 // pred_check_branch
      %4918 = sbr.rel (0) target = $region75
    $region74: #{tpu_custom_call.1} parent=1 // pred_region
      %4919 = dma.done [#allocation13], 128
    $region75: #{tpu_custom_call.1} parent=1 // pred_fallthru
      _
    // Predicated region
    $region76: #{tpu_custom_call.1} parent=1 // pred_check
      _
    $region77: #{tpu_custom_call.1} parent=1 // pred_check_branch
      %4921 = sbr.rel (0) target = $region79
    $region78: #{tpu_custom_call.1} parent=1 // pred_region
      %4922 = dma.done [#allocation13], 128
    $region79: #{tpu_custom_call.1} parent=1 // pred_fallthru
      _
    %4923 = vsyncpa [#allocation9], 1
    %4924 = vsyncpa [#allocation10], 1
    %4925 = vsyncpa [#allocation13], 1
  %4926 = vsyncmov [#allocation7]
  %s4927 = vpop.sfrf %4926
  %p4928 = scmp.eq.s32.totalorder %s4927, 0
  %p4929 = pneg %p4928
  %4931 = shalt.err (%p4929)
  %s4932 = scalar_lea.sflag [#allocation7], 1
  %4933 = vsyncmov %s4932
  %s4934 = vpop.sfrf %4933
  %p4935 = scmp.eq.s32.totalorder %s4934, 0
  %p4936 = pneg %p4935
  %4938 = shalt.err (%p4936)
  %s4939 = scalar_lea.sflag [#allocation7], 2
  %4940 = vsyncmov %s4939
  %s4941 = vpop.sfrf %4940
  %p4942 = scmp.eq.s32.totalorder %s4941, 0
  %p4943 = pneg %p4942
  %4945 = shalt.err (%p4943)

</llo_original>
